<compile_context>
chip_gen: v7x
topology: tpu7x:2x2x1
jax: 0.10.0
libtpu: 0.0.40
codegen_flags: <defaults>
</compile_context>

<pallas_src>
import functools

import jax
import jax.numpy as jnp
from jax import lax
from jax.experimental import pallas as pl
from jax.experimental.pallas import tpu as pltpu

KH = KW = 4
STRIDE = 2
PAD = 1
BN_EPS = 1e-5


# ---------------------------------------------------------------------------
# Pallas kernel: one CnnCell, grid = (phase, image).
#   x_ref   : (1, 4, Lp, Cin)  bf16   parity planes of one image (Lp = (Ho+2)*(Wo+1))
#   w_ref   : (16, Cin, Cout)  bf16   conv taps (kh*4+kw)
#   g_ref   : (1, Cout)        f32    BN gamma
#   b_ref   : (1, Cout)        f32    BN beta
#   mask_ref: (M, 1)           f32    1 for real output rows, 0 for the junk halo column
#   o_ref   : (1, M, Cout)     f32    M = Ho*(Wo+1)
#   sum_ref, sq_ref : (1, Cout) f32   persistent batch-stat accumulators
# ---------------------------------------------------------------------------
def cnncell_kernel(x_ref, w_ref, g_ref, b_ref, mask_ref, o_ref, sum_ref, sq_ref,
                   *, wo1, count, eps):
    phase = pl.program_id(0)
    img = pl.program_id(1)

    @pl.when(jnp.logical_and(phase == 0, img == 0))
    def _init_stats():
        sum_ref[...] = jnp.zeros_like(sum_ref)
        sq_ref[...] = jnp.zeros_like(sq_ref)

    m_rows = o_ref.shape[1]
    cout = o_ref.shape[2]

    # Widen the parity planes to f32 once (aligned full-block load + cast); slicing the f32
    # value at the odd sublane offsets below is cheap and avoids packed-bf16 unaligned slices.
    x4 = x_ref[0].astype(jnp.float32)                      # (4, Lp, Cin)

    # Conv2d(k=4, s=2, p=1) as 16 accumulating MXU matmuls over shifted contiguous slices.
    # (conv bias omitted: it cancels exactly under training-mode BatchNorm.)
    y = jnp.zeros((m_rows, cout), jnp.float32)
    for kh in range(KH):
        for kw in range(KW):
            plane = (kh % 2) * 2 + (kw % 2)
            base = (kh // 2) * wo1 + (kw // 2)
            lhs = x4[plane, base:base + m_rows, :].astype(jnp.bfloat16)   # (M, Cin)
            y = y + jnp.dot(lhs, w_ref[kh * KW + kw],
                            preferred_element_type=jnp.float32)

    @pl.when(phase == 0)
    def _accumulate_stats():
        yv = y * mask_ref[...]                             # zero the junk halo rows
        sum_ref[...] += jnp.sum(yv, axis=0, keepdims=True)
        sq_ref[...] += jnp.sum(yv * yv, axis=0, keepdims=True)

    @pl.when(phase == 1)
    def _normalize_and_store():
        inv_count = 1.0 / count
        mean = sum_ref[...] * inv_count
        var = sq_ref[...] * inv_count - mean * mean        # biased variance (BN training)
        scale = g_ref[...] * lax.rsqrt(var + eps)          # fused BN affine: y*scale + shift
        shift = b_ref[...] - mean * scale
        o_ref[0] = jnp.tanh(y * scale + shift).astype(o_ref.dtype)


# ---------------------------------------------------------------------------
# JAX glue: parity-plane packing (one pass over the input, no 16x im2col blow-up).
# plane p = (row_parity*2 + col_parity), flattened index f = r*(Wo+1) + c equals
# padded_input[2r + row_parity, 2c + col_parity].
# ---------------------------------------------------------------------------
def _make_parity_planes(x_nhwc):
    n, h, w, c = x_nhwc.shape
    ho, wo = h // STRIDE, w // STRIDE
    # pad 1 row/col for the conv + 2 extra bottom rows so every tap's flattened slice
    # [base : base + Ho*(Wo+1)] stays inside the (Ho+2)*(Wo+1) plane.
    xp = jnp.pad(x_nhwc, ((0, 0), (PAD, PAD + 2), (PAD, PAD), (0, 0)))
    xr = xp.reshape(n, ho + 2, 2, wo + 1, 2, c).transpose(0, 2, 4, 1, 3, 5)
    return xr.reshape(n, 4, (ho + 2) * (wo + 1), c)


def run_cnncell(x_nhwc, w_hwio, gamma, beta):
    n, h, w, cin = x_nhwc.shape
    cout = w_hwio.shape[-1]
    ho, wo = h // STRIDE, w // STRIDE
    m_rows = ho * (wo + 1)                                  # incl. one junk halo column
    lp = (ho + 2) * (wo + 1)

    planes = _make_parity_planes(x_nhwc).astype(jnp.bfloat16)        # (N, 4, Lp, Cin)
    w_taps = w_hwio.reshape(KH * KW, cin, cout).astype(jnp.bfloat16)  # (16, Cin, Cout)
    gamma2 = gamma.reshape(1, cout).astype(jnp.float32)
    beta2 = beta.reshape(1, cout).astype(jnp.float32)
    mask = (jnp.arange(m_rows) % (wo + 1) < wo).astype(jnp.float32).reshape(m_rows, 1)

    kernel = functools.partial(cnncell_kernel, wo1=wo + 1,
                               count=float(n * ho * wo), eps=BN_EPS)

    flops = 2 * n * (KH * KW) * 2 * m_rows * cin * cout               # 2 phases (recompute)
    bytes_accessed = (2 * (n * 4 * lp * cin * 2)                      # planes read twice (bf16)
                      + KH * KW * cin * cout * 2                      # weights (bf16)
                      + 2 * cout * 4 + m_rows * 4                     # gamma/beta/mask
                      + n * m_rows * cout * 4)                        # output (f32)

    out = pl.pallas_call(
        kernel,
        out_shape=jax.ShapeDtypeStruct((n, m_rows, cout), jnp.float32),
        grid_spec=pltpu.PrefetchScalarGridSpec(
            num_scalar_prefetch=0,
            grid=(2, n),                                   # (phase, image); phase is outer
            in_specs=[
                pl.BlockSpec((1, 4, lp, cin), lambda ph, i: (i, 0, 0, 0)),
                pl.BlockSpec((KH * KW, cin, cout), lambda ph, i: (0, 0, 0)),   # resident
                pl.BlockSpec((1, cout), lambda ph, i: (0, 0)),                 # resident
                pl.BlockSpec((1, cout), lambda ph, i: (0, 0)),                 # resident
                pl.BlockSpec((m_rows, 1), lambda ph, i: (0, 0)),               # resident
            ],
            # phase 0 parks the (unwritten) output on block 0; phase 1 writes block i.
            out_specs=pl.BlockSpec((1, m_rows, cout), lambda ph, i: (ph * i, 0, 0)),
            scratch_shapes=[pltpu.VMEM((1, cout), jnp.float32),
                            pltpu.VMEM((1, cout), jnp.float32)],
        ),
        compiler_params=pltpu.CompilerParams(
            # Both axes must stay sequential on one core: batch statistics are accumulated
            # across images in phase 0 and consumed in phase 1.
            dimension_semantics=("arbitrary", "arbitrary"),
            vmem_limit_bytes=32 * 1024 * 1024,
        ),
        cost_estimate=pl.CostEstimate(flops=flops,
                                      transcendentals=n * m_rows * cout,
                                      bytes_accessed=bytes_accessed),
    )(planes, w_taps, gamma2, beta2, mask)

    # strip the junk halo column, back to NHWC
    return out.reshape(n, ho, wo + 1, cout)[:, :, :wo, :]


def encoder_forward(x_nchw, params):
    """params: list of dicts with 'w' (4,4,Cin,Cout) HWIO, 'b', 'gamma', 'beta'.
    (the conv bias 'b' is intentionally unused: it cancels under training-mode BN)."""
    x = jnp.transpose(x_nchw, (0, 2, 3, 1))                # NCHW -> NHWC
    for p in params:
        x = run_cnncell(x, p["w"], p["gamma"], p["beta"])
    return jnp.transpose(x, (0, 3, 1, 2))                  # back to NCHW


# ---------------------------------------------------------------------------
# Pure-JAX reference (lax.conv, bf16 conv operands / f32 accumulation like the kernel,
# conv bias INCLUDED to demonstrate that dropping it in the kernel is exact).
# ---------------------------------------------------------------------------
def encoder_reference(x_nchw, params):
    x = jnp.transpose(x_nchw, (0, 2, 3, 1))
    for p in params:
        y = lax.conv_general_dilated(
            x.astype(jnp.bfloat16), p["w"].astype(jnp.bfloat16),
            window_strides=(STRIDE, STRIDE),
            padding=((PAD, PAD), (PAD, PAD)),
            dimension_numbers=("NHWC", "HWIO", "NHWC"),
            preferred_element_type=jnp.float32,
        ) + p["b"].reshape(1, 1, 1, -1)
        mean = jnp.mean(y, axis=(0, 1, 2), keepdims=True)
        var = jnp.mean((y - mean) ** 2, axis=(0, 1, 2), keepdims=True)
        y = (y - mean) * lax.rsqrt(var + BN_EPS)
        y = y * p["gamma"].reshape(1, 1, 1, -1) + p["beta"].reshape(1, 1, 1, -1)
        x = jnp.tanh(y)
    return jnp.transpose(x, (0, 3, 1, 2))


def init_params(key, channels):
    params = []
    for i in range(len(channels) - 1):
        cin, cout = channels[i], channels[i + 1]
        key, kw_, kb_, kg_, kbeta_ = jax.random.split(key, 5)
        fan_in = cin * KH * KW
        params.append(dict(
            w=jax.random.normal(kw_, (KH, KW, cin, cout), jnp.float32) / jnp.sqrt(fan_in),
            b=jax.random.normal(kb_, (cout,), jnp.float32) * 0.1,
            gamma=1.0 + 0.1 * jax.random.normal(kg_, (cout,), jnp.float32),
            beta=0.1 * jax.random.normal(kbeta_, (cout,), jnp.float32),
        ))
    return params


if __name__ == "__main__":
    key = jax.random.PRNGKey(0)
    k_x, k_p = jax.random.split(key)

    channels = [4, 8, 16]                                   # Encoder(channels) -> 2 CnnCells
    x = jax.random.normal(k_x, (2, channels[0], 16, 16), jnp.float32)   # NCHW
    params = init_params(k_p, channels)

    fwd = jax.jit(encoder_forward)
    out = jax.block_until_ready(fwd(x, params))

    ref = encoder_reference(x, params)
    assert out.shape == (2, 16, 4, 4), out.shape
    max_err = float(jnp.max(jnp.abs(out - ref)))
    assert jnp.allclose(out, ref, atol=5e-3, rtol=5e-3), max_err

    print("KERNEL_OK")
</pallas_src>

<mosaic_0001>
module attributes {stable_mosaic.version = 11 : i64} {
  func.func @cnncell_kernel(%arg0: i32, %arg1: i32, %arg2: memref<1x4x90x4xbf16, #tpu.memory_space<vmem>>, %arg3: memref<16x4x8xbf16, #tpu.memory_space<vmem>>, %arg4: memref<1x8xf32, #tpu.memory_space<vmem>>, %arg5: memref<1x8xf32, #tpu.memory_space<vmem>>, %arg6: memref<72x1xf32, #tpu.memory_space<vmem>>, %arg7: memref<1x72x8xf32, #tpu.memory_space<vmem>>, %arg8: memref<1x8xf32, #tpu.memory_space<vmem>>, %arg9: memref<1x8xf32, #tpu.memory_space<vmem>>) attributes {dimension_semantics = [#tpu.dimension_semantics<arbitrary>, #tpu.dimension_semantics<arbitrary>], iteration_bounds = array<i64: 2, 2>, scalar_prefetch = 0 : i64, scratch_operands = 2 : i64, tpu.core_type = #tpu.core_type<tc>, window_params = [{transform_indices = @transform_0, window_bounds = array<i64: 1, 4, 90, 4>}, {pipeline_mode = #tpu.pipeline_mode<synchronous>, transform_indices = @transform_1, window_bounds = array<i64: 16, 4, 8>}, {pipeline_mode = #tpu.pipeline_mode<synchronous>, transform_indices = @transform_2, window_bounds = array<i64: 1, 8>}, {pipeline_mode = #tpu.pipeline_mode<synchronous>, transform_indices = @transform_3, window_bounds = array<i64: 1, 8>}, {pipeline_mode = #tpu.pipeline_mode<synchronous>, transform_indices = @transform_4, window_bounds = array<i64: 72, 1>}, {transform_indices = @transform_5, window_bounds = array<i64: 1, 72, 8>}]} {
    %c0_i32 = arith.constant 0 : i32
    %0 = arith.cmpi eq, %arg0, %c0_i32 : i32
    %c0_i32_0 = arith.constant 0 : i32
    %1 = arith.cmpi eq, %arg1, %c0_i32_0 : i32
    %2 = arith.andi %0, %1 : i1
    %3 = arith.extui %2 : i1 to i32
    %c0_i32_1 = arith.constant 0 : i32
    %4 = arith.cmpi ne, %3, %c0_i32_1 : i32
    scf.if %4 {
      %cst_57 = arith.constant 0.000000e+00 : f32
      %127 = vector.broadcast %cst_57 : f32 to vector<1x8xf32>
      %c0_58 = arith.constant 0 : index
      %c0_59 = arith.constant 0 : index
      %128 = vector.load %arg8[%c0_58, %c0_59] : memref<1x8xf32, #tpu.memory_space<vmem>>, vector<1x8xf32>
      tpu.vector_store %arg8[%c0_58, %c0_59], %127 {strides = array<i32>} : memref<1x8xf32, #tpu.memory_space<vmem>>, vector<1x8xf32>,
      %cst_60 = arith.constant 0.000000e+00 : f32
      %129 = vector.broadcast %cst_60 : f32 to vector<1x8xf32>
      %c0_61 = arith.constant 0 : index
      %c0_62 = arith.constant 0 : index
      %130 = vector.load %arg9[%c0_61, %c0_62] : memref<1x8xf32, #tpu.memory_space<vmem>>, vector<1x8xf32>
      tpu.vector_store %arg9[%c0_61, %c0_62], %129 {strides = array<i32>} : memref<1x8xf32, #tpu.memory_space<vmem>>, vector<1x8xf32>,
    } else {
    }
    %c0 = arith.constant 0 : index
    %c0_2 = arith.constant 0 : index
    %c0_3 = arith.constant 0 : index
    %c0_4 = arith.constant 0 : index
    %5 = vector.load %arg2[%c0, %c0_2, %c0_3, %c0_4] : memref<1x4x90x4xbf16, #tpu.memory_space<vmem>>, vector<1x4x90x4xbf16>
    %6 = vector.shape_cast %5 : vector<1x4x90x4xbf16> to vector<4x90x4xbf16>
    %7 = arith.extf %6 : vector<4x90x4xbf16> to vector<4x90x4xf32>
    %cst = arith.constant 0.000000e+00 : f32
    %8 = vector.broadcast %cst : f32 to vector<72x8xf32>
    %9 = vector.extract_strided_slice %7 {offsets = [0, 0, 0], sizes = [1, 72, 4], strides = [1, 1, 1]} : vector<4x90x4xf32> to vector<1x72x4xf32>
    %10 = vector.shape_cast %9 : vector<1x72x4xf32> to vector<72x4xf32>
    %11 = arith.truncf %10 : vector<72x4xf32> to vector<72x4xbf16>
    %c0_5 = arith.constant 0 : index
    %c0_6 = arith.constant 0 : index
    %c0_7 = arith.constant 0 : index
    %12 = vector.load %arg3[%c0_5, %c0_6, %c0_7] : memref<16x4x8xbf16, #tpu.memory_space<vmem>>, vector<1x4x8xbf16>
    %13 = vector.shape_cast %12 : vector<1x4x8xbf16> to vector<4x8xbf16>
    %cst_8 = arith.constant dense<0.000000e+00> : vector<72x8xf32>
    %14 = tpu.matmul %11, %13, %cst_8 {dimension_numbers = #tpu.dot_dimension_numbers<[1], [0], [0], [1], [0, 0, 1, 1], [], []>} : vector<72x4xbf16>, vector<4x8xbf16>, vector<72x8xf32> -> vector<72x8xf32>
    %15 = arith.addf %8, %14 : vector<72x8xf32>
    %16 = vector.extract_strided_slice %7 {offsets = [1, 0, 0], sizes = [1, 72, 4], strides = [1, 1, 1]} : vector<4x90x4xf32> to vector<1x72x4xf32>
    %17 = vector.shape_cast %16 : vector<1x72x4xf32> to vector<72x4xf32>
    %18 = arith.truncf %17 : vector<72x4xf32> to vector<72x4xbf16>
    %c1 = arith.constant 1 : index
    %c0_9 = arith.constant 0 : index
    %c0_10 = arith.constant 0 : index
    %19 = vector.load %arg3[%c1, %c0_9, %c0_10] : memref<16x4x8xbf16, #tpu.memory_space<vmem>>, vector<1x4x8xbf16>
    %20 = vector.shape_cast %19 : vector<1x4x8xbf16> to vector<4x8xbf16>
    %cst_11 = arith.constant dense<0.000000e+00> : vector<72x8xf32>
    %21 = tpu.matmul %18, %20, %cst_11 {dimension_numbers = #tpu.dot_dimension_numbers<[1], [0], [0], [1], [0, 0, 1, 1], [], []>} : vector<72x4xbf16>, vector<4x8xbf16>, vector<72x8xf32> -> vector<72x8xf32>
    %22 = arith.addf %15, %21 : vector<72x8xf32>
    %23 = vector.extract_strided_slice %7 {offsets = [0, 1, 0], sizes = [1, 72, 4], strides = [1, 1, 1]} : vector<4x90x4xf32> to vector<1x72x4xf32>
    %24 = vector.shape_cast %23 : vector<1x72x4xf32> to vector<72x4xf32>
    %25 = arith.truncf %24 : vector<72x4xf32> to vector<72x4xbf16>
    %c2 = arith.constant 2 : index
    %c0_12 = arith.constant 0 : index
    %c0_13 = arith.constant 0 : index
    %26 = vector.load %arg3[%c2, %c0_12, %c0_13] : memref<16x4x8xbf16, #tpu.memory_space<vmem>>, vector<1x4x8xbf16>
    %27 = vector.shape_cast %26 : vector<1x4x8xbf16> to vector<4x8xbf16>
    %cst_14 = arith.constant dense<0.000000e+00> : vector<72x8xf32>
    %28 = tpu.matmul %25, %27, %cst_14 {dimension_numbers = #tpu.dot_dimension_numbers<[1], [0], [0], [1], [0, 0, 1, 1], [], []>} : vector<72x4xbf16>, vector<4x8xbf16>, vector<72x8xf32> -> vector<72x8xf32>
    %29 = arith.addf %22, %28 : vector<72x8xf32>
    %30 = vector.extract_strided_slice %7 {offsets = [1, 1, 0], sizes = [1, 72, 4], strides = [1, 1, 1]} : vector<4x90x4xf32> to vector<1x72x4xf32>
    %31 = vector.shape_cast %30 : vector<1x72x4xf32> to vector<72x4xf32>
    %32 = arith.truncf %31 : vector<72x4xf32> to vector<72x4xbf16>
    %c3 = arith.constant 3 : index
    %c0_15 = arith.constant 0 : index
    %c0_16 = arith.constant 0 : index
    %33 = vector.load %arg3[%c3, %c0_15, %c0_16] : memref<16x4x8xbf16, #tpu.memory_space<vmem>>, vector<1x4x8xbf16>
    %34 = vector.shape_cast %33 : vector<1x4x8xbf16> to vector<4x8xbf16>
    %cst_17 = arith.constant dense<0.000000e+00> : vector<72x8xf32>
    %35 = tpu.matmul %32, %34, %cst_17 {dimension_numbers = #tpu.dot_dimension_numbers<[1], [0], [0], [1], [0, 0, 1, 1], [], []>} : vector<72x4xbf16>, vector<4x8xbf16>, vector<72x8xf32> -> vector<72x8xf32>
    %36 = arith.addf %29, %35 : vector<72x8xf32>
    %37 = vector.extract_strided_slice %7 {offsets = [2, 0, 0], sizes = [1, 72, 4], strides = [1, 1, 1]} : vector<4x90x4xf32> to vector<1x72x4xf32>
    %38 = vector.shape_cast %37 : vector<1x72x4xf32> to vector<72x4xf32>
    %39 = arith.truncf %38 : vector<72x4xf32> to vector<72x4xbf16>
    %c4 = arith.constant 4 : index
    %c0_18 = arith.constant 0 : index
    %c0_19 = arith.constant 0 : index
    %40 = vector.load %arg3[%c4, %c0_18, %c0_19] : memref<16x4x8xbf16, #tpu.memory_space<vmem>>, vector<1x4x8xbf16>
    %41 = vector.shape_cast %40 : vector<1x4x8xbf16> to vector<4x8xbf16>
    %cst_20 = arith.constant dense<0.000000e+00> : vector<72x8xf32>
    %42 = tpu.matmul %39, %41, %cst_20 {dimension_numbers = #tpu.dot_dimension_numbers<[1], [0], [0], [1], [0, 0, 1, 1], [], []>} : vector<72x4xbf16>, vector<4x8xbf16>, vector<72x8xf32> -> vector<72x8xf32>
    %43 = arith.addf %36, %42 : vector<72x8xf32>
    %44 = vector.extract_strided_slice %7 {offsets = [3, 0, 0], sizes = [1, 72, 4], strides = [1, 1, 1]} : vector<4x90x4xf32> to vector<1x72x4xf32>
    %45 = vector.shape_cast %44 : vector<1x72x4xf32> to vector<72x4xf32>
    %46 = arith.truncf %45 : vector<72x4xf32> to vector<72x4xbf16>
    %c5 = arith.constant 5 : index
    %c0_21 = arith.constant 0 : index
    %c0_22 = arith.constant 0 : index
    %47 = vector.load %arg3[%c5, %c0_21, %c0_22] : memref<16x4x8xbf16, #tpu.memory_space<vmem>>, vector<1x4x8xbf16>
    %48 = vector.shape_cast %47 : vector<1x4x8xbf16> to vector<4x8xbf16>
    %cst_23 = arith.constant dense<0.000000e+00> : vector<72x8xf32>
    %49 = tpu.matmul %46, %48, %cst_23 {dimension_numbers = #tpu.dot_dimension_numbers<[1], [0], [0], [1], [0, 0, 1, 1], [], []>} : vector<72x4xbf16>, vector<4x8xbf16>, vector<72x8xf32> -> vector<72x8xf32>
    %50 = arith.addf %43, %49 : vector<72x8xf32>
    %51 = vector.extract_strided_slice %7 {offsets = [2, 1, 0], sizes = [1, 72, 4], strides = [1, 1, 1]} : vector<4x90x4xf32> to vector<1x72x4xf32>
    %52 = vector.shape_cast %51 : vector<1x72x4xf32> to vector<72x4xf32>
    %53 = arith.truncf %52 : vector<72x4xf32> to vector<72x4xbf16>
    %c6 = arith.constant 6 : index
    %c0_24 = arith.constant 0 : index
    %c0_25 = arith.constant 0 : index
    %54 = vector.load %arg3[%c6, %c0_24, %c0_25] : memref<16x4x8xbf16, #tpu.memory_space<vmem>>, vector<1x4x8xbf16>
    %55 = vector.shape_cast %54 : vector<1x4x8xbf16> to vector<4x8xbf16>
    %cst_26 = arith.constant dense<0.000000e+00> : vector<72x8xf32>
    %56 = tpu.matmul %53, %55, %cst_26 {dimension_numbers = #tpu.dot_dimension_numbers<[1], [0], [0], [1], [0, 0, 1, 1], [], []>} : vector<72x4xbf16>, vector<4x8xbf16>, vector<72x8xf32> -> vector<72x8xf32>
    %57 = arith.addf %50, %56 : vector<72x8xf32>
    %58 = vector.extract_strided_slice %7 {offsets = [3, 1, 0], sizes = [1, 72, 4], strides = [1, 1, 1]} : vector<4x90x4xf32> to vector<1x72x4xf32>
    %59 = vector.shape_cast %58 : vector<1x72x4xf32> to vector<72x4xf32>
    %60 = arith.truncf %59 : vector<72x4xf32> to vector<72x4xbf16>
    %c7 = arith.constant 7 : index
    %c0_27 = arith.constant 0 : index
    %c0_28 = arith.constant 0 : index
    %61 = vector.load %arg3[%c7, %c0_27, %c0_28] : memref<16x4x8xbf16, #tpu.memory_space<vmem>>, vector<1x4x8xbf16>
    %62 = vector.shape_cast %61 : vector<1x4x8xbf16> to vector<4x8xbf16>
    %cst_29 = arith.constant dense<0.000000e+00> : vector<72x8xf32>
    %63 = tpu.matmul %60, %62, %cst_29 {dimension_numbers = #tpu.dot_dimension_numbers<[1], [0], [0], [1], [0, 0, 1, 1], [], []>} : vector<72x4xbf16>, vector<4x8xbf16>, vector<72x8xf32> -> vector<72x8xf32>
    %64 = arith.addf %57, %63 : vector<72x8xf32>
    %65 = vector.extract_strided_slice %7 {offsets = [0, 9, 0], sizes = [1, 72, 4], strides = [1, 1, 1]} : vector<4x90x4xf32> to vector<1x72x4xf32>
    %66 = vector.shape_cast %65 : vector<1x72x4xf32> to vector<72x4xf32>
    %67 = arith.truncf %66 : vector<72x4xf32> to vector<72x4xbf16>
    %c8 = arith.constant 8 : index
    %c0_30 = arith.constant 0 : index
    %c0_31 = arith.constant 0 : index
    %68 = vector.load %arg3[%c8, %c0_30, %c0_31] : memref<16x4x8xbf16, #tpu.memory_space<vmem>>, vector<1x4x8xbf16>
    %69 = vector.shape_cast %68 : vector<1x4x8xbf16> to vector<4x8xbf16>
    %cst_32 = arith.constant dense<0.000000e+00> : vector<72x8xf32>
    %70 = tpu.matmul %67, %69, %cst_32 {dimension_numbers = #tpu.dot_dimension_numbers<[1], [0], [0], [1], [0, 0, 1, 1], [], []>} : vector<72x4xbf16>, vector<4x8xbf16>, vector<72x8xf32> -> vector<72x8xf32>
    %71 = arith.addf %64, %70 : vector<72x8xf32>
    %72 = vector.extract_strided_slice %7 {offsets = [1, 9, 0], sizes = [1, 72, 4], strides = [1, 1, 1]} : vector<4x90x4xf32> to vector<1x72x4xf32>
    %73 = vector.shape_cast %72 : vector<1x72x4xf32> to vector<72x4xf32>
    %74 = arith.truncf %73 : vector<72x4xf32> to vector<72x4xbf16>
    %c9 = arith.constant 9 : index
    %c0_33 = arith.constant 0 : index
    %c0_34 = arith.constant 0 : index
    %75 = vector.load %arg3[%c9, %c0_33, %c0_34] : memref<16x4x8xbf16, #tpu.memory_space<vmem>>, vector<1x4x8xbf16>
    %76 = vector.shape_cast %75 : vector<1x4x8xbf16> to vector<4x8xbf16>
    %cst_35 = arith.constant dense<0.000000e+00> : vector<72x8xf32>
    %77 = tpu.matmul %74, %76, %cst_35 {dimension_numbers = #tpu.dot_dimension_numbers<[1], [0], [0], [1], [0, 0, 1, 1], [], []>} : vector<72x4xbf16>, vector<4x8xbf16>, vector<72x8xf32> -> vector<72x8xf32>
    %78 = arith.addf %71, %77 : vector<72x8xf32>
    %79 = vector.extract_strided_slice %7 {offsets = [0, 10, 0], sizes = [1, 72, 4], strides = [1, 1, 1]} : vector<4x90x4xf32> to vector<1x72x4xf32>
    %80 = vector.shape_cast %79 : vector<1x72x4xf32> to vector<72x4xf32>
    %81 = arith.truncf %80 : vector<72x4xf32> to vector<72x4xbf16>
    %c10 = arith.constant 10 : index
    %c0_36 = arith.constant 0 : index
    %c0_37 = arith.constant 0 : index
    %82 = vector.load %arg3[%c10, %c0_36, %c0_37] : memref<16x4x8xbf16, #tpu.memory_space<vmem>>, vector<1x4x8xbf16>
    %83 = vector.shape_cast %82 : vector<1x4x8xbf16> to vector<4x8xbf16>
    %cst_38 = arith.constant dense<0.000000e+00> : vector<72x8xf32>
    %84 = tpu.matmul %81, %83, %cst_38 {dimension_numbers = #tpu.dot_dimension_numbers<[1], [0], [0], [1], [0, 0, 1, 1], [], []>} : vector<72x4xbf16>, vector<4x8xbf16>, vector<72x8xf32> -> vector<72x8xf32>
    %85 = arith.addf %78, %84 : vector<72x8xf32>
    %86 = vector.extract_strided_slice %7 {offsets = [1, 10, 0], sizes = [1, 72, 4], strides = [1, 1, 1]} : vector<4x90x4xf32> to vector<1x72x4xf32>
    %87 = vector.shape_cast %86 : vector<1x72x4xf32> to vector<72x4xf32>
    %88 = arith.truncf %87 : vector<72x4xf32> to vector<72x4xbf16>
    %c11 = arith.constant 11 : index
    %c0_39 = arith.constant 0 : index
    %c0_40 = arith.constant 0 : index
    %89 = vector.load %arg3[%c11, %c0_39, %c0_40] : memref<16x4x8xbf16, #tpu.memory_space<vmem>>, vector<1x4x8xbf16>
    %90 = vector.shape_cast %89 : vector<1x4x8xbf16> to vector<4x8xbf16>
    %cst_41 = arith.constant dense<0.000000e+00> : vector<72x8xf32>
    %91 = tpu.matmul %88, %90, %cst_41 {dimension_numbers = #tpu.dot_dimension_numbers<[1], [0], [0], [1], [0, 0, 1, 1], [], []>} : vector<72x4xbf16>, vector<4x8xbf16>, vector<72x8xf32> -> vector<72x8xf32>
    %92 = arith.addf %85, %91 : vector<72x8xf32>
    %93 = vector.extract_strided_slice %7 {offsets = [2, 9, 0], sizes = [1, 72, 4], strides = [1, 1, 1]} : vector<4x90x4xf32> to vector<1x72x4xf32>
    %94 = vector.shape_cast %93 : vector<1x72x4xf32> to vector<72x4xf32>
    %95 = arith.truncf %94 : vector<72x4xf32> to vector<72x4xbf16>
    %c12 = arith.constant 12 : index
    %c0_42 = arith.constant 0 : index
    %c0_43 = arith.constant 0 : index
    %96 = vector.load %arg3[%c12, %c0_42, %c0_43] : memref<16x4x8xbf16, #tpu.memory_space<vmem>>, vector<1x4x8xbf16>
    %97 = vector.shape_cast %96 : vector<1x4x8xbf16> to vector<4x8xbf16>
    %cst_44 = arith.constant dense<0.000000e+00> : vector<72x8xf32>
    %98 = tpu.matmul %95, %97, %cst_44 {dimension_numbers = #tpu.dot_dimension_numbers<[1], [0], [0], [1], [0, 0, 1, 1], [], []>} : vector<72x4xbf16>, vector<4x8xbf16>, vector<72x8xf32> -> vector<72x8xf32>
    %99 = arith.addf %92, %98 : vector<72x8xf32>
    %100 = vector.extract_strided_slice %7 {offsets = [3, 9, 0], sizes = [1, 72, 4], strides = [1, 1, 1]} : vector<4x90x4xf32> to vector<1x72x4xf32>
    %101 = vector.shape_cast %100 : vector<1x72x4xf32> to vector<72x4xf32>
    %102 = arith.truncf %101 : vector<72x4xf32> to vector<72x4xbf16>
    %c13 = arith.constant 13 : index
    %c0_45 = arith.constant 0 : index
    %c0_46 = arith.constant 0 : index
    %103 = vector.load %arg3[%c13, %c0_45, %c0_46] : memref<16x4x8xbf16, #tpu.memory_space<vmem>>, vector<1x4x8xbf16>
    %104 = vector.shape_cast %103 : vector<1x4x8xbf16> to vector<4x8xbf16>
    %cst_47 = arith.constant dense<0.000000e+00> : vector<72x8xf32>
    %105 = tpu.matmul %102, %104, %cst_47 {dimension_numbers = #tpu.dot_dimension_numbers<[1], [0], [0], [1], [0, 0, 1, 1], [], []>} : vector<72x4xbf16>, vector<4x8xbf16>, vector<72x8xf32> -> vector<72x8xf32>
    %106 = arith.addf %99, %105 : vector<72x8xf32>
    %107 = vector.extract_strided_slice %7 {offsets = [2, 10, 0], sizes = [1, 72, 4], strides = [1, 1, 1]} : vector<4x90x4xf32> to vector<1x72x4xf32>
    %108 = vector.shape_cast %107 : vector<1x72x4xf32> to vector<72x4xf32>
    %109 = arith.truncf %108 : vector<72x4xf32> to vector<72x4xbf16>
    %c14 = arith.constant 14 : index
    %c0_48 = arith.constant 0 : index
    %c0_49 = arith.constant 0 : index
    %110 = vector.load %arg3[%c14, %c0_48, %c0_49] : memref<16x4x8xbf16, #tpu.memory_space<vmem>>, vector<1x4x8xbf16>
    %111 = vector.shape_cast %110 : vector<1x4x8xbf16> to vector<4x8xbf16>
    %cst_50 = arith.constant dense<0.000000e+00> : vector<72x8xf32>
    %112 = tpu.matmul %109, %111, %cst_50 {dimension_numbers = #tpu.dot_dimension_numbers<[1], [0], [0], [1], [0, 0, 1, 1], [], []>} : vector<72x4xbf16>, vector<4x8xbf16>, vector<72x8xf32> -> vector<72x8xf32>
    %113 = arith.addf %106, %112 : vector<72x8xf32>
    %114 = vector.extract_strided_slice %7 {offsets = [3, 10, 0], sizes = [1, 72, 4], strides = [1, 1, 1]} : vector<4x90x4xf32> to vector<1x72x4xf32>
    %115 = vector.shape_cast %114 : vector<1x72x4xf32> to vector<72x4xf32>
    %116 = arith.truncf %115 : vector<72x4xf32> to vector<72x4xbf16>
    %c15 = arith.constant 15 : index
    %c0_51 = arith.constant 0 : index
    %c0_52 = arith.constant 0 : index
    %117 = vector.load %arg3[%c15, %c0_51, %c0_52] : memref<16x4x8xbf16, #tpu.memory_space<vmem>>, vector<1x4x8xbf16>
    %118 = vector.shape_cast %117 : vector<1x4x8xbf16> to vector<4x8xbf16>
    %cst_53 = arith.constant dense<0.000000e+00> : vector<72x8xf32>
    %119 = tpu.matmul %116, %118, %cst_53 {dimension_numbers = #tpu.dot_dimension_numbers<[1], [0], [0], [1], [0, 0, 1, 1], [], []>} : vector<72x4xbf16>, vector<4x8xbf16>, vector<72x8xf32> -> vector<72x8xf32>
    %120 = arith.addf %113, %119 : vector<72x8xf32>
    %c0_i32_54 = arith.constant 0 : i32
    %121 = arith.cmpi eq, %arg0, %c0_i32_54 : i32
    %122 = arith.extui %121 : i1 to i32
    %c0_i32_55 = arith.constant 0 : i32
    %123 = arith.cmpi ne, %122, %c0_i32_55 : i32
    scf.if %123 {
      %c0_57 = arith.constant 0 : index
      %c0_58 = arith.constant 0 : index
      %127 = vector.load %arg6[%c0_57, %c0_58] : memref<72x1xf32, #tpu.memory_space<vmem>>, vector<72x1xf32>
      %128 = vector.broadcast %127 : vector<72x1xf32> to vector<72x8xf32>
      %129 = arith.mulf %120, %128 : vector<72x8xf32>
      %c0_59 = arith.constant 0 : index
      %c0_60 = arith.constant 0 : index
      %130 = vector.load %arg8[%c0_59, %c0_60] : memref<1x8xf32, #tpu.memory_space<vmem>>, vector<1x8xf32>
      %cst_61 = arith.constant dense<0.000000e+00> : vector<8xf32>
      %131 = vector.multi_reduction <add>, %129, %cst_61 [0] : vector<72x8xf32> to vector<8xf32>
      %132 = vector.shape_cast %131 : vector<8xf32> to vector<1x8xf32>
      %133 = arith.addf %130, %132 : vector<1x8xf32>
      %c0_62 = arith.constant 0 : index
      %c0_63 = arith.constant 0 : index
      %134 = vector.load %arg8[%c0_62, %c0_63] : memref<1x8xf32, #tpu.memory_space<vmem>>, vector<1x8xf32>
      tpu.vector_store %arg8[%c0_62, %c0_63], %133 {strides = array<i32>} : memref<1x8xf32, #tpu.memory_space<vmem>>, vector<1x8xf32>,
      %c0_64 = arith.constant 0 : index
      %c0_65 = arith.constant 0 : index
      %135 = vector.load %arg9[%c0_64, %c0_65] : memref<1x8xf32, #tpu.memory_space<vmem>>, vector<1x8xf32>
      %136 = arith.mulf %129, %129 : vector<72x8xf32>
      %cst_66 = arith.constant dense<0.000000e+00> : vector<8xf32>
      %137 = vector.multi_reduction <add>, %136, %cst_66 [0] : vector<72x8xf32> to vector<8xf32>
      %138 = vector.shape_cast %137 : vector<8xf32> to vector<1x8xf32>
      %139 = arith.addf %135, %138 : vector<1x8xf32>
      %c0_67 = arith.constant 0 : index
      %c0_68 = arith.constant 0 : index
      %140 = vector.load %arg9[%c0_67, %c0_68] : memref<1x8xf32, #tpu.memory_space<vmem>>, vector<1x8xf32>
      tpu.vector_store %arg9[%c0_67, %c0_68], %139 {strides = array<i32>} : memref<1x8xf32, #tpu.memory_space<vmem>>, vector<1x8xf32>,
    } else {
    }
    %c1_i32 = arith.constant 1 : i32
    %124 = arith.cmpi eq, %arg0, %c1_i32 : i32
    %125 = arith.extui %124 : i1 to i32
    %c0_i32_56 = arith.constant 0 : i32
    %126 = arith.cmpi ne, %125, %c0_i32_56 : i32
    scf.if %126 {
      %c0_57 = arith.constant 0 : index
      %c0_58 = arith.constant 0 : index
      %127 = vector.load %arg8[%c0_57, %c0_58] : memref<1x8xf32, #tpu.memory_space<vmem>>, vector<1x8xf32>
      %cst_59 = arith.constant 7.812500e-03 : f32
      %128 = vector.broadcast %cst_59 : f32 to vector<1x8xf32>
      %129 = arith.mulf %127, %128 : vector<1x8xf32>
      %c0_60 = arith.constant 0 : index
      %c0_61 = arith.constant 0 : index
      %130 = vector.load %arg9[%c0_60, %c0_61] : memref<1x8xf32, #tpu.memory_space<vmem>>, vector<1x8xf32>
      %cst_62 = arith.constant 7.812500e-03 : f32
      %131 = vector.broadcast %cst_62 : f32 to vector<1x8xf32>
      %132 = arith.mulf %130, %131 : vector<1x8xf32>
      %133 = arith.mulf %129, %129 : vector<1x8xf32>
      %134 = arith.subf %132, %133 : vector<1x8xf32>
      %c0_63 = arith.constant 0 : index
      %c0_64 = arith.constant 0 : index
      %135 = vector.load %arg4[%c0_63, %c0_64] : memref<1x8xf32, #tpu.memory_space<vmem>>, vector<1x8xf32>
      %cst_65 = arith.constant 9.99999974E-6 : f32
      %136 = vector.broadcast %cst_65 : f32 to vector<1x8xf32>
      %137 = arith.addf %134, %136 : vector<1x8xf32>
      %138 = math.rsqrt %137 : vector<1x8xf32>
      %139 = arith.mulf %135, %138 : vector<1x8xf32>
      %c0_66 = arith.constant 0 : index
      %c0_67 = arith.constant 0 : index
      %140 = vector.load %arg5[%c0_66, %c0_67] : memref<1x8xf32, #tpu.memory_space<vmem>>, vector<1x8xf32>
      %141 = arith.mulf %129, %139 : vector<1x8xf32>
      %142 = arith.subf %140, %141 : vector<1x8xf32>
      %143 = vector.broadcast %139 : vector<1x8xf32> to vector<72x8xf32>
      %144 = arith.mulf %120, %143 : vector<72x8xf32>
      %145 = vector.broadcast %142 : vector<1x8xf32> to vector<72x8xf32>
      %146 = arith.addf %144, %145 : vector<72x8xf32>
      %147 = math.tanh %146 : vector<72x8xf32>
      %c0_68 = arith.constant 0 : index
      %c0_69 = arith.constant 0 : index
      %c0_70 = arith.constant 0 : index
      %148 = vector.load %arg7[%c0_68, %c0_69, %c0_70] : memref<1x72x8xf32, #tpu.memory_space<vmem>>, vector<1x72x8xf32>
      %149 = vector.shape_cast %148 : vector<1x72x8xf32> to vector<72x8xf32>
      %150 = vector.shape_cast %147 : vector<72x8xf32> to vector<1x72x8xf32>
      tpu.vector_store %arg7[%c0_68, %c0_69, %c0_70], %150 {strides = array<i32>} : memref<1x72x8xf32, #tpu.memory_space<vmem>>, vector<1x72x8xf32>,
    } else {
    }
    return
  }
  func.func @transform_0(%arg0: i32, %arg1: i32) -> (i32, i32, i32, i32) {
    %c0_i32 = arith.constant 0 : i32
    %c0_i32_0 = arith.constant 0 : i32
    %c0_i32_1 = arith.constant 0 : i32
    %c0_i32_2 = arith.constant 0 : i32
    return %arg1, %c0_i32, %c0_i32_0, %c0_i32_1 : i32, i32, i32, i32
  }
  func.func @transform_1(%arg0: i32, %arg1: i32) -> (i32, i32, i32) {
    %c0_i32 = arith.constant 0 : i32
    %c0_i32_0 = arith.constant 0 : i32
    %c0_i32_1 = arith.constant 0 : i32
    %c0_i32_2 = arith.constant 0 : i32
    return %c0_i32, %c0_i32_0, %c0_i32_1 : i32, i32, i32
  }
  func.func @transform_2(%arg0: i32, %arg1: i32) -> (i32, i32) {
    %c0_i32 = arith.constant 0 : i32
    %c0_i32_0 = arith.constant 0 : i32
    %c0_i32_1 = arith.constant 0 : i32
    return %c0_i32, %c0_i32_0 : i32, i32
  }
  func.func @transform_3(%arg0: i32, %arg1: i32) -> (i32, i32) {
    %c0_i32 = arith.constant 0 : i32
    %c0_i32_0 = arith.constant 0 : i32
    %c0_i32_1 = arith.constant 0 : i32
    return %c0_i32, %c0_i32_0 : i32, i32
  }
  func.func @transform_4(%arg0: i32, %arg1: i32) -> (i32, i32) {
    %c0_i32 = arith.constant 0 : i32
    %c0_i32_0 = arith.constant 0 : i32
    %c0_i32_1 = arith.constant 0 : i32
    return %c0_i32, %c0_i32_0 : i32, i32
  }
  func.func @transform_5(%arg0: i32, %arg1: i32) -> (i32, i32, i32) {
    %0 = arith.muli %arg0, %arg1 : i32
    %c0_i32 = arith.constant 0 : i32
    %c0_i32_0 = arith.constant 0 : i32
    %c0_i32_1 = arith.constant 0 : i32
    return %0, %c0_i32, %c0_i32_0 : i32, i32, i32
  }
}

module attributes {stable_mosaic.version = 11 : i64} {
  func.func @cnncell_kernel(%arg0: i32, %arg1: i32, %arg2: memref<1x4x30x8xbf16, #tpu.memory_space<vmem>>, %arg3: memref<16x8x16xbf16, #tpu.memory_space<vmem>>, %arg4: memref<1x16xf32, #tpu.memory_space<vmem>>, %arg5: memref<1x16xf32, #tpu.memory_space<vmem>>, %arg6: memref<20x1xf32, #tpu.memory_space<vmem>>, %arg7: memref<1x20x16xf32, #tpu.memory_space<vmem>>, %arg8: memref<1x16xf32, #tpu.memory_space<vmem>>, %arg9: memref<1x16xf32, #tpu.memory_space<vmem>>) attributes {dimension_semantics = [#tpu.dimension_semantics<arbitrary>, #tpu.dimension_semantics<arbitrary>], iteration_bounds = array<i64: 2, 2>, scalar_prefetch = 0 : i64, scratch_operands = 2 : i64, tpu.core_type = #tpu.core_type<tc>, window_params = [{transform_indices = @transform_0, window_bounds = array<i64: 1, 4, 30, 8>}, {pipeline_mode = #tpu.pipeline_mode<synchronous>, transform_indices = @transform_1, window_bounds = array<i64: 16, 8, 16>}, {pipeline_mode = #tpu.pipeline_mode<synchronous>, transform_indices = @transform_2, window_bounds = array<i64: 1, 16>}, {pipeline_mode = #tpu.pipeline_mode<synchronous>, transform_indices = @transform_3, window_bounds = array<i64: 1, 16>}, {pipeline_mode = #tpu.pipeline_mode<synchronous>, transform_indices = @transform_4, window_bounds = array<i64: 20, 1>}, {transform_indices = @transform_5, window_bounds = array<i64: 1, 20, 16>}]} {
    %c0_i32 = arith.constant 0 : i32
    %0 = arith.cmpi eq, %arg0, %c0_i32 : i32
    %c0_i32_0 = arith.constant 0 : i32
    %1 = arith.cmpi eq, %arg1, %c0_i32_0 : i32
    %2 = arith.andi %0, %1 : i1
    %3 = arith.extui %2 : i1 to i32
    %c0_i32_1 = arith.constant 0 : i32
    %4 = arith.cmpi ne, %3, %c0_i32_1 : i32
    scf.if %4 {
      %cst_57 = arith.constant 0.000000e+00 : f32
      %127 = vector.broadcast %cst_57 : f32 to vector<1x16xf32>
      %c0_58 = arith.constant 0 : index
      %c0_59 = arith.constant 0 : index
      %128 = vector.load %arg8[%c0_58, %c0_59] : memref<1x16xf32, #tpu.memory_space<vmem>>, vector<1x16xf32>
      tpu.vector_store %arg8[%c0_58, %c0_59], %127 {strides = array<i32>} : memref<1x16xf32, #tpu.memory_space<vmem>>, vector<1x16xf32>,
      %cst_60 = arith.constant 0.000000e+00 : f32
      %129 = vector.broadcast %cst_60 : f32 to vector<1x16xf32>
      %c0_61 = arith.constant 0 : index
      %c0_62 = arith.constant 0 : index
      %130 = vector.load %arg9[%c0_61, %c0_62] : memref<1x16xf32, #tpu.memory_space<vmem>>, vector<1x16xf32>
      tpu.vector_store %arg9[%c0_61, %c0_62], %129 {strides = array<i32>} : memref<1x16xf32, #tpu.memory_space<vmem>>, vector<1x16xf32>,
    } else {
    }
    %c0 = arith.constant 0 : index
    %c0_2 = arith.constant 0 : index
    %c0_3 = arith.constant 0 : index
    %c0_4 = arith.constant 0 : index
    %5 = vector.load %arg2[%c0, %c0_2, %c0_3, %c0_4] : memref<1x4x30x8xbf16, #tpu.memory_space<vmem>>, vector<1x4x30x8xbf16>
    %6 = vector.shape_cast %5 : vector<1x4x30x8xbf16> to vector<4x30x8xbf16>
    %7 = arith.extf %6 : vector<4x30x8xbf16> to vector<4x30x8xf32>
    %cst = arith.constant 0.000000e+00 : f32
    %8 = vector.broadcast %cst : f32 to vector<20x16xf32>
    %9 = vector.extract_strided_slice %7 {offsets = [0, 0, 0], sizes = [1, 20, 8], strides = [1, 1, 1]} : vector<4x30x8xf32> to vector<1x20x8xf32>
    %10 = vector.shape_cast %9 : vector<1x20x8xf32> to vector<20x8xf32>
    %11 = arith.truncf %10 : vector<20x8xf32> to vector<20x8xbf16>
    %c0_5 = arith.constant 0 : index
    %c0_6 = arith.constant 0 : index
    %c0_7 = arith.constant 0 : index
    %12 = vector.load %arg3[%c0_5, %c0_6, %c0_7] : memref<16x8x16xbf16, #tpu.memory_space<vmem>>, vector<1x8x16xbf16>
    %13 = vector.shape_cast %12 : vector<1x8x16xbf16> to vector<8x16xbf16>
    %cst_8 = arith.constant dense<0.000000e+00> : vector<20x16xf32>
    %14 = tpu.matmul %11, %13, %cst_8 {dimension_numbers = #tpu.dot_dimension_numbers<[1], [0], [0], [1], [0, 0, 1, 1], [], []>} : vector<20x8xbf16>, vector<8x16xbf16>, vector<20x16xf32> -> vector<20x16xf32>
    %15 = arith.addf %8, %14 : vector<20x16xf32>
    %16 = vector.extract_strided_slice %7 {offsets = [1, 0, 0], sizes = [1, 20, 8], strides = [1, 1, 1]} : vector<4x30x8xf32> to vector<1x20x8xf32>
    %17 = vector.shape_cast %16 : vector<1x20x8xf32> to vector<20x8xf32>
    %18 = arith.truncf %17 : vector<20x8xf32> to vector<20x8xbf16>
    %c1 = arith.constant 1 : index
    %c0_9 = arith.constant 0 : index
    %c0_10 = arith.constant 0 : index
    %19 = vector.load %arg3[%c1, %c0_9, %c0_10] : memref<16x8x16xbf16, #tpu.memory_space<vmem>>, vector<1x8x16xbf16>
    %20 = vector.shape_cast %19 : vector<1x8x16xbf16> to vector<8x16xbf16>
    %cst_11 = arith.constant dense<0.000000e+00> : vector<20x16xf32>
    %21 = tpu.matmul %18, %20, %cst_11 {dimension_numbers = #tpu.dot_dimension_numbers<[1], [0], [0], [1], [0, 0, 1, 1], [], []>} : vector<20x8xbf16>, vector<8x16xbf16>, vector<20x16xf32> -> vector<20x16xf32>
    %22 = arith.addf %15, %21 : vector<20x16xf32>
    %23 = vector.extract_strided_slice %7 {offsets = [0, 1, 0], sizes = [1, 20, 8], strides = [1, 1, 1]} : vector<4x30x8xf32> to vector<1x20x8xf32>
    %24 = vector.shape_cast %23 : vector<1x20x8xf32> to vector<20x8xf32>
    %25 = arith.truncf %24 : vector<20x8xf32> to vector<20x8xbf16>
    %c2 = arith.constant 2 : index
    %c0_12 = arith.constant 0 : index
    %c0_13 = arith.constant 0 : index
    %26 = vector.load %arg3[%c2, %c0_12, %c0_13] : memref<16x8x16xbf16, #tpu.memory_space<vmem>>, vector<1x8x16xbf16>
    %27 = vector.shape_cast %26 : vector<1x8x16xbf16> to vector<8x16xbf16>
    %cst_14 = arith.constant dense<0.000000e+00> : vector<20x16xf32>
    %28 = tpu.matmul %25, %27, %cst_14 {dimension_numbers = #tpu.dot_dimension_numbers<[1], [0], [0], [1], [0, 0, 1, 1], [], []>} : vector<20x8xbf16>, vector<8x16xbf16>, vector<20x16xf32> -> vector<20x16xf32>
    %29 = arith.addf %22, %28 : vector<20x16xf32>
    %30 = vector.extract_strided_slice %7 {offsets = [1, 1, 0], sizes = [1, 20, 8], strides = [1, 1, 1]} : vector<4x30x8xf32> to vector<1x20x8xf32>
    %31 = vector.shape_cast %30 : vector<1x20x8xf32> to vector<20x8xf32>
    %32 = arith.truncf %31 : vector<20x8xf32> to vector<20x8xbf16>
    %c3 = arith.constant 3 : index
    %c0_15 = arith.constant 0 : index
    %c0_16 = arith.constant 0 : index
    %33 = vector.load %arg3[%c3, %c0_15, %c0_16] : memref<16x8x16xbf16, #tpu.memory_space<vmem>>, vector<1x8x16xbf16>
    %34 = vector.shape_cast %33 : vector<1x8x16xbf16> to vector<8x16xbf16>
    %cst_17 = arith.constant dense<0.000000e+00> : vector<20x16xf32>
    %35 = tpu.matmul %32, %34, %cst_17 {dimension_numbers = #tpu.dot_dimension_numbers<[1], [0], [0], [1], [0, 0, 1, 1], [], []>} : vector<20x8xbf16>, vector<8x16xbf16>, vector<20x16xf32> -> vector<20x16xf32>
    %36 = arith.addf %29, %35 : vector<20x16xf32>
    %37 = vector.extract_strided_slice %7 {offsets = [2, 0, 0], sizes = [1, 20, 8], strides = [1, 1, 1]} : vector<4x30x8xf32> to vector<1x20x8xf32>
    %38 = vector.shape_cast %37 : vector<1x20x8xf32> to vector<20x8xf32>
    %39 = arith.truncf %38 : vector<20x8xf32> to vector<20x8xbf16>
    %c4 = arith.constant 4 : index
    %c0_18 = arith.constant 0 : index
    %c0_19 = arith.constant 0 : index
    %40 = vector.load %arg3[%c4, %c0_18, %c0_19] : memref<16x8x16xbf16, #tpu.memory_space<vmem>>, vector<1x8x16xbf16>
    %41 = vector.shape_cast %40 : vector<1x8x16xbf16> to vector<8x16xbf16>
    %cst_20 = arith.constant dense<0.000000e+00> : vector<20x16xf32>
    %42 = tpu.matmul %39, %41, %cst_20 {dimension_numbers = #tpu.dot_dimension_numbers<[1], [0], [0], [1], [0, 0, 1, 1], [], []>} : vector<20x8xbf16>, vector<8x16xbf16>, vector<20x16xf32> -> vector<20x16xf32>
    %43 = arith.addf %36, %42 : vector<20x16xf32>
    %44 = vector.extract_strided_slice %7 {offsets = [3, 0, 0], sizes = [1, 20, 8], strides = [1, 1, 1]} : vector<4x30x8xf32> to vector<1x20x8xf32>
    %45 = vector.shape_cast %44 : vector<1x20x8xf32> to vector<20x8xf32>
    %46 = arith.truncf %45 : vector<20x8xf32> to vector<20x8xbf16>
    %c5 = arith.constant 5 : index
    %c0_21 = arith.constant 0 : index
    %c0_22 = arith.constant 0 : index
    %47 = vector.load %arg3[%c5, %c0_21, %c0_22] : memref<16x8x16xbf16, #tpu.memory_space<vmem>>, vector<1x8x16xbf16>
    %48 = vector.shape_cast %47 : vector<1x8x16xbf16> to vector<8x16xbf16>
    %cst_23 = arith.constant dense<0.000000e+00> : vector<20x16xf32>
    %49 = tpu.matmul %46, %48, %cst_23 {dimension_numbers = #tpu.dot_dimension_numbers<[1], [0], [0], [1], [0, 0, 1, 1], [], []>} : vector<20x8xbf16>, vector<8x16xbf16>, vector<20x16xf32> -> vector<20x16xf32>
    %50 = arith.addf %43, %49 : vector<20x16xf32>
    %51 = vector.extract_strided_slice %7 {offsets = [2, 1, 0], sizes = [1, 20, 8], strides = [1, 1, 1]} : vector<4x30x8xf32> to vector<1x20x8xf32>
    %52 = vector.shape_cast %51 : vector<1x20x8xf32> to vector<20x8xf32>
    %53 = arith.truncf %52 : vector<20x8xf32> to vector<20x8xbf16>
    %c6 = arith.constant 6 : index
    %c0_24 = arith.constant 0 : index
    %c0_25 = arith.constant 0 : index
    %54 = vector.load %arg3[%c6, %c0_24, %c0_25] : memref<16x8x16xbf16, #tpu.memory_space<vmem>>, vector<1x8x16xbf16>
    %55 = vector.shape_cast %54 : vector<1x8x16xbf16> to vector<8x16xbf16>
    %cst_26 = arith.constant dense<0.000000e+00> : vector<20x16xf32>
    %56 = tpu.matmul %53, %55, %cst_26 {dimension_numbers = #tpu.dot_dimension_numbers<[1], [0], [0], [1], [0, 0, 1, 1], [], []>} : vector<20x8xbf16>, vector<8x16xbf16>, vector<20x16xf32> -> vector<20x16xf32>
    %57 = arith.addf %50, %56 : vector<20x16xf32>
    %58 = vector.extract_strided_slice %7 {offsets = [3, 1, 0], sizes = [1, 20, 8], strides = [1, 1, 1]} : vector<4x30x8xf32> to vector<1x20x8xf32>
    %59 = vector.shape_cast %58 : vector<1x20x8xf32> to vector<20x8xf32>
    %60 = arith.truncf %59 : vector<20x8xf32> to vector<20x8xbf16>
    %c7 = arith.constant 7 : index
    %c0_27 = arith.constant 0 : index
    %c0_28 = arith.constant 0 : index
    %61 = vector.load %arg3[%c7, %c0_27, %c0_28] : memref<16x8x16xbf16, #tpu.memory_space<vmem>>, vector<1x8x16xbf16>
    %62 = vector.shape_cast %61 : vector<1x8x16xbf16> to vector<8x16xbf16>
    %cst_29 = arith.constant dense<0.000000e+00> : vector<20x16xf32>
    %63 = tpu.matmul %60, %62, %cst_29 {dimension_numbers = #tpu.dot_dimension_numbers<[1], [0], [0], [1], [0, 0, 1, 1], [], []>} : vector<20x8xbf16>, vector<8x16xbf16>, vector<20x16xf32> -> vector<20x16xf32>
    %64 = arith.addf %57, %63 : vector<20x16xf32>
    %65 = vector.extract_strided_slice %7 {offsets = [0, 5, 0], sizes = [1, 20, 8], strides = [1, 1, 1]} : vector<4x30x8xf32> to vector<1x20x8xf32>
    %66 = vector.shape_cast %65 : vector<1x20x8xf32> to vector<20x8xf32>
    %67 = arith.truncf %66 : vector<20x8xf32> to vector<20x8xbf16>
    %c8 = arith.constant 8 : index
    %c0_30 = arith.constant 0 : index
    %c0_31 = arith.constant 0 : index
    %68 = vector.load %arg3[%c8, %c0_30, %c0_31] : memref<16x8x16xbf16, #tpu.memory_space<vmem>>, vector<1x8x16xbf16>
    %69 = vector.shape_cast %68 : vector<1x8x16xbf16> to vector<8x16xbf16>
    %cst_32 = arith.constant dense<0.000000e+00> : vector<20x16xf32>
    %70 = tpu.matmul %67, %69, %cst_32 {dimension_numbers = #tpu.dot_dimension_numbers<[1], [0], [0], [1], [0, 0, 1, 1], [], []>} : vector<20x8xbf16>, vector<8x16xbf16>, vector<20x16xf32> -> vector<20x16xf32>
    %71 = arith.addf %64, %70 : vector<20x16xf32>
    %72 = vector.extract_strided_slice %7 {offsets = [1, 5, 0], sizes = [1, 20, 8], strides = [1, 1, 1]} : vector<4x30x8xf32> to vector<1x20x8xf32>
    %73 = vector.shape_cast %72 : vector<1x20x8xf32> to vector<20x8xf32>
    %74 = arith.truncf %73 : vector<20x8xf32> to vector<20x8xbf16>
    %c9 = arith.constant 9 : index
    %c0_33 = arith.constant 0 : index
    %c0_34 = arith.constant 0 : index
    %75 = vector.load %arg3[%c9, %c0_33, %c0_34] : memref<16x8x16xbf16, #tpu.memory_space<vmem>>, vector<1x8x16xbf16>
    %76 = vector.shape_cast %75 : vector<1x8x16xbf16> to vector<8x16xbf16>
    %cst_35 = arith.constant dense<0.000000e+00> : vector<20x16xf32>
    %77 = tpu.matmul %74, %76, %cst_35 {dimension_numbers = #tpu.dot_dimension_numbers<[1], [0], [0], [1], [0, 0, 1, 1], [], []>} : vector<20x8xbf16>, vector<8x16xbf16>, vector<20x16xf32> -> vector<20x16xf32>
    %78 = arith.addf %71, %77 : vector<20x16xf32>
    %79 = vector.extract_strided_slice %7 {offsets = [0, 6, 0], sizes = [1, 20, 8], strides = [1, 1, 1]} : vector<4x30x8xf32> to vector<1x20x8xf32>
    %80 = vector.shape_cast %79 : vector<1x20x8xf32> to vector<20x8xf32>
    %81 = arith.truncf %80 : vector<20x8xf32> to vector<20x8xbf16>
    %c10 = arith.constant 10 : index
    %c0_36 = arith.constant 0 : index
    %c0_37 = arith.constant 0 : index
    %82 = vector.load %arg3[%c10, %c0_36, %c0_37] : memref<16x8x16xbf16, #tpu.memory_space<vmem>>, vector<1x8x16xbf16>
    %83 = vector.shape_cast %82 : vector<1x8x16xbf16> to vector<8x16xbf16>
    %cst_38 = arith.constant dense<0.000000e+00> : vector<20x16xf32>
    %84 = tpu.matmul %81, %83, %cst_38 {dimension_numbers = #tpu.dot_dimension_numbers<[1], [0], [0], [1], [0, 0, 1, 1], [], []>} : vector<20x8xbf16>, vector<8x16xbf16>, vector<20x16xf32> -> vector<20x16xf32>
    %85 = arith.addf %78, %84 : vector<20x16xf32>
    %86 = vector.extract_strided_slice %7 {offsets = [1, 6, 0], sizes = [1, 20, 8], strides = [1, 1, 1]} : vector<4x30x8xf32> to vector<1x20x8xf32>
    %87 = vector.shape_cast %86 : vector<1x20x8xf32> to vector<20x8xf32>
    %88 = arith.truncf %87 : vector<20x8xf32> to vector<20x8xbf16>
    %c11 = arith.constant 11 : index
    %c0_39 = arith.constant 0 : index
    %c0_40 = arith.constant 0 : index
    %89 = vector.load %arg3[%c11, %c0_39, %c0_40] : memref<16x8x16xbf16, #tpu.memory_space<vmem>>, vector<1x8x16xbf16>
    %90 = vector.shape_cast %89 : vector<1x8x16xbf16> to vector<8x16xbf16>
    %cst_41 = arith.constant dense<0.000000e+00> : vector<20x16xf32>
    %91 = tpu.matmul %88, %90, %cst_41 {dimension_numbers = #tpu.dot_dimension_numbers<[1], [0], [0], [1], [0, 0, 1, 1], [], []>} : vector<20x8xbf16>, vector<8x16xbf16>, vector<20x16xf32> -> vector<20x16xf32>
    %92 = arith.addf %85, %91 : vector<20x16xf32>
    %93 = vector.extract_strided_slice %7 {offsets = [2, 5, 0], sizes = [1, 20, 8], strides = [1, 1, 1]} : vector<4x30x8xf32> to vector<1x20x8xf32>
    %94 = vector.shape_cast %93 : vector<1x20x8xf32> to vector<20x8xf32>
    %95 = arith.truncf %94 : vector<20x8xf32> to vector<20x8xbf16>
    %c12 = arith.constant 12 : index
    %c0_42 = arith.constant 0 : index
    %c0_43 = arith.constant 0 : index
    %96 = vector.load %arg3[%c12, %c0_42, %c0_43] : memref<16x8x16xbf16, #tpu.memory_space<vmem>>, vector<1x8x16xbf16>
    %97 = vector.shape_cast %96 : vector<1x8x16xbf16> to vector<8x16xbf16>
    %cst_44 = arith.constant dense<0.000000e+00> : vector<20x16xf32>
    %98 = tpu.matmul %95, %97, %cst_44 {dimension_numbers = #tpu.dot_dimension_numbers<[1], [0], [0], [1], [0, 0, 1, 1], [], []>} : vector<20x8xbf16>, vector<8x16xbf16>, vector<20x16xf32> -> vector<20x16xf32>
    %99 = arith.addf %92, %98 : vector<20x16xf32>
    %100 = vector.extract_strided_slice %7 {offsets = [3, 5, 0], sizes = [1, 20, 8], strides = [1, 1, 1]} : vector<4x30x8xf32> to vector<1x20x8xf32>
    %101 = vector.shape_cast %100 : vector<1x20x8xf32> to vector<20x8xf32>
    %102 = arith.truncf %101 : vector<20x8xf32> to vector<20x8xbf16>
    %c13 = arith.constant 13 : index
    %c0_45 = arith.constant 0 : index
    %c0_46 = arith.constant 0 : index
    %103 = vector.load %arg3[%c13, %c0_45, %c0_46] : memref<16x8x16xbf16, #tpu.memory_space<vmem>>, vector<1x8x16xbf16>
    %104 = vector.shape_cast %103 : vector<1x8x16xbf16> to vector<8x16xbf16>
    %cst_47 = arith.constant dense<0.000000e+00> : vector<20x16xf32>
    %105 = tpu.matmul %102, %104, %cst_47 {dimension_numbers = #tpu.dot_dimension_numbers<[1], [0], [0], [1], [0, 0, 1, 1], [], []>} : vector<20x8xbf16>, vector<8x16xbf16>, vector<20x16xf32> -> vector<20x16xf32>
    %106 = arith.addf %99, %105 : vector<20x16xf32>
    %107 = vector.extract_strided_slice %7 {offsets = [2, 6, 0], sizes = [1, 20, 8], strides = [1, 1, 1]} : vector<4x30x8xf32> to vector<1x20x8xf32>
    %108 = vector.shape_cast %107 : vector<1x20x8xf32> to vector<20x8xf32>
    %109 = arith.truncf %108 : vector<20x8xf32> to vector<20x8xbf16>
    %c14 = arith.constant 14 : index
    %c0_48 = arith.constant 0 : index
    %c0_49 = arith.constant 0 : index
    %110 = vector.load %arg3[%c14, %c0_48, %c0_49] : memref<16x8x16xbf16, #tpu.memory_space<vmem>>, vector<1x8x16xbf16>
    %111 = vector.shape_cast %110 : vector<1x8x16xbf16> to vector<8x16xbf16>
    %cst_50 = arith.constant dense<0.000000e+00> : vector<20x16xf32>
    %112 = tpu.matmul %109, %111, %cst_50 {dimension_numbers = #tpu.dot_dimension_numbers<[1], [0], [0], [1], [0, 0, 1, 1], [], []>} : vector<20x8xbf16>, vector<8x16xbf16>, vector<20x16xf32> -> vector<20x16xf32>
    %113 = arith.addf %106, %112 : vector<20x16xf32>
    %114 = vector.extract_strided_slice %7 {offsets = [3, 6, 0], sizes = [1, 20, 8], strides = [1, 1, 1]} : vector<4x30x8xf32> to vector<1x20x8xf32>
    %115 = vector.shape_cast %114 : vector<1x20x8xf32> to vector<20x8xf32>
    %116 = arith.truncf %115 : vector<20x8xf32> to vector<20x8xbf16>
    %c15 = arith.constant 15 : index
    %c0_51 = arith.constant 0 : index
    %c0_52 = arith.constant 0 : index
    %117 = vector.load %arg3[%c15, %c0_51, %c0_52] : memref<16x8x16xbf16, #tpu.memory_space<vmem>>, vector<1x8x16xbf16>
    %118 = vector.shape_cast %117 : vector<1x8x16xbf16> to vector<8x16xbf16>
    %cst_53 = arith.constant dense<0.000000e+00> : vector<20x16xf32>
    %119 = tpu.matmul %116, %118, %cst_53 {dimension_numbers = #tpu.dot_dimension_numbers<[1], [0], [0], [1], [0, 0, 1, 1], [], []>} : vector<20x8xbf16>, vector<8x16xbf16>, vector<20x16xf32> -> vector<20x16xf32>
    %120 = arith.addf %113, %119 : vector<20x16xf32>
    %c0_i32_54 = arith.constant 0 : i32
    %121 = arith.cmpi eq, %arg0, %c0_i32_54 : i32
    %122 = arith.extui %121 : i1 to i32
    %c0_i32_55 = arith.constant 0 : i32
    %123 = arith.cmpi ne, %122, %c0_i32_55 : i32
    scf.if %123 {
      %c0_57 = arith.constant 0 : index
      %c0_58 = arith.constant 0 : index
      %127 = vector.load %arg6[%c0_57, %c0_58] : memref<20x1xf32, #tpu.memory_space<vmem>>, vector<20x1xf32>
      %128 = vector.broadcast %127 : vector<20x1xf32> to vector<20x16xf32>
      %129 = arith.mulf %120, %128 : vector<20x16xf32>
      %c0_59 = arith.constant 0 : index
      %c0_60 = arith.constant 0 : index
      %130 = vector.load %arg8[%c0_59, %c0_60] : memref<1x16xf32, #tpu.memory_space<vmem>>, vector<1x16xf32>
      %cst_61 = arith.constant dense<0.000000e+00> : vector<16xf32>
      %131 = vector.multi_reduction <add>, %129, %cst_61 [0] : vector<20x16xf32> to vector<16xf32>
      %132 = vector.shape_cast %131 : vector<16xf32> to vector<1x16xf32>
      %133 = arith.addf %130, %132 : vector<1x16xf32>
      %c0_62 = arith.constant 0 : index
      %c0_63 = arith.constant 0 : index
      %134 = vector.load %arg8[%c0_62, %c0_63] : memref<1x16xf32, #tpu.memory_space<vmem>>, vector<1x16xf32>
      tpu.vector_store %arg8[%c0_62, %c0_63], %133 {strides = array<i32>} : memref<1x16xf32, #tpu.memory_space<vmem>>, vector<1x16xf32>,
      %c0_64 = arith.constant 0 : index
      %c0_65 = arith.constant 0 : index
      %135 = vector.load %arg9[%c0_64, %c0_65] : memref<1x16xf32, #tpu.memory_space<vmem>>, vector<1x16xf32>
      %136 = arith.mulf %129, %129 : vector<20x16xf32>
      %cst_66 = arith.constant dense<0.000000e+00> : vector<16xf32>
      %137 = vector.multi_reduction <add>, %136, %cst_66 [0] : vector<20x16xf32> to vector<16xf32>
      %138 = vector.shape_cast %137 : vector<16xf32> to vector<1x16xf32>
      %139 = arith.addf %135, %138 : vector<1x16xf32>
      %c0_67 = arith.constant 0 : index
      %c0_68 = arith.constant 0 : index
      %140 = vector.load %arg9[%c0_67, %c0_68] : memref<1x16xf32, #tpu.memory_space<vmem>>, vector<1x16xf32>
      tpu.vector_store %arg9[%c0_67, %c0_68], %139 {strides = array<i32>} : memref<1x16xf32, #tpu.memory_space<vmem>>, vector<1x16xf32>,
    } else {
    }
    %c1_i32 = arith.constant 1 : i32
    %124 = arith.cmpi eq, %arg0, %c1_i32 : i32
    %125 = arith.extui %124 : i1 to i32
    %c0_i32_56 = arith.constant 0 : i32
    %126 = arith.cmpi ne, %125, %c0_i32_56 : i32
    scf.if %126 {
      %c0_57 = arith.constant 0 : index
      %c0_58 = arith.constant 0 : index
      %127 = vector.load %arg8[%c0_57, %c0_58] : memref<1x16xf32, #tpu.memory_space<vmem>>, vector<1x16xf32>
      %cst_59 = arith.constant 3.125000e-02 : f32
      %128 = vector.broadcast %cst_59 : f32 to vector<1x16xf32>
      %129 = arith.mulf %127, %128 : vector<1x16xf32>
      %c0_60 = arith.constant 0 : index
      %c0_61 = arith.constant 0 : index
      %130 = vector.load %arg9[%c0_60, %c0_61] : memref<1x16xf32, #tpu.memory_space<vmem>>, vector<1x16xf32>
      %cst_62 = arith.constant 3.125000e-02 : f32
      %131 = vector.broadcast %cst_62 : f32 to vector<1x16xf32>
      %132 = arith.mulf %130, %131 : vector<1x16xf32>
      %133 = arith.mulf %129, %129 : vector<1x16xf32>
      %134 = arith.subf %132, %133 : vector<1x16xf32>
      %c0_63 = arith.constant 0 : index
      %c0_64 = arith.constant 0 : index
      %135 = vector.load %arg4[%c0_63, %c0_64] : memref<1x16xf32, #tpu.memory_space<vmem>>, vector<1x16xf32>
      %cst_65 = arith.constant 9.99999974E-6 : f32
      %136 = vector.broadcast %cst_65 : f32 to vector<1x16xf32>
      %137 = arith.addf %134, %136 : vector<1x16xf32>
      %138 = math.rsqrt %137 : vector<1x16xf32>
      %139 = arith.mulf %135, %138 : vector<1x16xf32>
      %c0_66 = arith.constant 0 : index
      %c0_67 = arith.constant 0 : index
      %140 = vector.load %arg5[%c0_66, %c0_67] : memref<1x16xf32, #tpu.memory_space<vmem>>, vector<1x16xf32>
      %141 = arith.mulf %129, %139 : vector<1x16xf32>
      %142 = arith.subf %140, %141 : vector<1x16xf32>
      %143 = vector.broadcast %139 : vector<1x16xf32> to vector<20x16xf32>
      %144 = arith.mulf %120, %143 : vector<20x16xf32>
      %145 = vector.broadcast %142 : vector<1x16xf32> to vector<20x16xf32>
      %146 = arith.addf %144, %145 : vector<20x16xf32>
      %147 = math.tanh %146 : vector<20x16xf32>
      %c0_68 = arith.constant 0 : index
      %c0_69 = arith.constant 0 : index
      %c0_70 = arith.constant 0 : index
      %148 = vector.load %arg7[%c0_68, %c0_69, %c0_70] : memref<1x20x16xf32, #tpu.memory_space<vmem>>, vector<1x20x16xf32>
      %149 = vector.shape_cast %148 : vector<1x20x16xf32> to vector<20x16xf32>
      %150 = vector.shape_cast %147 : vector<20x16xf32> to vector<1x20x16xf32>
      tpu.vector_store %arg7[%c0_68, %c0_69, %c0_70], %150 {strides = array<i32>} : memref<1x20x16xf32, #tpu.memory_space<vmem>>, vector<1x20x16xf32>,
    } else {
    }
    return
  }
  func.func @transform_0(%arg0: i32, %arg1: i32) -> (i32, i32, i32, i32) {
    %c0_i32 = arith.constant 0 : i32
    %c0_i32_0 = arith.constant 0 : i32
    %c0_i32_1 = arith.constant 0 : i32
    %c0_i32_2 = arith.constant 0 : i32
    return %arg1, %c0_i32, %c0_i32_0, %c0_i32_1 : i32, i32, i32, i32
  }
  func.func @transform_1(%arg0: i32, %arg1: i32) -> (i32, i32, i32) {
    %c0_i32 = arith.constant 0 : i32
    %c0_i32_0 = arith.constant 0 : i32
    %c0_i32_1 = arith.constant 0 : i32
    %c0_i32_2 = arith.constant 0 : i32
    return %c0_i32, %c0_i32_0, %c0_i32_1 : i32, i32, i32
  }
  func.func @transform_2(%arg0: i32, %arg1: i32) -> (i32, i32) {
    %c0_i32 = arith.constant 0 : i32
    %c0_i32_0 = arith.constant 0 : i32
    %c0_i32_1 = arith.constant 0 : i32
    return %c0_i32, %c0_i32_0 : i32, i32
  }
  func.func @transform_3(%arg0: i32, %arg1: i32) -> (i32, i32) {
    %c0_i32 = arith.constant 0 : i32
    %c0_i32_0 = arith.constant 0 : i32
    %c0_i32_1 = arith.constant 0 : i32
    return %c0_i32, %c0_i32_0 : i32, i32
  }
  func.func @transform_4(%arg0: i32, %arg1: i32) -> (i32, i32) {
    %c0_i32 = arith.constant 0 : i32
    %c0_i32_0 = arith.constant 0 : i32
    %c0_i32_1 = arith.constant 0 : i32
    return %c0_i32, %c0_i32_0 : i32, i32
  }
  func.func @transform_5(%arg0: i32, %arg1: i32) -> (i32, i32, i32) {
    %0 = arith.muli %arg0, %arg1 : i32
    %c0_i32 = arith.constant 0 : i32
    %c0_i32_0 = arith.constant 0 : i32
    %c0_i32_1 = arith.constant 0 : i32
    return %0, %c0_i32, %c0_i32_0 : i32, i32, i32
  }
}

</mosaic_0001>

<llo_original>
// kernel: encoder_forward.2
$region0: #{encoder_forward.2}
  #allocation0 [shape = 'u32[]', space=smem, size = 0x4, offset = 0x4, fixed_abs, tag = 'smem constant byte address 0x4 - core index']
  #allocation1 [shape = 'u32[144,128]{1,0:T(1,128)}', space=vmem, size = 0x12000, scoped, tag = 'internal scratch']
  #allocation2 [shape = 'f32[1,8]{1,0:T(1,128)}', space=vmem, size = 0x200, scoped, tag = 'scratch operand']
  #allocation3 [shape = 'f32[1,8]{1,0:T(1,128)}', space=vmem, size = 0x200, scoped, tag = 'scratch operand']
  %s0 = inlined_call_operand.vmem [shape: bf16[2,4,90,4], index: 0, kind: input, shape index: {}]
  %s1 = inlined_call_operand.vmem [shape: bf16[16,4,8], index: 1, kind: input, shape index: {}]
  %s2 = inlined_call_operand.vmem [shape: f32[1,8], index: 2, kind: input, shape index: {}]
  %s3 = inlined_call_operand.vmem [shape: f32[1,8], index: 3, kind: input, shape index: {}]
  %s4 = inlined_call_operand.vmem [shape: f32[72,1], index: 4, kind: input, shape index: {}]
  %s5 = inlined_call_operand.vmem [shape: f32[2,72,8], index: 5, kind: output, shape index: {}]
  %s6 = sld [smem:[#allocation0]]
  $region65: #{encoder_forward.2} parent=0
    _
  %s8 = ssub.s32 1, %s6
  %s9 = scalar_select 0, %s8, %s6
  loop: start=0, step=1, limit=6
  $region2: #{encoder_forward.2} parent=0 // loop_pre_header
    _
  $region3: #{encoder_forward.2} parent=0 // loop_header
    %s11 = sphi 0, %s15
    %p12 = scmp.ge.s32.totalorder %s11, 6
    %s18 = sphi 0, %s30
    %s19 = sphi 0, %s26
    %s20 = sphi 0, %s18
    %s21 = sphi 0, %s19
    %s22 = sphi 0, %s20
    %s23 = sphi 0, %s21
    %s33 = sphi 0, %s35
    %s36 = sphi 0, %s33
    %s37 = sphi 0, %s36
    %s53 = sphi 0, %s37
    %s57 = sphi 0, %s57
    %s59 = sphi 0, %s57
    %s60 = sphi 0, %s59
    %s74 = sphi 0, %s60
    %s78 = sphi 0, %s78
    %s80 = sphi 0, %s78
    %s81 = sphi 0, %s80
    %s95 = sphi 0, %s81
    %s99 = sphi 0, %s99
    %s101 = sphi 0, %s99
    %s102 = sphi 0, %s101
    %s116 = sphi 0, %s102
    %s120 = sphi 0, %s120
    %s122 = sphi 0, %s120
    %s123 = sphi 0, %s122
    %s137 = sphi 0, %s123
    %s145 = sphi 0, %s147
    %s148 = sphi 0, %s145
    %s149 = sphi 0, %s148
    %s165 = sphi 0, %s149
  $region4: #{encoder_forward.2} parent=0 // loop_header_branch
    %14 = sbr.rel (%p12) target = $region8
  $region5: #{encoder_forward.2} parent=0 // loop_body
    %s16 = ssub.s32 %s11, 1
    %s17 = ssub.s32 %s11, 2
    %s24 = sadd.s32 1, %s19
    %p25 = scmp.ge.s32.totalorder %s24, 2
    %s26 = scalar_select %p25, 0, %s24
    %s27 = sadd.s32 1, %s18
    %s28 = scalar_select %p25, %s27, %s18
    %p29 = scmp.ge.s32.totalorder %s28, 2
    %s30 = scalar_select %p29, 0, %s28
    %s31 = ssub.s32 %s19, %s26
    %p32 = scmp.eq.s32.totalorder %s31, 0
    %s34 = sadd.s32 %s33, 1
    %s35 = scalar_select %p32, %s33, %s34
    %p38 = pneg %p32
    %p39 = scmp.eq.s32.totalorder %s11, 3
    %p40 = por %p38, %p39
    %p41 = scmp.ne.s32.totalorder %s33, %s36
    %p42 = scmp.eq.s32.totalorder %s11, 0
    %p43 = por %p41, %p42
    %p44 = scmp.ne.s32.totalorder %s33, %s36
    %p45 = scmp.eq.s32.totalorder %s16, 3
    %p46 = por %p44, %p45
    %p47 = scmp.ne.s32.totalorder %s36, %s37
    %p48 = scmp.eq.s32.totalorder %s16, 0
    %p49 = por %p47, %p48
    %p50 = scmp.ne.s32.totalorder %s36, %s37
    %p51 = scmp.eq.s32.totalorder %s17, 3
    %p52 = por %p50, %p51
    %p54 = scmp.ne.s32.totalorder %s37, %s53
    %p55 = scmp.eq.s32.totalorder %s17, 0
    %p56 = por %p54, %p55
    %s58 = sadd.s32 %s57, 1
    %p61 = scmp.eq.s32.totalorder %s11, 3
    %p62 = scmp.ne.s32.totalorder %s57, %s59
    %p63 = scmp.eq.s32.totalorder %s11, 0
    %p64 = por %p62, %p63
    %p65 = scmp.ne.s32.totalorder %s57, %s59
    %p66 = scmp.eq.s32.totalorder %s16, 3
    %p67 = por %p65, %p66
    %p68 = scmp.ne.s32.totalorder %s59, %s60
    %p69 = scmp.eq.s32.totalorder %s16, 0
    %p70 = por %p68, %p69
    %p71 = scmp.ne.s32.totalorder %s59, %s60
    %p72 = scmp.eq.s32.totalorder %s17, 3
    %p73 = por %p71, %p72
    %p75 = scmp.ne.s32.totalorder %s60, %s74
    %p76 = scmp.eq.s32.totalorder %s17, 0
    %p77 = por %p75, %p76
    %s79 = sadd.s32 %s78, 1
    %p82 = scmp.eq.s32.totalorder %s11, 3
    %p83 = scmp.ne.s32.totalorder %s78, %s80
    %p84 = scmp.eq.s32.totalorder %s11, 0
    %p85 = por %p83, %p84
    %p86 = scmp.ne.s32.totalorder %s78, %s80
    %p87 = scmp.eq.s32.totalorder %s16, 3
    %p88 = por %p86, %p87
    %p89 = scmp.ne.s32.totalorder %s80, %s81
    %p90 = scmp.eq.s32.totalorder %s16, 0
    %p91 = por %p89, %p90
    %p92 = scmp.ne.s32.totalorder %s80, %s81
    %p93 = scmp.eq.s32.totalorder %s17, 3
    %p94 = por %p92, %p93
    %p96 = scmp.ne.s32.totalorder %s81, %s95
    %p97 = scmp.eq.s32.totalorder %s17, 0
    %p98 = por %p96, %p97
    %s100 = sadd.s32 %s99, 1
    %p103 = scmp.eq.s32.totalorder %s11, 3
    %p104 = scmp.ne.s32.totalorder %s99, %s101
    %p105 = scmp.eq.s32.totalorder %s11, 0
    %p106 = por %p104, %p105
    %p107 = scmp.ne.s32.totalorder %s99, %s101
    %p108 = scmp.eq.s32.totalorder %s16, 3
    %p109 = por %p107, %p108
    %p110 = scmp.ne.s32.totalorder %s101, %s102
    %p111 = scmp.eq.s32.totalorder %s16, 0
    %p112 = por %p110, %p111
    %p113 = scmp.ne.s32.totalorder %s101, %s102
    %p114 = scmp.eq.s32.totalorder %s17, 3
    %p115 = por %p113, %p114
    %p117 = scmp.ne.s32.totalorder %s102, %s116
    %p118 = scmp.eq.s32.totalorder %s17, 0
    %p119 = por %p117, %p118
    %s121 = sadd.s32 %s120, 1
    %p124 = scmp.eq.s32.totalorder %s11, 3
    %p125 = scmp.ne.s32.totalorder %s120, %s122
    %p126 = scmp.eq.s32.totalorder %s11, 0
    %p127 = por %p125, %p126
    %p128 = scmp.ne.s32.totalorder %s120, %s122
    %p129 = scmp.eq.s32.totalorder %s16, 3
    %p130 = por %p128, %p129
    %p131 = scmp.ne.s32.totalorder %s122, %s123
    %p132 = scmp.eq.s32.totalorder %s16, 0
    %p133 = por %p131, %p132
    %p134 = scmp.ne.s32.totalorder %s122, %s123
    %p135 = scmp.eq.s32.totalorder %s17, 3
    %p136 = por %p134, %p135
    %p138 = scmp.ne.s32.totalorder %s123, %s137
    %p139 = scmp.eq.s32.totalorder %s17, 0
    %p140 = por %p138, %p139
    %s141 = smul.u32 %s18, %s19
    %s142 = smul.u32 %s30, %s26
    %s143 = ssub.s32 %s141, %s142
    %p144 = scmp.eq.s32.totalorder %s143, 0
    %s146 = sadd.s32 %s145, 1
    %s147 = scalar_select %p144, %s145, %s146
    %p150 = pneg %p144
    %p151 = scmp.eq.s32.totalorder %s11, 3
    %p152 = por %p150, %p151
    %p153 = scmp.ne.s32.totalorder %s145, %s148
    %p154 = scmp.eq.s32.totalorder %s11, 0
    %p155 = por %p153, %p154
    %p156 = scmp.ne.s32.totalorder %s145, %s148
    %p157 = scmp.eq.s32.totalorder %s16, 3
    %p158 = por %p156, %p157
    %p159 = scmp.ne.s32.totalorder %s148, %s149
    %p160 = scmp.eq.s32.totalorder %s16, 0
    %p161 = por %p159, %p160
    %p162 = scmp.ne.s32.totalorder %s148, %s149
    %p163 = scmp.eq.s32.totalorder %s17, 3
    %p164 = por %p162, %p163
    %p166 = scmp.ne.s32.totalorder %s149, %s165
    %p167 = scmp.eq.s32.totalorder %s17, 0
    %p168 = por %p166, %p167
    %p169 = scmp.le.s32.totalorder 1, %s11
    %p170 = scmp.lt.s32.totalorder %s11, 5
    %p171 = pnand %p169, %p170
    %p172 = pneg %p171
    // Predicated region
    $region9: #{encoder_forward.2} parent=5 // pred_check
      _
    $region10: #{encoder_forward.2} parent=5 // pred_check_branch
      %174 = sbr.rel (%p171) target = $region12
    $region11: #{encoder_forward.2} parent=5 // pred_region
      %s175 = ssub.s32 %s11, 1
      // Predicated region
      $region13: #{encoder_forward.2} parent=11 // pred_check
        %p176 = pneg %p70
      $region14: #{encoder_forward.2} parent=11 // pred_check_branch
        %178 = sbr.rel (%p176) target = $region16
      $region15: #{encoder_forward.2} parent=11 // pred_region
        _
      $region16: #{encoder_forward.2} parent=11 // pred_fallthru
        _
      // Predicated region
      $region17: #{encoder_forward.2} parent=11 // pred_check
        %p179 = pneg %p91
      $region18: #{encoder_forward.2} parent=11 // pred_check_branch
        %181 = sbr.rel (%p179) target = $region20
      $region19: #{encoder_forward.2} parent=11 // pred_region
        _
      $region20: #{encoder_forward.2} parent=11 // pred_fallthru
        _
      // Predicated region
      $region21: #{encoder_forward.2} parent=11 // pred_check
        %p182 = pneg %p112
      $region22: #{encoder_forward.2} parent=11 // pred_check_branch
        %184 = sbr.rel (%p182) target = $region24
      $region23: #{encoder_forward.2} parent=11 // pred_region
        _
      $region24: #{encoder_forward.2} parent=11 // pred_fallthru
        _
      // Predicated region
      $region25: #{encoder_forward.2} parent=11 // pred_check
        %p185 = pneg %p133
      $region26: #{encoder_forward.2} parent=11 // pred_check_branch
        %187 = sbr.rel (%p185) target = $region28
      $region27: #{encoder_forward.2} parent=11 // pred_region
        _
      $region28: #{encoder_forward.2} parent=11 // pred_fallthru
        _
    $region12: #{encoder_forward.2} parent=5 // pred_fallthru
      _
    %p188 = scmp.lt.s32.totalorder %s11, 4
    // Predicated region
    $region29: #{encoder_forward.2} parent=5 // pred_check
      %p189 = pneg %p188
    $region30: #{encoder_forward.2} parent=5 // pred_check_branch
      %191 = sbr.rel (%p189) target = $region32
    $region31: #{encoder_forward.2} parent=5 // pred_region
      // Predicated region
      $region33: #{encoder_forward.2} parent=31 // pred_check
        %p192 = pneg %p43
      $region34: #{encoder_forward.2} parent=31 // pred_check_branch
        %194 = sbr.rel (%p192) target = $region36
      $region35: #{encoder_forward.2} parent=31 // pred_region
        %p195 = scmp.lt.s32.totalorder %s19, 1
        %s196 = scalar_select %p195, %s19, 1
        %s197 = smul.addr %s196, 48
        %s198 = smul.addr %s197, 4
        %s199 = scalar_lea.vmem %s0, %s198
      $region36: #{encoder_forward.2} parent=31 // pred_fallthru
        _
    $region32: #{encoder_forward.2} parent=5 // pred_fallthru
      _
    %p200 = scmp.le.s32.totalorder 1, %s11
    %p201 = scmp.lt.s32.totalorder %s11, 5
    %p202 = pnand %p200, %p201
    %p203 = pneg %p202
    // Predicated region
    $region37: #{encoder_forward.2} parent=5 // pred_check
      _
    $region38: #{encoder_forward.2} parent=5 // pred_check_branch
      %205 = sbr.rel (%p202) target = $region40
    $region39: #{encoder_forward.2} parent=5 // pred_region
      %s206 = ssub.s32 %s11, 1
      %p207 = scmp.lt.s32.totalorder %s21, 1
      %s208 = scalar_select %p207, %s21, 1
      %s209 = smul.addr %s208, 48
      %s210 = smul.addr %s209, 4
      %s211 = scalar_lea.vmem %s0, %s210
      %p212 = pneg %p49
      %p213 = pneg %p46
      %p214 = pneg %p70
      %p215 = pneg %p67
      %p216 = pneg %p91
      %p217 = pneg %p88
      %p218 = pneg %p112
      %p219 = pneg %p109
      %p220 = pneg %p133
      %p221 = pneg %p130
      %p222 = pneg %p161
      %p223 = pneg %p158
      %s224 = smul.u32 %s20, %s21
      %p225 = scmp.lt.s32.totalorder %s224, 1
      %s226 = scalar_select %p225, %s224, 1
      %s227 = smul.addr %s226, 9
      %s228 = smul.addr %s227, 8
      %s229 = scalar_lea.vmem %s5, %s228
      %p230 = scmp.lt.s32.totalorder %s21, 1
      %s231 = scalar_select %p230, %s21, 1
      %s232 = smul.addr %s231, 48
      %s233 = smul.addr %s232, 4
      %s234 = scalar_lea.vmem %s0, %s233
      %s235 = smul.u32 %s20, %s21
      %p236 = scmp.lt.s32.totalorder %s235, 1
      %s237 = scalar_select %p236, %s235, 1
      %s238 = smul.addr %s237, 9
      %s239 = smul.addr %s238, 8
      %s240 = scalar_lea.vmem %s5, %s239
      %s241 = smul.u32 %s20, %s21
      %p243 = scmp.eq.s32.totalorder %s20, 0
      %p244 = scmp.eq.s32.totalorder %s21, 0
      %p245 = pnand %p243, %p244
      %p246 = pneg %p245
      // Predicated region
      $region41: #{encoder_forward.2} parent=39 // pred_check
        _
      $region42: #{encoder_forward.2} parent=39 // pred_check_branch
        %248 = sbr.rel (%p245) target = $region44
      $region43: #{encoder_forward.2} parent=39 // pred_region
        %vm249 = vcmask 57344
        %250 = vst.msk [vmem:[#allocation2] sm:$0x1] %vm249, 0.0
        %251 = vst.msk [vmem:[#allocation3] sm:$0x1] %vm249, 0.0
      $region44: #{encoder_forward.2} parent=39 // pred_fallthru
        _
      %v252 = vld [vmem:[%s234] sm:$0xf]
      %v253 = vld [vmem:[%s234 + $0x4] sm:$0xf]
      %v254 = vld [vmem:[%s234 + $0x8] sm:$0xf]
      %v255 = vld [vmem:[%s234 + $0xc] sm:$0xf]
      %v256 = vld [vmem:[%s234 + $0x10] sm:$0xf]
      %v257 = vld [vmem:[%s234 + $0x14] sm:$0xf]
      %v258 = vld [vmem:[%s234 + $0x18] sm:$0xf]
      %v259 = vld [vmem:[%s234 + $0x1c] sm:$0xf]
      %v260 = vld [vmem:[%s234 + $0x20] sm:$0xf]
      %v261 = vld [vmem:[%s234 + $0x24] sm:$0xf]
      %v262 = vld [vmem:[%s234 + $0x28] sm:$0xf]
      %v263 = vld [vmem:[%s234 + $0x30] sm:$0xf]
      %v264 = vld [vmem:[%s234 + $0x34] sm:$0xf]
      %v265 = vld [vmem:[%s234 + $0x38] sm:$0xf]
      %v266 = vld [vmem:[%s234 + $0x3c] sm:$0xf]
      %v267 = vld [vmem:[%s234 + $0x40] sm:$0xf]
      %v268 = vld [vmem:[%s234 + $0x44] sm:$0xf]
      %v269 = vld [vmem:[%s234 + $0x48] sm:$0xf]
      %v270 = vld [vmem:[%s234 + $0x4c] sm:$0xf]
      %v271 = vld [vmem:[%s234 + $0x50] sm:$0xf]
      %v272 = vld [vmem:[%s234 + $0x54] sm:$0xf]
      %v273 = vld [vmem:[%s234 + $0x58] sm:$0xf]
      %v274 = vld [vmem:[%s234 + $0x60] sm:$0xf]
      %v275 = vld [vmem:[%s234 + $0x64] sm:$0xf]
      %v276 = vld [vmem:[%s234 + $0x68] sm:$0xf]
      %v277 = vld [vmem:[%s234 + $0x6c] sm:$0xf]
      %v278 = vld [vmem:[%s234 + $0x70] sm:$0xf]
      %v279 = vld [vmem:[%s234 + $0x74] sm:$0xf]
      %v280 = vld [vmem:[%s234 + $0x78] sm:$0xf]
      %v281 = vld [vmem:[%s234 + $0x7c] sm:$0xf]
      %v282 = vld [vmem:[%s234 + $0x80] sm:$0xf]
      %v283 = vld [vmem:[%s234 + $0x84] sm:$0xf]
      %v284 = vld [vmem:[%s234 + $0x88] sm:$0xf]
      %v285 = vld [vmem:[%s234 + $0x90] sm:$0xf]
      %v286 = vld [vmem:[%s234 + $0x94] sm:$0xf]
      %v287 = vld [vmem:[%s234 + $0x98] sm:$0xf]
      %v288 = vld [vmem:[%s234 + $0x9c] sm:$0xf]
      %v289 = vld [vmem:[%s234 + $0xa0] sm:$0xf]
      %v290 = vld [vmem:[%s234 + $0xa4] sm:$0xf]
      %v291 = vld [vmem:[%s234 + $0xa8] sm:$0xf]
      %v292 = vld [vmem:[%s234 + $0xac] sm:$0xf]
      %v293 = vld [vmem:[%s234 + $0xb0] sm:$0xf]
      %v294 = vld [vmem:[%s234 + $0xb4] sm:$0xf]
      %v295 = vld [vmem:[%s234 + $0xb8] sm:$0xf]
      %v296 = vunpack.c.l.bf16 %v252
      %v297 = vunpack.c.l.bf16 %v253
      %v298 = vunpack.c.l.bf16 %v254
      %v299 = vunpack.c.l.bf16 %v255
      %v300 = vunpack.c.l.bf16 %v256
      %v301 = vunpack.c.l.bf16 %v257
      %v302 = vunpack.c.l.bf16 %v258
      %v303 = vunpack.c.l.bf16 %v259
      %v304 = vunpack.c.l.bf16 %v260
      %v305 = vunpack.c.l.bf16 %v261
      %v306 = vunpack.c.l.bf16 %v262
      %v307 = vunpack.c.l.bf16 %v263
      %v308 = vunpack.c.l.bf16 %v264
      %v309 = vunpack.c.l.bf16 %v265
      %v310 = vunpack.c.l.bf16 %v266
      %v311 = vunpack.c.l.bf16 %v267
      %v312 = vunpack.c.l.bf16 %v268
      %v313 = vunpack.c.l.bf16 %v269
      %v314 = vunpack.c.l.bf16 %v270
      %v315 = vunpack.c.l.bf16 %v271
      %v316 = vunpack.c.l.bf16 %v272
      %v317 = vunpack.c.l.bf16 %v273
      %v318 = vunpack.c.l.bf16 %v274
      %v319 = vunpack.c.l.bf16 %v275
      %v320 = vunpack.c.l.bf16 %v276
      %v321 = vunpack.c.l.bf16 %v277
      %v322 = vunpack.c.l.bf16 %v278
      %v323 = vunpack.c.l.bf16 %v279
      %v324 = vunpack.c.l.bf16 %v280
      %v325 = vunpack.c.l.bf16 %v281
      %v326 = vunpack.c.l.bf16 %v282
      %v327 = vunpack.c.l.bf16 %v283
      %v328 = vunpack.c.l.bf16 %v284
      %v329 = vunpack.c.l.bf16 %v285
      %v330 = vunpack.c.l.bf16 %v286
      %v331 = vunpack.c.l.bf16 %v287
      %v332 = vunpack.c.l.bf16 %v288
      %v333 = vunpack.c.l.bf16 %v289
      %v334 = vunpack.c.l.bf16 %v290
      %v335 = vunpack.c.l.bf16 %v291
      %v336 = vunpack.c.l.bf16 %v292
      %v337 = vunpack.c.l.bf16 %v293
      %v338 = vunpack.c.l.bf16 %v294
      %v339 = vunpack.c.l.bf16 %v295
      %v340 = vpack.c.bf16 %v297, %v296
      %v341 = vpack.c.bf16 %v299, %v298
      %v342 = vpack.c.bf16 %v301, %v300
      %v343 = vpack.c.bf16 %v303, %v302
      %v344 = vpack.c.bf16 %v304, %v304
      %v345 = vld [vmem:[%s1] sm:$0x3]
      %v346 = vpack.c.bf16 %v308, %v307
      %v347 = vpack.c.bf16 %v310, %v309
      %v348 = vpack.c.bf16 %v312, %v311
      %v349 = vpack.c.bf16 %v314, %v313
      %v350 = vpack.c.bf16 %v315, %v315
      %s351 = scalar_lea.vmem %s1, 2
      %v352 = vld [vmem:[%s351] sm:$0x3]
      %vm353 = vcmask 31744
      %v355 = vsel %vm353, %v346, 0
      %v358 = vsel %vm353, %v347, 0
      %v361 = vsel %vm353, %v348, 0
      %v364 = vsel %vm353, %v349, 0
      %v367 = vsel %vm353, %v350, 0
      %vm369 = vcmask 1041408
      %v371 = vsel %vm369, %v352, 0
      %373 = vmatprep.subr.bf16.mxu0 0
      %374 = vmatpush1.bf16.msra.mxu0 %v371
      %375 = vmatprep.subr.bf16.mxu0 0
      %376 = vmatpush1.bf16.msra.mxu0 0
      %377 = vmatprep.subr.bf16.mxu0 0
      %378 = vmatpush1.bf16.msra.mxu0 0
      %379 = vmatprep.subr.bf16.mxu0 0
      %380 = vmatpush1.bf16.msra.mxu0 0
      %381 = vmatprep.subr.bf16.mxu0 0
      %382 = vmatpush1.bf16.msra.mxu0 0
      %383 = vmatprep.subr.bf16.mxu0 0
      %384 = vmatpush1.bf16.msra.mxu0 0
      %385 = vmatprep.subr.bf16.mxu0 0
      %386 = vmatpush1.bf16.msra.mxu0 0
      %387 = vmatprep.subr.bf16.mxu0 0
      %388 = vmatpush1.bf16.msra.mxu0 0
      %389 = vmatprep.subr.bf16.mxu0 0
      %390 = vmatpush1.bf16.msra.mxu0 0
      %391 = vmatprep.subr.bf16.mxu0 0
      %392 = vmatpush1.bf16.msra.mxu0 0
      %393 = vmatprep.subr.bf16.mxu0 0
      %394 = vmatpush1.bf16.msra.mxu0 0
      %395 = vmatprep.subr.bf16.mxu0 0
      %396 = vmatpush1.bf16.msra.mxu0 0
      %397 = vmatprep.subr.bf16.mxu0 0
      %398 = vmatpush1.bf16.msra.mxu0 0
      %399 = vmatprep.subr.bf16.mxu0 0
      %400 = vmatpush1.bf16.msra.mxu0 0
      %401 = vmatprep.subr.bf16.mxu0 0
      %402 = vmatpush1.bf16.msra.mxu0 0
      %403 = vmatprep.subr.bf16.mxu0 0
      %404 = vmatpush1.bf16.msra.mxu0 0
      %405 = vmatprep.mubr.bf16.mxu0 0
      %406 = vmatmul.mubr.bf16.gmra.mrb[0].mxu0 %v355
      %v407 = vpop.f32.mrb[0].mxu0
      %v408 = vadd.f32 0.0, %v407
      %v409 = vpop.f32.mrb[0].mxu0
      %v410 = vpop.f32.mrb[0].mxu0
      %v411 = vadd.f32 0.0, %v410
      %v412 = vpop.f32.mrb[0].mxu0
      %413 = vmatprep.mubr.bf16.mxu0 0
      %414 = vmatmul.mubr.bf16.gmra.mrb[0].mxu0 %v358
      %v415 = vpop.f32.mrb[0].mxu0
      %v416 = vadd.f32 0.0, %v415
      %v417 = vpop.f32.mrb[0].mxu0
      %v418 = vpop.f32.mrb[0].mxu0
      %v419 = vadd.f32 0.0, %v418
      %v420 = vpop.f32.mrb[0].mxu0
      %421 = vmatprep.mubr.bf16.mxu0 0
      %422 = vmatmul.mubr.bf16.gmra.mrb[0].mxu0 %v361
      %v423 = vpop.f32.mrb[0].mxu0
      %v424 = vadd.f32 0.0, %v423
      %v425 = vpop.f32.mrb[0].mxu0
      %v426 = vpop.f32.mrb[0].mxu0
      %v427 = vadd.f32 0.0, %v426
      %v428 = vpop.f32.mrb[0].mxu0
      %429 = vmatprep.mubr.bf16.mxu0 0
      %430 = vmatmul.mubr.bf16.gmra.mrb[0].mxu0 %v364
      %v431 = vpop.f32.mrb[0].mxu0
      %v432 = vadd.f32 0.0, %v431
      %v433 = vpop.f32.mrb[0].mxu0
      %v434 = vpop.f32.mrb[0].mxu0
      %v435 = vadd.f32 0.0, %v434
      %v436 = vpop.f32.mrb[0].mxu0
      %437 = vmatprep.mubr.bf16.mxu0 0
      %438 = vmatmul.mubr.bf16.gmra.mrb[0].mxu0 %v367
      %v439 = vpop.f32.mrb[0].mxu0
      %v440 = vadd.f32 0.0, %v439
      %v441 = vpop.f32.mrb[0].mxu0
      %v442 = vpop.f32.mrb[0].mxu0
      %v443 = vpop.f32.mrb[0].mxu0
      %444 = vdwg.mxu0
      %v446 = vsel %vm353, %v340, 0
      %v449 = vsel %vm353, %v341, 0
      %v452 = vsel %vm353, %v342, 0
      %v455 = vsel %vm353, %v343, 0
      %v458 = vsel %vm353, %v344, 0
      %v461 = vsel %vm369, %v345, 0
      %463 = vmatprep.subr.bf16.mxu0 0
      %464 = vmatpush1.bf16.msra.mxu0 %v461
      %465 = vmatprep.subr.bf16.mxu0 0
      %466 = vmatpush1.bf16.msra.mxu0 0
      %467 = vmatprep.subr.bf16.mxu0 0
      %468 = vmatpush1.bf16.msra.mxu0 0
      %469 = vmatprep.subr.bf16.mxu0 0
      %470 = vmatpush1.bf16.msra.mxu0 0
      %471 = vmatprep.subr.bf16.mxu0 0
      %472 = vmatpush1.bf16.msra.mxu0 0
      %473 = vmatprep.subr.bf16.mxu0 0
      %474 = vmatpush1.bf16.msra.mxu0 0
      %475 = vmatprep.subr.bf16.mxu0 0
      %476 = vmatpush1.bf16.msra.mxu0 0
      %477 = vmatprep.subr.bf16.mxu0 0
      %478 = vmatpush1.bf16.msra.mxu0 0
      %479 = vmatprep.subr.bf16.mxu0 0
      %480 = vmatpush1.bf16.msra.mxu0 0
      %481 = vmatprep.subr.bf16.mxu0 0
      %482 = vmatpush1.bf16.msra.mxu0 0
      %483 = vmatprep.subr.bf16.mxu0 0
      %484 = vmatpush1.bf16.msra.mxu0 0
      %485 = vmatprep.subr.bf16.mxu0 0
      %486 = vmatpush1.bf16.msra.mxu0 0
      %487 = vmatprep.subr.bf16.mxu0 0
      %488 = vmatpush1.bf16.msra.mxu0 0
      %489 = vmatprep.subr.bf16.mxu0 0
      %490 = vmatpush1.bf16.msra.mxu0 0
      %491 = vmatprep.subr.bf16.mxu0 0
      %492 = vmatpush1.bf16.msra.mxu0 0
      %493 = vmatprep.subr.bf16.mxu0 0
      %494 = vmatpush1.bf16.msra.mxu0 0
      %495 = vmatprep.mubr.bf16.mxu0 0
      %496 = vmatmul.mubr.bf16.gmra.mrb[0].mxu0 %v446
      %v497 = vpop.f32.mrb[0].mxu0
      %v498 = vadd.f32 %v408, %v497
      %v499 = vpop.f32.mrb[0].mxu0
      %v500 = vpop.f32.mrb[0].mxu0
      %v501 = vadd.f32 %v411, %v500
      %v502 = vpop.f32.mrb[0].mxu0
      %503 = vmatprep.mubr.bf16.mxu0 0
      %504 = vmatmul.mubr.bf16.gmra.mrb[0].mxu0 %v449
      %v505 = vpop.f32.mrb[0].mxu0
      %v506 = vadd.f32 %v416, %v505
      %v507 = vpop.f32.mrb[0].mxu0
      %v508 = vpop.f32.mrb[0].mxu0
      %v509 = vadd.f32 %v419, %v508
      %v510 = vpop.f32.mrb[0].mxu0
      %511 = vmatprep.mubr.bf16.mxu0 0
      %512 = vmatmul.mubr.bf16.gmra.mrb[0].mxu0 %v452
      %v513 = vpop.f32.mrb[0].mxu0
      %v514 = vadd.f32 %v424, %v513
      %v515 = vpop.f32.mrb[0].mxu0
      %v516 = vpop.f32.mrb[0].mxu0
      %v517 = vadd.f32 %v427, %v516
      %v518 = vpop.f32.mrb[0].mxu0
      %519 = vmatprep.mubr.bf16.mxu0 0
      %520 = vmatmul.mubr.bf16.gmra.mrb[0].mxu0 %v455
      %v521 = vpop.f32.mrb[0].mxu0
      %v522 = vadd.f32 %v432, %v521
      %v523 = vpop.f32.mrb[0].mxu0
      %v524 = vpop.f32.mrb[0].mxu0
      %v525 = vadd.f32 %v435, %v524
      %v526 = vpop.f32.mrb[0].mxu0
      %527 = vmatprep.mubr.bf16.mxu0 0
      %528 = vmatmul.mubr.bf16.gmra.mrb[0].mxu0 %v458
      %v529 = vpop.f32.mrb[0].mxu0
      %v530 = vadd.f32 %v440, %v529
      %v531 = vpop.f32.mrb[0].mxu0
      %v532 = vpop.f32.mrb[0].mxu0
      %v533 = vpop.f32.mrb[0].mxu0
      %534 = vdwg.mxu0
      %v535 = vpack.c.bf16 %v305, %v304
      %s536 = scalar_lea.vmem %s1, 4
      %v537 = vld [vmem:[%s536] sm:$0x3]
      %vm538 = vsmask.f32 7424
      %v539 = vshrl.u32 %v340, 16
      %v541 = vshll.u32 %v340, 16
      %v543 = vrot.slane %v541, 1
      %v544 = vor.u32 %v539, %v543
      %v545 = vshll.u32 %v341, 16
      %v547 = vrot.slane %v545, 1
      %v548 = vsel %vm538, %v544, %v547
      %v549 = vshrl.u32 %v341, 16
      %v551 = vor.u32 %v549, %v547
      %v552 = vshll.u32 %v342, 16
      %v554 = vrot.slane %v552, 1
      %v555 = vsel %vm538, %v551, %v554
      %v556 = vshrl.u32 %v342, 16
      %v558 = vor.u32 %v556, %v554
      %v559 = vshll.u32 %v343, 16
      %v561 = vrot.slane %v559, 1
      %v562 = vsel %vm538, %v558, %v561
      %v563 = vshrl.u32 %v343, 16
      %v565 = vor.u32 %v563, %v561
      %v567 = vshll.u32 %v535, 16
      %v569 = vrot.slane %v567, 1
      %v570 = vsel %vm538, %v565, %v569
      %v571 = vshrl.u32 %v535, 16
      %v573 = vor.u32 %v571, %v569
      %v575 = vsel %vm353, %v548, 0
      %v578 = vsel %vm353, %v555, 0
      %v581 = vsel %vm353, %v562, 0
      %v584 = vsel %vm353, %v570, 0
      %v587 = vsel %vm353, %v573, 0
      %v590 = vsel %vm369, %v537, 0
      %592 = vmatprep.subr.bf16.mxu0 0
      %593 = vmatpush1.bf16.msra.mxu0 %v590
      %594 = vmatprep.subr.bf16.mxu0 0
      %595 = vmatpush1.bf16.msra.mxu0 0
      %596 = vmatprep.subr.bf16.mxu0 0
      %597 = vmatpush1.bf16.msra.mxu0 0
      %598 = vmatprep.subr.bf16.mxu0 0
      %599 = vmatpush1.bf16.msra.mxu0 0
      %600 = vmatprep.subr.bf16.mxu0 0
      %601 = vmatpush1.bf16.msra.mxu0 0
      %602 = vmatprep.subr.bf16.mxu0 0
      %603 = vmatpush1.bf16.msra.mxu0 0
      %604 = vmatprep.subr.bf16.mxu0 0
      %605 = vmatpush1.bf16.msra.mxu0 0
      %606 = vmatprep.subr.bf16.mxu0 0
      %607 = vmatpush1.bf16.msra.mxu0 0
      %608 = vmatprep.subr.bf16.mxu0 0
      %609 = vmatpush1.bf16.msra.mxu0 0
      %610 = vmatprep.subr.bf16.mxu0 0
      %611 = vmatpush1.bf16.msra.mxu0 0
      %612 = vmatprep.subr.bf16.mxu0 0
      %613 = vmatpush1.bf16.msra.mxu0 0
      %614 = vmatprep.subr.bf16.mxu0 0
      %615 = vmatpush1.bf16.msra.mxu0 0
      %616 = vmatprep.subr.bf16.mxu0 0
      %617 = vmatpush1.bf16.msra.mxu0 0
      %618 = vmatprep.subr.bf16.mxu0 0
      %619 = vmatpush1.bf16.msra.mxu0 0
      %620 = vmatprep.subr.bf16.mxu0 0
      %621 = vmatpush1.bf16.msra.mxu0 0
      %622 = vmatprep.subr.bf16.mxu0 0
      %623 = vmatpush1.bf16.msra.mxu0 0
      %624 = vmatprep.mubr.bf16.mxu0 0
      %625 = vmatmul.mubr.bf16.gmra.mrb[0].mxu0 %v575
      %v626 = vpop.f32.mrb[0].mxu0
      %v627 = vadd.f32 0.0, %v626
      %v628 = vpop.f32.mrb[0].mxu0
      %v629 = vpop.f32.mrb[0].mxu0
      %v630 = vadd.f32 0.0, %v629
      %v631 = vpop.f32.mrb[0].mxu0
      %632 = vmatprep.mubr.bf16.mxu0 0
      %633 = vmatmul.mubr.bf16.gmra.mrb[0].mxu0 %v578
      %v634 = vpop.f32.mrb[0].mxu0
      %v635 = vadd.f32 0.0, %v634
      %v636 = vpop.f32.mrb[0].mxu0
      %v637 = vpop.f32.mrb[0].mxu0
      %v638 = vadd.f32 0.0, %v637
      %v639 = vpop.f32.mrb[0].mxu0
      %640 = vmatprep.mubr.bf16.mxu0 0
      %641 = vmatmul.mubr.bf16.gmra.mrb[0].mxu0 %v581
      %v642 = vpop.f32.mrb[0].mxu0
      %v643 = vadd.f32 0.0, %v642
      %v644 = vpop.f32.mrb[0].mxu0
      %v645 = vpop.f32.mrb[0].mxu0
      %v646 = vadd.f32 0.0, %v645
      %v647 = vpop.f32.mrb[0].mxu0
      %648 = vmatprep.mubr.bf16.mxu0 0
      %649 = vmatmul.mubr.bf16.gmra.mrb[0].mxu0 %v584
      %v650 = vpop.f32.mrb[0].mxu0
      %v651 = vadd.f32 0.0, %v650
      %v652 = vpop.f32.mrb[0].mxu0
      %v653 = vpop.f32.mrb[0].mxu0
      %v654 = vadd.f32 0.0, %v653
      %v655 = vpop.f32.mrb[0].mxu0
      %656 = vmatprep.mubr.bf16.mxu0 0
      %657 = vmatmul.mubr.bf16.gmra.mrb[0].mxu0 %v587
      %v658 = vpop.f32.mrb[0].mxu0
      %v659 = vadd.f32 0.0, %v658
      %v660 = vpop.f32.mrb[0].mxu0
      %v661 = vpop.f32.mrb[0].mxu0
      %v662 = vpop.f32.mrb[0].mxu0
      %663 = vdwg.mxu0
      %v664 = vadd.f32 %v498, %v627
      %v665 = vadd.f32 %v501, %v630
      %v666 = vadd.f32 %v506, %v635
      %v667 = vadd.f32 %v509, %v638
      %v668 = vadd.f32 %v514, %v643
      %v669 = vadd.f32 %v517, %v646
      %v670 = vadd.f32 %v522, %v651
      %v671 = vadd.f32 %v525, %v654
      %v672 = vadd.f32 %v530, %v659
      %v673 = vpack.c.bf16 %v316, %v315
      %s674 = scalar_lea.vmem %s1, 6
      %v675 = vld [vmem:[%s674] sm:$0x3]
      %v676 = vshrl.u32 %v346, 16
      %v678 = vshll.u32 %v346, 16
      %v680 = vrot.slane %v678, 1
      %v681 = vor.u32 %v676, %v680
      %v682 = vshll.u32 %v347, 16
      %v684 = vrot.slane %v682, 1
      %v685 = vsel %vm538, %v681, %v684
      %v686 = vshrl.u32 %v347, 16
      %v688 = vor.u32 %v686, %v684
      %v689 = vshll.u32 %v348, 16
      %v691 = vrot.slane %v689, 1
      %v692 = vsel %vm538, %v688, %v691
      %v693 = vshrl.u32 %v348, 16
      %v695 = vor.u32 %v693, %v691
      %v696 = vshll.u32 %v349, 16
      %v698 = vrot.slane %v696, 1
      %v699 = vsel %vm538, %v695, %v698
      %v700 = vshrl.u32 %v349, 16
      %v702 = vor.u32 %v700, %v698
      %v704 = vshll.u32 %v673, 16
      %v706 = vrot.slane %v704, 1
      %v707 = vsel %vm538, %v702, %v706
      %v708 = vshrl.u32 %v673, 16
      %v710 = vor.u32 %v708, %v706
      %v712 = vsel %vm353, %v685, 0
      %v715 = vsel %vm353, %v692, 0
      %v718 = vsel %vm353, %v699, 0
      %v721 = vsel %vm353, %v707, 0
      %v724 = vsel %vm353, %v710, 0
      %v727 = vsel %vm369, %v675, 0
      %729 = vmatprep.subr.bf16.mxu0 0
      %730 = vmatpush1.bf16.msra.mxu0 %v727
      %731 = vmatprep.subr.bf16.mxu0 0
      %732 = vmatpush1.bf16.msra.mxu0 0
      %733 = vmatprep.subr.bf16.mxu0 0
      %734 = vmatpush1.bf16.msra.mxu0 0
      %735 = vmatprep.subr.bf16.mxu0 0
      %736 = vmatpush1.bf16.msra.mxu0 0
      %737 = vmatprep.subr.bf16.mxu0 0
      %738 = vmatpush1.bf16.msra.mxu0 0
      %739 = vmatprep.subr.bf16.mxu0 0
      %740 = vmatpush1.bf16.msra.mxu0 0
      %741 = vmatprep.subr.bf16.mxu0 0
      %742 = vmatpush1.bf16.msra.mxu0 0
      %743 = vmatprep.subr.bf16.mxu0 0
      %744 = vmatpush1.bf16.msra.mxu0 0
      %745 = vmatprep.subr.bf16.mxu0 0
      %746 = vmatpush1.bf16.msra.mxu0 0
      %747 = vmatprep.subr.bf16.mxu0 0
      %748 = vmatpush1.bf16.msra.mxu0 0
      %749 = vmatprep.subr.bf16.mxu0 0
      %750 = vmatpush1.bf16.msra.mxu0 0
      %751 = vmatprep.subr.bf16.mxu0 0
      %752 = vmatpush1.bf16.msra.mxu0 0
      %753 = vmatprep.subr.bf16.mxu0 0
      %754 = vmatpush1.bf16.msra.mxu0 0
      %755 = vmatprep.subr.bf16.mxu0 0
      %756 = vmatpush1.bf16.msra.mxu0 0
      %757 = vmatprep.subr.bf16.mxu0 0
      %758 = vmatpush1.bf16.msra.mxu0 0
      %759 = vmatprep.subr.bf16.mxu0 0
      %760 = vmatpush1.bf16.msra.mxu0 0
      %761 = vmatprep.mubr.bf16.mxu0 0
      %762 = vmatmul.mubr.bf16.gmra.mrb[0].mxu0 %v712
      %v763 = vpop.f32.mrb[0].mxu0
      %v764 = vadd.f32 0.0, %v763
      %v765 = vpop.f32.mrb[0].mxu0
      %v766 = vpop.f32.mrb[0].mxu0
      %v767 = vadd.f32 0.0, %v766
      %v768 = vpop.f32.mrb[0].mxu0
      %769 = vmatprep.mubr.bf16.mxu0 0
      %770 = vmatmul.mubr.bf16.gmra.mrb[0].mxu0 %v715
      %v771 = vpop.f32.mrb[0].mxu0
      %v772 = vadd.f32 0.0, %v771
      %v773 = vpop.f32.mrb[0].mxu0
      %v774 = vpop.f32.mrb[0].mxu0
      %v775 = vadd.f32 0.0, %v774
      %v776 = vpop.f32.mrb[0].mxu0
      %777 = vmatprep.mubr.bf16.mxu0 0
      %778 = vmatmul.mubr.bf16.gmra.mrb[0].mxu0 %v718
      %v779 = vpop.f32.mrb[0].mxu0
      %v780 = vadd.f32 0.0, %v779
      %v781 = vpop.f32.mrb[0].mxu0
      %v782 = vpop.f32.mrb[0].mxu0
      %v783 = vadd.f32 0.0, %v782
      %v784 = vpop.f32.mrb[0].mxu0
      %785 = vmatprep.mubr.bf16.mxu0 0
      %786 = vmatmul.mubr.bf16.gmra.mrb[0].mxu0 %v721
      %v787 = vpop.f32.mrb[0].mxu0
      %v788 = vadd.f32 0.0, %v787
      %v789 = vpop.f32.mrb[0].mxu0
      %v790 = vpop.f32.mrb[0].mxu0
      %v791 = vadd.f32 0.0, %v790
      %v792 = vpop.f32.mrb[0].mxu0
      %793 = vmatprep.mubr.bf16.mxu0 0
      %794 = vmatmul.mubr.bf16.gmra.mrb[0].mxu0 %v724
      %v795 = vpop.f32.mrb[0].mxu0
      %v796 = vadd.f32 0.0, %v795
      %v797 = vpop.f32.mrb[0].mxu0
      %v798 = vpop.f32.mrb[0].mxu0
      %v799 = vpop.f32.mrb[0].mxu0
      %800 = vdwg.mxu0
      %v801 = vadd.f32 %v664, %v764
      %v802 = vadd.f32 %v665, %v767
      %v803 = vadd.f32 %v666, %v772
      %v804 = vadd.f32 %v667, %v775
      %v805 = vadd.f32 %v668, %v780
      %v806 = vadd.f32 %v669, %v783
      %v807 = vadd.f32 %v670, %v788
      %v808 = vadd.f32 %v671, %v791
      %v809 = vadd.f32 %v672, %v796
      %v810 = vpack.c.bf16 %v319, %v318
      %v811 = vpack.c.bf16 %v321, %v320
      %v812 = vpack.c.bf16 %v323, %v322
      %v813 = vpack.c.bf16 %v325, %v324
      %v814 = vpack.c.bf16 %v326, %v326
      %s815 = scalar_lea.vmem %s1, 8
      %v816 = vld [vmem:[%s815] sm:$0x3]
      %v818 = vsel %vm353, %v810, 0
      %v821 = vsel %vm353, %v811, 0
      %v824 = vsel %vm353, %v812, 0
      %v827 = vsel %vm353, %v813, 0
      %v830 = vsel %vm353, %v814, 0
      %v833 = vsel %vm369, %v816, 0
      %835 = vmatprep.subr.bf16.mxu0 0
      %836 = vmatpush1.bf16.msra.mxu0 %v833
      %837 = vmatprep.subr.bf16.mxu0 0
      %838 = vmatpush1.bf16.msra.mxu0 0
      %839 = vmatprep.subr.bf16.mxu0 0
      %840 = vmatpush1.bf16.msra.mxu0 0
      %841 = vmatprep.subr.bf16.mxu0 0
      %842 = vmatpush1.bf16.msra.mxu0 0
      %843 = vmatprep.subr.bf16.mxu0 0
      %844 = vmatpush1.bf16.msra.mxu0 0
      %845 = vmatprep.subr.bf16.mxu0 0
      %846 = vmatpush1.bf16.msra.mxu0 0
      %847 = vmatprep.subr.bf16.mxu0 0
      %848 = vmatpush1.bf16.msra.mxu0 0
      %849 = vmatprep.subr.bf16.mxu0 0
      %850 = vmatpush1.bf16.msra.mxu0 0
      %851 = vmatprep.subr.bf16.mxu0 0
      %852 = vmatpush1.bf16.msra.mxu0 0
      %853 = vmatprep.subr.bf16.mxu0 0
      %854 = vmatpush1.bf16.msra.mxu0 0
      %855 = vmatprep.subr.bf16.mxu0 0
      %856 = vmatpush1.bf16.msra.mxu0 0
      %857 = vmatprep.subr.bf16.mxu0 0
      %858 = vmatpush1.bf16.msra.mxu0 0
      %859 = vmatprep.subr.bf16.mxu0 0
      %860 = vmatpush1.bf16.msra.mxu0 0
      %861 = vmatprep.subr.bf16.mxu0 0
      %862 = vmatpush1.bf16.msra.mxu0 0
      %863 = vmatprep.subr.bf16.mxu0 0
      %864 = vmatpush1.bf16.msra.mxu0 0
      %865 = vmatprep.subr.bf16.mxu0 0
      %866 = vmatpush1.bf16.msra.mxu0 0
      %867 = vmatprep.mubr.bf16.mxu0 0
      %868 = vmatmul.mubr.bf16.gmra.mrb[0].mxu0 %v818
      %v869 = vpop.f32.mrb[0].mxu0
      %v870 = vadd.f32 0.0, %v869
      %v871 = vpop.f32.mrb[0].mxu0
      %v872 = vpop.f32.mrb[0].mxu0
      %v873 = vadd.f32 0.0, %v872
      %v874 = vpop.f32.mrb[0].mxu0
      %875 = vmatprep.mubr.bf16.mxu0 0
      %876 = vmatmul.mubr.bf16.gmra.mrb[0].mxu0 %v821
      %v877 = vpop.f32.mrb[0].mxu0
      %v878 = vadd.f32 0.0, %v877
      %v879 = vpop.f32.mrb[0].mxu0
      %v880 = vpop.f32.mrb[0].mxu0
      %v881 = vadd.f32 0.0, %v880
      %v882 = vpop.f32.mrb[0].mxu0
      %883 = vmatprep.mubr.bf16.mxu0 0
      %884 = vmatmul.mubr.bf16.gmra.mrb[0].mxu0 %v824
      %v885 = vpop.f32.mrb[0].mxu0
      %v886 = vadd.f32 0.0, %v885
      %v887 = vpop.f32.mrb[0].mxu0
      %v888 = vpop.f32.mrb[0].mxu0
      %v889 = vadd.f32 0.0, %v888
      %v890 = vpop.f32.mrb[0].mxu0
      %891 = vmatprep.mubr.bf16.mxu0 0
      %892 = vmatmul.mubr.bf16.gmra.mrb[0].mxu0 %v827
      %v893 = vpop.f32.mrb[0].mxu0
      %v894 = vadd.f32 0.0, %v893
      %v895 = vpop.f32.mrb[0].mxu0
      %v896 = vpop.f32.mrb[0].mxu0
      %v897 = vadd.f32 0.0, %v896
      %v898 = vpop.f32.mrb[0].mxu0
      %899 = vmatprep.mubr.bf16.mxu0 0
      %900 = vmatmul.mubr.bf16.gmra.mrb[0].mxu0 %v830
      %v901 = vpop.f32.mrb[0].mxu0
      %v902 = vadd.f32 0.0, %v901
      %v903 = vpop.f32.mrb[0].mxu0
      %v904 = vpop.f32.mrb[0].mxu0
      %v905 = vpop.f32.mrb[0].mxu0
      %906 = vdwg.mxu0
      %v907 = vadd.f32 %v801, %v870
      %v908 = vadd.f32 %v802, %v873
      %v909 = vadd.f32 %v803, %v878
      %v910 = vadd.f32 %v804, %v881
      %v911 = vadd.f32 %v805, %v886
      %v912 = vadd.f32 %v806, %v889
      %v913 = vadd.f32 %v807, %v894
      %v914 = vadd.f32 %v808, %v897
      %v915 = vadd.f32 %v809, %v902
      %v916 = vpack.c.bf16 %v330, %v329
      %v917 = vpack.c.bf16 %v332, %v331
      %v918 = vpack.c.bf16 %v334, %v333
      %v919 = vpack.c.bf16 %v336, %v335
      %v920 = vpack.c.bf16 %v337, %v337
      %s921 = scalar_lea.vmem %s1, 10
      %v922 = vld [vmem:[%s921] sm:$0x3]
      %v924 = vsel %vm353, %v916, 0
      %v927 = vsel %vm353, %v917, 0
      %v930 = vsel %vm353, %v918, 0
      %v933 = vsel %vm353, %v919, 0
      %v936 = vsel %vm353, %v920, 0
      %v939 = vsel %vm369, %v922, 0
      %941 = vmatprep.subr.bf16.mxu0 0
      %942 = vmatpush1.bf16.msra.mxu0 %v939
      %943 = vmatprep.subr.bf16.mxu0 0
      %944 = vmatpush1.bf16.msra.mxu0 0
      %945 = vmatprep.subr.bf16.mxu0 0
      %946 = vmatpush1.bf16.msra.mxu0 0
      %947 = vmatprep.subr.bf16.mxu0 0
      %948 = vmatpush1.bf16.msra.mxu0 0
      %949 = vmatprep.subr.bf16.mxu0 0
      %950 = vmatpush1.bf16.msra.mxu0 0
      %951 = vmatprep.subr.bf16.mxu0 0
      %952 = vmatpush1.bf16.msra.mxu0 0
      %953 = vmatprep.subr.bf16.mxu0 0
      %954 = vmatpush1.bf16.msra.mxu0 0
      %955 = vmatprep.subr.bf16.mxu0 0
      %956 = vmatpush1.bf16.msra.mxu0 0
      %957 = vmatprep.subr.bf16.mxu0 0
      %958 = vmatpush1.bf16.msra.mxu0 0
      %959 = vmatprep.subr.bf16.mxu0 0
      %960 = vmatpush1.bf16.msra.mxu0 0
      %961 = vmatprep.subr.bf16.mxu0 0
      %962 = vmatpush1.bf16.msra.mxu0 0
      %963 = vmatprep.subr.bf16.mxu0 0
      %964 = vmatpush1.bf16.msra.mxu0 0
      %965 = vmatprep.subr.bf16.mxu0 0
      %966 = vmatpush1.bf16.msra.mxu0 0
      %967 = vmatprep.subr.bf16.mxu0 0
      %968 = vmatpush1.bf16.msra.mxu0 0
      %969 = vmatprep.subr.bf16.mxu0 0
      %970 = vmatpush1.bf16.msra.mxu0 0
      %971 = vmatprep.subr.bf16.mxu0 0
      %972 = vmatpush1.bf16.msra.mxu0 0
      %973 = vmatprep.mubr.bf16.mxu0 0
      %974 = vmatmul.mubr.bf16.gmra.mrb[0].mxu0 %v924
      %v975 = vpop.f32.mrb[0].mxu0
      %v976 = vadd.f32 0.0, %v975
      %v977 = vpop.f32.mrb[0].mxu0
      %v978 = vpop.f32.mrb[0].mxu0
      %v979 = vadd.f32 0.0, %v978
      %v980 = vpop.f32.mrb[0].mxu0
      %981 = vmatprep.mubr.bf16.mxu0 0
      %982 = vmatmul.mubr.bf16.gmra.mrb[0].mxu0 %v927
      %v983 = vpop.f32.mrb[0].mxu0
      %v984 = vadd.f32 0.0, %v983
      %v985 = vpop.f32.mrb[0].mxu0
      %v986 = vpop.f32.mrb[0].mxu0
      %v987 = vadd.f32 0.0, %v986
      %v988 = vpop.f32.mrb[0].mxu0
      %989 = vmatprep.mubr.bf16.mxu0 0
      %990 = vmatmul.mubr.bf16.gmra.mrb[0].mxu0 %v930
      %v991 = vpop.f32.mrb[0].mxu0
      %v992 = vadd.f32 0.0, %v991
      %v993 = vpop.f32.mrb[0].mxu0
      %v994 = vpop.f32.mrb[0].mxu0
      %v995 = vadd.f32 0.0, %v994
      %v996 = vpop.f32.mrb[0].mxu0
      %997 = vmatprep.mubr.bf16.mxu0 0
      %998 = vmatmul.mubr.bf16.gmra.mrb[0].mxu0 %v933
      %v999 = vpop.f32.mrb[0].mxu0
      %v1000 = vadd.f32 0.0, %v999
      %v1001 = vpop.f32.mrb[0].mxu0
      %v1002 = vpop.f32.mrb[0].mxu0
      %v1003 = vadd.f32 0.0, %v1002
      %v1004 = vpop.f32.mrb[0].mxu0
      %1005 = vmatprep.mubr.bf16.mxu0 0
      %1006 = vmatmul.mubr.bf16.gmra.mrb[0].mxu0 %v936
      %v1007 = vpop.f32.mrb[0].mxu0
      %v1008 = vadd.f32 0.0, %v1007
      %v1009 = vpop.f32.mrb[0].mxu0
      %v1010 = vpop.f32.mrb[0].mxu0
      %v1011 = vpop.f32.mrb[0].mxu0
      %1012 = vdwg.mxu0
      %v1013 = vadd.f32 %v907, %v976
      %v1014 = vadd.f32 %v908, %v979
      %v1015 = vadd.f32 %v909, %v984
      %v1016 = vadd.f32 %v910, %v987
      %v1017 = vadd.f32 %v911, %v992
      %v1018 = vadd.f32 %v912, %v995
      %v1019 = vadd.f32 %v913, %v1000
      %v1020 = vadd.f32 %v914, %v1003
      %v1021 = vadd.f32 %v915, %v1008
      %v1022 = vpack.c.bf16 %v327, %v326
      %s1023 = scalar_lea.vmem %s1, 12
      %v1024 = vld [vmem:[%s1023] sm:$0x3]
      %v1025 = vshrl.u32 %v810, 16
      %v1027 = vshll.u32 %v810, 16
      %v1029 = vrot.slane %v1027, 1
      %v1030 = vor.u32 %v1025, %v1029
      %v1031 = vshll.u32 %v811, 16
      %v1033 = vrot.slane %v1031, 1
      %v1034 = vsel %vm538, %v1030, %v1033
      %v1035 = vshrl.u32 %v811, 16
      %v1037 = vor.u32 %v1035, %v1033
      %v1038 = vshll.u32 %v812, 16
      %v1040 = vrot.slane %v1038, 1
      %v1041 = vsel %vm538, %v1037, %v1040
      %v1042 = vshrl.u32 %v812, 16
      %v1044 = vor.u32 %v1042, %v1040
      %v1045 = vshll.u32 %v813, 16
      %v1047 = vrot.slane %v1045, 1
      %v1048 = vsel %vm538, %v1044, %v1047
      %v1049 = vshrl.u32 %v813, 16
      %v1051 = vor.u32 %v1049, %v1047
      %v1053 = vshll.u32 %v1022, 16
      %v1055 = vrot.slane %v1053, 1
      %v1056 = vsel %vm538, %v1051, %v1055
      %v1057 = vshrl.u32 %v1022, 16
      %v1059 = vor.u32 %v1057, %v1055
      %v1061 = vsel %vm353, %v1034, 0
      %v1064 = vsel %vm353, %v1041, 0
      %v1067 = vsel %vm353, %v1048, 0
      %v1070 = vsel %vm353, %v1056, 0
      %v1073 = vsel %vm353, %v1059, 0
      %v1076 = vsel %vm369, %v1024, 0
      %1078 = vmatprep.subr.bf16.mxu0 0
      %1079 = vmatpush1.bf16.msra.mxu0 %v1076
      %1080 = vmatprep.subr.bf16.mxu0 0
      %1081 = vmatpush1.bf16.msra.mxu0 0
      %1082 = vmatprep.subr.bf16.mxu0 0
      %1083 = vmatpush1.bf16.msra.mxu0 0
      %1084 = vmatprep.subr.bf16.mxu0 0
      %1085 = vmatpush1.bf16.msra.mxu0 0
      %1086 = vmatprep.subr.bf16.mxu0 0
      %1087 = vmatpush1.bf16.msra.mxu0 0
      %1088 = vmatprep.subr.bf16.mxu0 0
      %1089 = vmatpush1.bf16.msra.mxu0 0
      %1090 = vmatprep.subr.bf16.mxu0 0
      %1091 = vmatpush1.bf16.msra.mxu0 0
      %1092 = vmatprep.subr.bf16.mxu0 0
      %1093 = vmatpush1.bf16.msra.mxu0 0
      %1094 = vmatprep.subr.bf16.mxu0 0
      %1095 = vmatpush1.bf16.msra.mxu0 0
      %1096 = vmatprep.subr.bf16.mxu0 0
      %1097 = vmatpush1.bf16.msra.mxu0 0
      %1098 = vmatprep.subr.bf16.mxu0 0
      %1099 = vmatpush1.bf16.msra.mxu0 0
      %1100 = vmatprep.subr.bf16.mxu0 0
      %1101 = vmatpush1.bf16.msra.mxu0 0
      %1102 = vmatprep.subr.bf16.mxu0 0
      %1103 = vmatpush1.bf16.msra.mxu0 0
      %1104 = vmatprep.subr.bf16.mxu0 0
      %1105 = vmatpush1.bf16.msra.mxu0 0
      %1106 = vmatprep.subr.bf16.mxu0 0
      %1107 = vmatpush1.bf16.msra.mxu0 0
      %1108 = vmatprep.subr.bf16.mxu0 0
      %1109 = vmatpush1.bf16.msra.mxu0 0
      %1110 = vmatprep.mubr.bf16.mxu0 0
      %1111 = vmatmul.mubr.bf16.gmra.mrb[0].mxu0 %v1061
      %v1112 = vpop.f32.mrb[0].mxu0
      %v1113 = vadd.f32 0.0, %v1112
      %v1114 = vpop.f32.mrb[0].mxu0
      %v1115 = vpop.f32.mrb[0].mxu0
      %v1116 = vadd.f32 0.0, %v1115
      %v1117 = vpop.f32.mrb[0].mxu0
      %1118 = vmatprep.mubr.bf16.mxu0 0
      %1119 = vmatmul.mubr.bf16.gmra.mrb[0].mxu0 %v1064
      %v1120 = vpop.f32.mrb[0].mxu0
      %v1121 = vadd.f32 0.0, %v1120
      %v1122 = vpop.f32.mrb[0].mxu0
      %v1123 = vpop.f32.mrb[0].mxu0
      %v1124 = vadd.f32 0.0, %v1123
      %v1125 = vpop.f32.mrb[0].mxu0
      %1126 = vmatprep.mubr.bf16.mxu0 0
      %1127 = vmatmul.mubr.bf16.gmra.mrb[0].mxu0 %v1067
      %v1128 = vpop.f32.mrb[0].mxu0
      %v1129 = vadd.f32 0.0, %v1128
      %v1130 = vpop.f32.mrb[0].mxu0
      %v1131 = vpop.f32.mrb[0].mxu0
      %v1132 = vadd.f32 0.0, %v1131
      %v1133 = vpop.f32.mrb[0].mxu0
      %1134 = vmatprep.mubr.bf16.mxu0 0
      %1135 = vmatmul.mubr.bf16.gmra.mrb[0].mxu0 %v1070
      %v1136 = vpop.f32.mrb[0].mxu0
      %v1137 = vadd.f32 0.0, %v1136
      %v1138 = vpop.f32.mrb[0].mxu0
      %v1139 = vpop.f32.mrb[0].mxu0
      %v1140 = vadd.f32 0.0, %v1139
      %v1141 = vpop.f32.mrb[0].mxu0
      %1142 = vmatprep.mubr.bf16.mxu0 0
      %1143 = vmatmul.mubr.bf16.gmra.mrb[0].mxu0 %v1073
      %v1144 = vpop.f32.mrb[0].mxu0
      %v1145 = vadd.f32 0.0, %v1144
      %v1146 = vpop.f32.mrb[0].mxu0
      %v1147 = vpop.f32.mrb[0].mxu0
      %v1148 = vpop.f32.mrb[0].mxu0
      %1149 = vdwg.mxu0
      %v1150 = vadd.f32 %v1013, %v1113
      %v1151 = vadd.f32 %v1014, %v1116
      %v1152 = vadd.f32 %v1015, %v1121
      %v1153 = vadd.f32 %v1016, %v1124
      %v1154 = vadd.f32 %v1017, %v1129
      %v1155 = vadd.f32 %v1018, %v1132
      %v1156 = vadd.f32 %v1019, %v1137
      %v1157 = vadd.f32 %v1020, %v1140
      %v1158 = vadd.f32 %v1021, %v1145
      %v1159 = vpack.c.bf16 %v338, %v337
      %s1160 = scalar_lea.vmem %s1, 14
      %v1161 = vld [vmem:[%s1160] sm:$0x3]
      %v1162 = vshrl.u32 %v916, 16
      %v1164 = vshll.u32 %v916, 16
      %v1166 = vrot.slane %v1164, 1
      %v1167 = vor.u32 %v1162, %v1166
      %v1168 = vshll.u32 %v917, 16
      %v1170 = vrot.slane %v1168, 1
      %v1171 = vsel %vm538, %v1167, %v1170
      %v1172 = vshrl.u32 %v917, 16
      %v1174 = vor.u32 %v1172, %v1170
      %v1175 = vshll.u32 %v918, 16
      %v1177 = vrot.slane %v1175, 1
      %v1178 = vsel %vm538, %v1174, %v1177
      %v1179 = vshrl.u32 %v918, 16
      %v1181 = vor.u32 %v1179, %v1177
      %v1182 = vshll.u32 %v919, 16
      %v1184 = vrot.slane %v1182, 1
      %v1185 = vsel %vm538, %v1181, %v1184
      %v1186 = vshrl.u32 %v919, 16
      %v1188 = vor.u32 %v1186, %v1184
      %v1190 = vshll.u32 %v1159, 16
      %v1192 = vrot.slane %v1190, 1
      %v1193 = vsel %vm538, %v1188, %v1192
      %v1194 = vshrl.u32 %v1159, 16
      %v1196 = vor.u32 %v1194, %v1192
      %v1198 = vsel %vm353, %v1171, 0
      %v1201 = vsel %vm353, %v1178, 0
      %v1204 = vsel %vm353, %v1185, 0
      %v1207 = vsel %vm353, %v1193, 0
      %v1210 = vsel %vm353, %v1196, 0
      %v1213 = vsel %vm369, %v1161, 0
      %1215 = vmatprep.subr.bf16.mxu0 0
      %1216 = vmatpush1.bf16.msra.mxu0 %v1213
      %1217 = vmatprep.subr.bf16.mxu0 0
      %1218 = vmatpush1.bf16.msra.mxu0 0
      %1219 = vmatprep.subr.bf16.mxu0 0
      %1220 = vmatpush1.bf16.msra.mxu0 0
      %1221 = vmatprep.subr.bf16.mxu0 0
      %1222 = vmatpush1.bf16.msra.mxu0 0
      %1223 = vmatprep.subr.bf16.mxu0 0
      %1224 = vmatpush1.bf16.msra.mxu0 0
      %1225 = vmatprep.subr.bf16.mxu0 0
      %1226 = vmatpush1.bf16.msra.mxu0 0
      %1227 = vmatprep.subr.bf16.mxu0 0
      %1228 = vmatpush1.bf16.msra.mxu0 0
      %1229 = vmatprep.subr.bf16.mxu0 0
      %1230 = vmatpush1.bf16.msra.mxu0 0
      %1231 = vmatprep.subr.bf16.mxu0 0
      %1232 = vmatpush1.bf16.msra.mxu0 0
      %1233 = vmatprep.subr.bf16.mxu0 0
      %1234 = vmatpush1.bf16.msra.mxu0 0
      %1235 = vmatprep.subr.bf16.mxu0 0
      %1236 = vmatpush1.bf16.msra.mxu0 0
      %1237 = vmatprep.subr.bf16.mxu0 0
      %1238 = vmatpush1.bf16.msra.mxu0 0
      %1239 = vmatprep.subr.bf16.mxu0 0
      %1240 = vmatpush1.bf16.msra.mxu0 0
      %1241 = vmatprep.subr.bf16.mxu0 0
      %1242 = vmatpush1.bf16.msra.mxu0 0
      %1243 = vmatprep.subr.bf16.mxu0 0
      %1244 = vmatpush1.bf16.msra.mxu0 0
      %1245 = vmatprep.subr.bf16.mxu0 0
      %1246 = vmatpush1.bf16.msra.mxu0 0
      %1247 = vmatprep.mubr.bf16.mxu0 0
      %1248 = vmatmul.mubr.bf16.gmra.mrb[0].mxu0 %v1198
      %v1249 = vpop.f32.mrb[0].mxu0
      %v1250 = vadd.f32 0.0, %v1249
      %v1251 = vpop.f32.mrb[0].mxu0
      %v1252 = vpop.f32.mrb[0].mxu0
      %v1253 = vadd.f32 0.0, %v1252
      %v1254 = vpop.f32.mrb[0].mxu0
      %1255 = vmatprep.mubr.bf16.mxu0 0
      %1256 = vmatmul.mubr.bf16.gmra.mrb[0].mxu0 %v1201
      %v1257 = vpop.f32.mrb[0].mxu0
      %v1258 = vadd.f32 0.0, %v1257
      %v1259 = vpop.f32.mrb[0].mxu0
      %v1260 = vpop.f32.mrb[0].mxu0
      %v1261 = vadd.f32 0.0, %v1260
      %v1262 = vpop.f32.mrb[0].mxu0
      %1263 = vmatprep.mubr.bf16.mxu0 0
      %1264 = vmatmul.mubr.bf16.gmra.mrb[0].mxu0 %v1204
      %v1265 = vpop.f32.mrb[0].mxu0
      %v1266 = vadd.f32 0.0, %v1265
      %v1267 = vpop.f32.mrb[0].mxu0
      %v1268 = vpop.f32.mrb[0].mxu0
      %v1269 = vadd.f32 0.0, %v1268
      %v1270 = vpop.f32.mrb[0].mxu0
      %1271 = vmatprep.mubr.bf16.mxu0 0
      %1272 = vmatmul.mubr.bf16.gmra.mrb[0].mxu0 %v1207
      %v1273 = vpop.f32.mrb[0].mxu0
      %v1274 = vadd.f32 0.0, %v1273
      %v1275 = vpop.f32.mrb[0].mxu0
      %v1276 = vpop.f32.mrb[0].mxu0
      %v1277 = vadd.f32 0.0, %v1276
      %v1278 = vpop.f32.mrb[0].mxu0
      %1279 = vmatprep.mubr.bf16.mxu0 0
      %1280 = vmatmul.mubr.bf16.gmra.mrb[0].mxu0 %v1210
      %v1281 = vpop.f32.mrb[0].mxu0
      %v1282 = vadd.f32 0.0, %v1281
      %v1283 = vpop.f32.mrb[0].mxu0
      %v1284 = vpop.f32.mrb[0].mxu0
      %v1285 = vpop.f32.mrb[0].mxu0
      %1286 = vdwg.mxu0
      %v1287 = vadd.f32 %v1150, %v1250
      %v1288 = vadd.f32 %v1151, %v1253
      %v1289 = vadd.f32 %v1152, %v1258
      %v1290 = vadd.f32 %v1153, %v1261
      %v1291 = vadd.f32 %v1154, %v1266
      %v1292 = vadd.f32 %v1155, %v1269
      %v1293 = vadd.f32 %v1156, %v1274
      %v1294 = vadd.f32 %v1157, %v1277
      %v1295 = vadd.f32 %v1158, %v1282
      %v1296 = vpack.c.bf16 %v298, %v297
      %v1297 = vpack.c.bf16 %v300, %v299
      %v1298 = vpack.c.bf16 %v302, %v301
      %v1299 = vpack.c.bf16 %v304, %v303
      %v1300 = vpack.c.bf16 %v306, %v305
      %s1301 = scalar_lea.vmem %s1, 16
      %v1302 = vld [vmem:[%s1301] sm:$0x3]
      %v1304 = vshrl.u32 %v1296, 16
      %v1306 = vshll.u32 %v1296, 16
      %v1308 = vrot.slane %v1306, 1
      %v1309 = vor.u32 %v1304, %v1308
      %v1311 = vshll.u32 %v1297, 16
      %v1313 = vrot.slane %v1311, 1
      %v1314 = vsel %vm538, %v1309, %v1313
      %v1315 = vshrl.u32 %v1297, 16
      %v1317 = vor.u32 %v1315, %v1313
      %v1319 = vshll.u32 %v1298, 16
      %v1321 = vrot.slane %v1319, 1
      %v1322 = vsel %vm538, %v1317, %v1321
      %v1323 = vshrl.u32 %v1298, 16
      %v1325 = vor.u32 %v1323, %v1321
      %v1327 = vshll.u32 %v1299, 16
      %v1329 = vrot.slane %v1327, 1
      %v1330 = vsel %vm538, %v1325, %v1329
      %v1331 = vshrl.u32 %v1299, 16
      %v1333 = vor.u32 %v1331, %v1329
      %v1335 = vshll.u32 %v1300, 16
      %v1337 = vrot.slane %v1335, 1
      %v1338 = vsel %vm538, %v1333, %v1337
      %v1339 = vshrl.u32 %v1300, 16
      %v1341 = vor.u32 %v1339, %v1337
      %v1343 = vsel %vm353, %v1314, 0
      %v1346 = vsel %vm353, %v1322, 0
      %v1349 = vsel %vm353, %v1330, 0
      %v1352 = vsel %vm353, %v1338, 0
      %v1355 = vsel %vm353, %v1341, 0
      %v1358 = vsel %vm369, %v1302, 0
      %1360 = vmatprep.subr.bf16.mxu0 0
      %1361 = vmatpush1.bf16.msra.mxu0 %v1358
      %1362 = vmatprep.subr.bf16.mxu0 0
      %1363 = vmatpush1.bf16.msra.mxu0 0
      %1364 = vmatprep.subr.bf16.mxu0 0
      %1365 = vmatpush1.bf16.msra.mxu0 0
      %1366 = vmatprep.subr.bf16.mxu0 0
      %1367 = vmatpush1.bf16.msra.mxu0 0
      %1368 = vmatprep.subr.bf16.mxu0 0
      %1369 = vmatpush1.bf16.msra.mxu0 0
      %1370 = vmatprep.subr.bf16.mxu0 0
      %1371 = vmatpush1.bf16.msra.mxu0 0
      %1372 = vmatprep.subr.bf16.mxu0 0
      %1373 = vmatpush1.bf16.msra.mxu0 0
      %1374 = vmatprep.subr.bf16.mxu0 0
      %1375 = vmatpush1.bf16.msra.mxu0 0
      %1376 = vmatprep.subr.bf16.mxu0 0
      %1377 = vmatpush1.bf16.msra.mxu0 0
      %1378 = vmatprep.subr.bf16.mxu0 0
      %1379 = vmatpush1.bf16.msra.mxu0 0
      %1380 = vmatprep.subr.bf16.mxu0 0
      %1381 = vmatpush1.bf16.msra.mxu0 0
      %1382 = vmatprep.subr.bf16.mxu0 0
      %1383 = vmatpush1.bf16.msra.mxu0 0
      %1384 = vmatprep.subr.bf16.mxu0 0
      %1385 = vmatpush1.bf16.msra.mxu0 0
      %1386 = vmatprep.subr.bf16.mxu0 0
      %1387 = vmatpush1.bf16.msra.mxu0 0
      %1388 = vmatprep.subr.bf16.mxu0 0
      %1389 = vmatpush1.bf16.msra.mxu0 0
      %1390 = vmatprep.subr.bf16.mxu0 0
      %1391 = vmatpush1.bf16.msra.mxu0 0
      %1392 = vmatprep.mubr.bf16.mxu0 0
      %1393 = vmatmul.mubr.bf16.gmra.mrb[0].mxu0 %v1343
      %v1394 = vpop.f32.mrb[0].mxu0
      %v1395 = vadd.f32 0.0, %v1394
      %v1396 = vpop.f32.mrb[0].mxu0
      %v1397 = vpop.f32.mrb[0].mxu0
      %v1398 = vadd.f32 0.0, %v1397
      %v1399 = vpop.f32.mrb[0].mxu0
      %1400 = vmatprep.mubr.bf16.mxu0 0
      %1401 = vmatmul.mubr.bf16.gmra.mrb[0].mxu0 %v1346
      %v1402 = vpop.f32.mrb[0].mxu0
      %v1403 = vadd.f32 0.0, %v1402
      %v1404 = vpop.f32.mrb[0].mxu0
      %v1405 = vpop.f32.mrb[0].mxu0
      %v1406 = vadd.f32 0.0, %v1405
      %v1407 = vpop.f32.mrb[0].mxu0
      %1408 = vmatprep.mubr.bf16.mxu0 0
      %1409 = vmatmul.mubr.bf16.gmra.mrb[0].mxu0 %v1349
      %v1410 = vpop.f32.mrb[0].mxu0
      %v1411 = vadd.f32 0.0, %v1410
      %v1412 = vpop.f32.mrb[0].mxu0
      %v1413 = vpop.f32.mrb[0].mxu0
      %v1414 = vadd.f32 0.0, %v1413
      %v1415 = vpop.f32.mrb[0].mxu0
      %1416 = vmatprep.mubr.bf16.mxu0 0
      %1417 = vmatmul.mubr.bf16.gmra.mrb[0].mxu0 %v1352
      %v1418 = vpop.f32.mrb[0].mxu0
      %v1419 = vadd.f32 0.0, %v1418
      %v1420 = vpop.f32.mrb[0].mxu0
      %v1421 = vpop.f32.mrb[0].mxu0
      %v1422 = vadd.f32 0.0, %v1421
      %v1423 = vpop.f32.mrb[0].mxu0
      %1424 = vmatprep.mubr.bf16.mxu0 0
      %1425 = vmatmul.mubr.bf16.gmra.mrb[0].mxu0 %v1355
      %v1426 = vpop.f32.mrb[0].mxu0
      %v1427 = vadd.f32 0.0, %v1426
      %v1428 = vpop.f32.mrb[0].mxu0
      %v1429 = vpop.f32.mrb[0].mxu0
      %v1430 = vpop.f32.mrb[0].mxu0
      %1431 = vdwg.mxu0
      %v1432 = vadd.f32 %v1287, %v1395
      %v1433 = vadd.f32 %v1288, %v1398
      %v1434 = vadd.f32 %v1289, %v1403
      %v1435 = vadd.f32 %v1290, %v1406
      %v1436 = vadd.f32 %v1291, %v1411
      %v1437 = vadd.f32 %v1292, %v1414
      %v1438 = vadd.f32 %v1293, %v1419
      %v1439 = vadd.f32 %v1294, %v1422
      %v1440 = vadd.f32 %v1295, %v1427
      %v1441 = vpack.c.bf16 %v309, %v308
      %v1442 = vpack.c.bf16 %v311, %v310
      %v1443 = vpack.c.bf16 %v313, %v312
      %v1444 = vpack.c.bf16 %v315, %v314
      %v1445 = vpack.c.bf16 %v317, %v316
      %s1446 = scalar_lea.vmem %s1, 18
      %v1447 = vld [vmem:[%s1446] sm:$0x3]
      %v1449 = vshrl.u32 %v1441, 16
      %v1451 = vshll.u32 %v1441, 16
      %v1453 = vrot.slane %v1451, 1
      %v1454 = vor.u32 %v1449, %v1453
      %v1456 = vshll.u32 %v1442, 16
      %v1458 = vrot.slane %v1456, 1
      %v1459 = vsel %vm538, %v1454, %v1458
      %v1460 = vshrl.u32 %v1442, 16
      %v1462 = vor.u32 %v1460, %v1458
      %v1464 = vshll.u32 %v1443, 16
      %v1466 = vrot.slane %v1464, 1
      %v1467 = vsel %vm538, %v1462, %v1466
      %v1468 = vshrl.u32 %v1443, 16
      %v1470 = vor.u32 %v1468, %v1466
      %v1472 = vshll.u32 %v1444, 16
      %v1474 = vrot.slane %v1472, 1
      %v1475 = vsel %vm538, %v1470, %v1474
      %v1476 = vshrl.u32 %v1444, 16
      %v1478 = vor.u32 %v1476, %v1474
      %v1480 = vshll.u32 %v1445, 16
      %v1482 = vrot.slane %v1480, 1
      %v1483 = vsel %vm538, %v1478, %v1482
      %v1484 = vshrl.u32 %v1445, 16
      %v1486 = vor.u32 %v1484, %v1482
      %v1488 = vsel %vm353, %v1459, 0
      %v1491 = vsel %vm353, %v1467, 0
      %v1494 = vsel %vm353, %v1475, 0
      %v1497 = vsel %vm353, %v1483, 0
      %v1500 = vsel %vm353, %v1486, 0
      %v1503 = vsel %vm369, %v1447, 0
      %1505 = vmatprep.subr.bf16.mxu0 0
      %1506 = vmatpush1.bf16.msra.mxu0 %v1503
      %1507 = vmatprep.subr.bf16.mxu0 0
      %1508 = vmatpush1.bf16.msra.mxu0 0
      %1509 = vmatprep.subr.bf16.mxu0 0
      %1510 = vmatpush1.bf16.msra.mxu0 0
      %1511 = vmatprep.subr.bf16.mxu0 0
      %1512 = vmatpush1.bf16.msra.mxu0 0
      %1513 = vmatprep.subr.bf16.mxu0 0
      %1514 = vmatpush1.bf16.msra.mxu0 0
      %1515 = vmatprep.subr.bf16.mxu0 0
      %1516 = vmatpush1.bf16.msra.mxu0 0
      %1517 = vmatprep.subr.bf16.mxu0 0
      %1518 = vmatpush1.bf16.msra.mxu0 0
      %1519 = vmatprep.subr.bf16.mxu0 0
      %1520 = vmatpush1.bf16.msra.mxu0 0
      %1521 = vmatprep.subr.bf16.mxu0 0
      %1522 = vmatpush1.bf16.msra.mxu0 0
      %1523 = vmatprep.subr.bf16.mxu0 0
      %1524 = vmatpush1.bf16.msra.mxu0 0
      %1525 = vmatprep.subr.bf16.mxu0 0
      %1526 = vmatpush1.bf16.msra.mxu0 0
      %1527 = vmatprep.subr.bf16.mxu0 0
      %1528 = vmatpush1.bf16.msra.mxu0 0
      %1529 = vmatprep.subr.bf16.mxu0 0
      %1530 = vmatpush1.bf16.msra.mxu0 0
      %1531 = vmatprep.subr.bf16.mxu0 0
      %1532 = vmatpush1.bf16.msra.mxu0 0
      %1533 = vmatprep.subr.bf16.mxu0 0
      %1534 = vmatpush1.bf16.msra.mxu0 0
      %1535 = vmatprep.subr.bf16.mxu0 0
      %1536 = vmatpush1.bf16.msra.mxu0 0
      %1537 = vmatprep.mubr.bf16.mxu0 0
      %1538 = vmatmul.mubr.bf16.gmra.mrb[0].mxu0 %v1488
      %v1539 = vpop.f32.mrb[0].mxu0
      %v1540 = vadd.f32 0.0, %v1539
      %v1541 = vpop.f32.mrb[0].mxu0
      %v1542 = vpop.f32.mrb[0].mxu0
      %v1543 = vadd.f32 0.0, %v1542
      %v1544 = vpop.f32.mrb[0].mxu0
      %1545 = vmatprep.mubr.bf16.mxu0 0
      %1546 = vmatmul.mubr.bf16.gmra.mrb[0].mxu0 %v1491
      %v1547 = vpop.f32.mrb[0].mxu0
      %v1548 = vadd.f32 0.0, %v1547
      %v1549 = vpop.f32.mrb[0].mxu0
      %v1550 = vpop.f32.mrb[0].mxu0
      %v1551 = vadd.f32 0.0, %v1550
      %v1552 = vpop.f32.mrb[0].mxu0
      %1553 = vmatprep.mubr.bf16.mxu0 0
      %1554 = vmatmul.mubr.bf16.gmra.mrb[0].mxu0 %v1494
      %v1555 = vpop.f32.mrb[0].mxu0
      %v1556 = vadd.f32 0.0, %v1555
      %v1557 = vpop.f32.mrb[0].mxu0
      %v1558 = vpop.f32.mrb[0].mxu0
      %v1559 = vadd.f32 0.0, %v1558
      %v1560 = vpop.f32.mrb[0].mxu0
      %1561 = vmatprep.mubr.bf16.mxu0 0
      %1562 = vmatmul.mubr.bf16.gmra.mrb[0].mxu0 %v1497
      %v1563 = vpop.f32.mrb[0].mxu0
      %v1564 = vadd.f32 0.0, %v1563
      %v1565 = vpop.f32.mrb[0].mxu0
      %v1566 = vpop.f32.mrb[0].mxu0
      %v1567 = vadd.f32 0.0, %v1566
      %v1568 = vpop.f32.mrb[0].mxu0
      %1569 = vmatprep.mubr.bf16.mxu0 0
      %1570 = vmatmul.mubr.bf16.gmra.mrb[0].mxu0 %v1500
      %v1571 = vpop.f32.mrb[0].mxu0
      %v1572 = vadd.f32 0.0, %v1571
      %v1573 = vpop.f32.mrb[0].mxu0
      %v1574 = vpop.f32.mrb[0].mxu0
      %v1575 = vpop.f32.mrb[0].mxu0
      %1576 = vdwg.mxu0
      %v1577 = vadd.f32 %v1432, %v1540
      %v1578 = vadd.f32 %v1433, %v1543
      %v1579 = vadd.f32 %v1434, %v1548
      %v1580 = vadd.f32 %v1435, %v1551
      %v1581 = vadd.f32 %v1436, %v1556
      %v1582 = vadd.f32 %v1437, %v1559
      %v1583 = vadd.f32 %v1438, %v1564
      %v1584 = vadd.f32 %v1439, %v1567
      %v1585 = vadd.f32 %v1440, %v1572
      %s1586 = scalar_lea.vmem %s1, 20
      %v1587 = vld [vmem:[%s1586] sm:$0x3]
      %vm1593 = vcmask 1046528
      %v1594 = vrot.slane %v1296, 1
      %v1595 = vrot.slane %v1297, 1
      %v1596 = vsel %vm1593, %v1594, %v1595
      %v1597 = vrot.slane %v1298, 1
      %v1598 = vsel %vm1593, %v1595, %v1597
      %v1599 = vrot.slane %v1299, 1
      %v1600 = vsel %vm1593, %v1597, %v1599
      %v1601 = vrot.slane %v1300, 1
      %v1602 = vsel %vm1593, %v1599, %v1601
      %v1604 = vsel %vm353, %v1596, 0
      %v1607 = vsel %vm353, %v1598, 0
      %v1610 = vsel %vm353, %v1600, 0
      %v1613 = vsel %vm353, %v1602, 0
      %v1616 = vsel %vm353, %v1601, 0
      %v1619 = vsel %vm369, %v1587, 0
      %1621 = vmatprep.subr.bf16.mxu0 0
      %1622 = vmatpush1.bf16.msra.mxu0 %v1619
      %1623 = vmatprep.subr.bf16.mxu0 0
      %1624 = vmatpush1.bf16.msra.mxu0 0
      %1625 = vmatprep.subr.bf16.mxu0 0
      %1626 = vmatpush1.bf16.msra.mxu0 0
      %1627 = vmatprep.subr.bf16.mxu0 0
      %1628 = vmatpush1.bf16.msra.mxu0 0
      %1629 = vmatprep.subr.bf16.mxu0 0
      %1630 = vmatpush1.bf16.msra.mxu0 0
      %1631 = vmatprep.subr.bf16.mxu0 0
      %1632 = vmatpush1.bf16.msra.mxu0 0
      %1633 = vmatprep.subr.bf16.mxu0 0
      %1634 = vmatpush1.bf16.msra.mxu0 0
      %1635 = vmatprep.subr.bf16.mxu0 0
      %1636 = vmatpush1.bf16.msra.mxu0 0
      %1637 = vmatprep.subr.bf16.mxu0 0
      %1638 = vmatpush1.bf16.msra.mxu0 0
      %1639 = vmatprep.subr.bf16.mxu0 0
      %1640 = vmatpush1.bf16.msra.mxu0 0
      %1641 = vmatprep.subr.bf16.mxu0 0
      %1642 = vmatpush1.bf16.msra.mxu0 0
      %1643 = vmatprep.subr.bf16.mxu0 0
      %1644 = vmatpush1.bf16.msra.mxu0 0
      %1645 = vmatprep.subr.bf16.mxu0 0
      %1646 = vmatpush1.bf16.msra.mxu0 0
      %1647 = vmatprep.subr.bf16.mxu0 0
      %1648 = vmatpush1.bf16.msra.mxu0 0
      %1649 = vmatprep.subr.bf16.mxu0 0
      %1650 = vmatpush1.bf16.msra.mxu0 0
      %1651 = vmatprep.subr.bf16.mxu0 0
      %1652 = vmatpush1.bf16.msra.mxu0 0
      %1653 = vmatprep.mubr.bf16.mxu0 0
      %1654 = vmatmul.mubr.bf16.gmra.mrb[0].mxu0 %v1604
      %v1655 = vpop.f32.mrb[0].mxu0
      %v1656 = vadd.f32 0.0, %v1655
      %v1657 = vpop.f32.mrb[0].mxu0
      %v1658 = vpop.f32.mrb[0].mxu0
      %v1659 = vadd.f32 0.0, %v1658
      %v1660 = vpop.f32.mrb[0].mxu0
      %1661 = vmatprep.mubr.bf16.mxu0 0
      %1662 = vmatmul.mubr.bf16.gmra.mrb[0].mxu0 %v1607
      %v1663 = vpop.f32.mrb[0].mxu0
      %v1664 = vadd.f32 0.0, %v1663
      %v1665 = vpop.f32.mrb[0].mxu0
      %v1666 = vpop.f32.mrb[0].mxu0
      %v1667 = vadd.f32 0.0, %v1666
      %v1668 = vpop.f32.mrb[0].mxu0
      %1669 = vmatprep.mubr.bf16.mxu0 0
      %1670 = vmatmul.mubr.bf16.gmra.mrb[0].mxu0 %v1610
      %v1671 = vpop.f32.mrb[0].mxu0
      %v1672 = vadd.f32 0.0, %v1671
      %v1673 = vpop.f32.mrb[0].mxu0
      %v1674 = vpop.f32.mrb[0].mxu0
      %v1675 = vadd.f32 0.0, %v1674
      %v1676 = vpop.f32.mrb[0].mxu0
      %1677 = vmatprep.mubr.bf16.mxu0 0
      %1678 = vmatmul.mubr.bf16.gmra.mrb[0].mxu0 %v1613
      %v1679 = vpop.f32.mrb[0].mxu0
      %v1680 = vadd.f32 0.0, %v1679
      %v1681 = vpop.f32.mrb[0].mxu0
      %v1682 = vpop.f32.mrb[0].mxu0
      %v1683 = vadd.f32 0.0, %v1682
      %v1684 = vpop.f32.mrb[0].mxu0
      %1685 = vmatprep.mubr.bf16.mxu0 0
      %1686 = vmatmul.mubr.bf16.gmra.mrb[0].mxu0 %v1616
      %v1687 = vpop.f32.mrb[0].mxu0
      %v1688 = vadd.f32 0.0, %v1687
      %v1689 = vpop.f32.mrb[0].mxu0
      %v1690 = vpop.f32.mrb[0].mxu0
      %v1691 = vpop.f32.mrb[0].mxu0
      %1692 = vdwg.mxu0
      %v1693 = vadd.f32 %v1577, %v1656
      %v1694 = vadd.f32 %v1578, %v1659
      %v1695 = vadd.f32 %v1579, %v1664
      %v1696 = vadd.f32 %v1580, %v1667
      %v1697 = vadd.f32 %v1581, %v1672
      %v1698 = vadd.f32 %v1582, %v1675
      %v1699 = vadd.f32 %v1583, %v1680
      %v1700 = vadd.f32 %v1584, %v1683
      %v1701 = vadd.f32 %v1585, %v1688
      %s1702 = scalar_lea.vmem %s1, 22
      %v1703 = vld [vmem:[%s1702] sm:$0x3]
      %v1709 = vrot.slane %v1441, 1
      %v1710 = vrot.slane %v1442, 1
      %v1711 = vsel %vm1593, %v1709, %v1710
      %v1712 = vrot.slane %v1443, 1
      %v1713 = vsel %vm1593, %v1710, %v1712
      %v1714 = vrot.slane %v1444, 1
      %v1715 = vsel %vm1593, %v1712, %v1714
      %v1716 = vrot.slane %v1445, 1
      %v1717 = vsel %vm1593, %v1714, %v1716
      %v1719 = vsel %vm353, %v1711, 0
      %v1722 = vsel %vm353, %v1713, 0
      %v1725 = vsel %vm353, %v1715, 0
      %v1728 = vsel %vm353, %v1717, 0
      %v1731 = vsel %vm353, %v1716, 0
      %v1734 = vsel %vm369, %v1703, 0
      %1736 = vmatprep.subr.bf16.mxu0 0
      %1737 = vmatpush1.bf16.msra.mxu0 %v1734
      %1738 = vmatprep.subr.bf16.mxu0 0
      %1739 = vmatpush1.bf16.msra.mxu0 0
      %1740 = vmatprep.subr.bf16.mxu0 0
      %1741 = vmatpush1.bf16.msra.mxu0 0
      %1742 = vmatprep.subr.bf16.mxu0 0
      %1743 = vmatpush1.bf16.msra.mxu0 0
      %1744 = vmatprep.subr.bf16.mxu0 0
      %1745 = vmatpush1.bf16.msra.mxu0 0
      %1746 = vmatprep.subr.bf16.mxu0 0
      %1747 = vmatpush1.bf16.msra.mxu0 0
      %1748 = vmatprep.subr.bf16.mxu0 0
      %1749 = vmatpush1.bf16.msra.mxu0 0
      %1750 = vmatprep.subr.bf16.mxu0 0
      %1751 = vmatpush1.bf16.msra.mxu0 0
      %1752 = vmatprep.subr.bf16.mxu0 0
      %1753 = vmatpush1.bf16.msra.mxu0 0
      %1754 = vmatprep.subr.bf16.mxu0 0
      %1755 = vmatpush1.bf16.msra.mxu0 0
      %1756 = vmatprep.subr.bf16.mxu0 0
      %1757 = vmatpush1.bf16.msra.mxu0 0
      %1758 = vmatprep.subr.bf16.mxu0 0
      %1759 = vmatpush1.bf16.msra.mxu0 0
      %1760 = vmatprep.subr.bf16.mxu0 0
      %1761 = vmatpush1.bf16.msra.mxu0 0
      %1762 = vmatprep.subr.bf16.mxu0 0
      %1763 = vmatpush1.bf16.msra.mxu0 0
      %1764 = vmatprep.subr.bf16.mxu0 0
      %1765 = vmatpush1.bf16.msra.mxu0 0
      %1766 = vmatprep.subr.bf16.mxu0 0
      %1767 = vmatpush1.bf16.msra.mxu0 0
      %1768 = vmatprep.mubr.bf16.mxu0 0
      %1769 = vmatmul.mubr.bf16.gmra.mrb[0].mxu0 %v1719
      %v1770 = vpop.f32.mrb[0].mxu0
      %v1771 = vadd.f32 0.0, %v1770
      %v1772 = vpop.f32.mrb[0].mxu0
      %v1773 = vpop.f32.mrb[0].mxu0
      %v1774 = vadd.f32 0.0, %v1773
      %v1775 = vpop.f32.mrb[0].mxu0
      %1776 = vmatprep.mubr.bf16.mxu0 0
      %1777 = vmatmul.mubr.bf16.gmra.mrb[0].mxu0 %v1722
      %v1778 = vpop.f32.mrb[0].mxu0
      %v1779 = vadd.f32 0.0, %v1778
      %v1780 = vpop.f32.mrb[0].mxu0
      %v1781 = vpop.f32.mrb[0].mxu0
      %v1782 = vadd.f32 0.0, %v1781
      %v1783 = vpop.f32.mrb[0].mxu0
      %1784 = vmatprep.mubr.bf16.mxu0 0
      %1785 = vmatmul.mubr.bf16.gmra.mrb[0].mxu0 %v1725
      %v1786 = vpop.f32.mrb[0].mxu0
      %v1787 = vadd.f32 0.0, %v1786
      %v1788 = vpop.f32.mrb[0].mxu0
      %v1789 = vpop.f32.mrb[0].mxu0
      %v1790 = vadd.f32 0.0, %v1789
      %v1791 = vpop.f32.mrb[0].mxu0
      %1792 = vmatprep.mubr.bf16.mxu0 0
      %1793 = vmatmul.mubr.bf16.gmra.mrb[0].mxu0 %v1728
      %v1794 = vpop.f32.mrb[0].mxu0
      %v1795 = vadd.f32 0.0, %v1794
      %v1796 = vpop.f32.mrb[0].mxu0
      %v1797 = vpop.f32.mrb[0].mxu0
      %v1798 = vadd.f32 0.0, %v1797
      %v1799 = vpop.f32.mrb[0].mxu0
      %1800 = vmatprep.mubr.bf16.mxu0 0
      %1801 = vmatmul.mubr.bf16.gmra.mrb[0].mxu0 %v1731
      %v1802 = vpop.f32.mrb[0].mxu0
      %v1803 = vadd.f32 0.0, %v1802
      %v1804 = vpop.f32.mrb[0].mxu0
      %v1805 = vpop.f32.mrb[0].mxu0
      %v1806 = vpop.f32.mrb[0].mxu0
      %1807 = vdwg.mxu0
      %v1808 = vadd.f32 %v1693, %v1771
      %v1809 = vadd.f32 %v1694, %v1774
      %v1810 = vadd.f32 %v1695, %v1779
      %v1811 = vadd.f32 %v1696, %v1782
      %v1812 = vadd.f32 %v1697, %v1787
      %v1813 = vadd.f32 %v1698, %v1790
      %v1814 = vadd.f32 %v1699, %v1795
      %v1815 = vadd.f32 %v1700, %v1798
      %v1816 = vadd.f32 %v1701, %v1803
      %v1817 = vpack.c.bf16 %v320, %v319
      %v1818 = vpack.c.bf16 %v322, %v321
      %v1819 = vpack.c.bf16 %v324, %v323
      %v1820 = vpack.c.bf16 %v326, %v325
      %v1821 = vpack.c.bf16 %v328, %v327
      %s1822 = scalar_lea.vmem %s1, 24
      %v1823 = vld [vmem:[%s1822] sm:$0x3]
      %v1825 = vshrl.u32 %v1817, 16
      %v1827 = vshll.u32 %v1817, 16
      %v1829 = vrot.slane %v1827, 1
      %v1830 = vor.u32 %v1825, %v1829
      %v1832 = vshll.u32 %v1818, 16
      %v1834 = vrot.slane %v1832, 1
      %v1835 = vsel %vm538, %v1830, %v1834
      %v1836 = vshrl.u32 %v1818, 16
      %v1838 = vor.u32 %v1836, %v1834
      %v1840 = vshll.u32 %v1819, 16
      %v1842 = vrot.slane %v1840, 1
      %v1843 = vsel %vm538, %v1838, %v1842
      %v1844 = vshrl.u32 %v1819, 16
      %v1846 = vor.u32 %v1844, %v1842
      %v1848 = vshll.u32 %v1820, 16
      %v1850 = vrot.slane %v1848, 1
      %v1851 = vsel %vm538, %v1846, %v1850
      %v1852 = vshrl.u32 %v1820, 16
      %v1854 = vor.u32 %v1852, %v1850
      %v1856 = vshll.u32 %v1821, 16
      %v1858 = vrot.slane %v1856, 1
      %v1859 = vsel %vm538, %v1854, %v1858
      %v1860 = vshrl.u32 %v1821, 16
      %v1862 = vor.u32 %v1860, %v1858
      %v1864 = vsel %vm353, %v1835, 0
      %v1867 = vsel %vm353, %v1843, 0
      %v1870 = vsel %vm353, %v1851, 0
      %v1873 = vsel %vm353, %v1859, 0
      %v1876 = vsel %vm353, %v1862, 0
      %v1879 = vsel %vm369, %v1823, 0
      %1881 = vmatprep.subr.bf16.mxu0 0
      %1882 = vmatpush1.bf16.msra.mxu0 %v1879
      %1883 = vmatprep.subr.bf16.mxu0 0
      %1884 = vmatpush1.bf16.msra.mxu0 0
      %1885 = vmatprep.subr.bf16.mxu0 0
      %1886 = vmatpush1.bf16.msra.mxu0 0
      %1887 = vmatprep.subr.bf16.mxu0 0
      %1888 = vmatpush1.bf16.msra.mxu0 0
      %1889 = vmatprep.subr.bf16.mxu0 0
      %1890 = vmatpush1.bf16.msra.mxu0 0
      %1891 = vmatprep.subr.bf16.mxu0 0
      %1892 = vmatpush1.bf16.msra.mxu0 0
      %1893 = vmatprep.subr.bf16.mxu0 0
      %1894 = vmatpush1.bf16.msra.mxu0 0
      %1895 = vmatprep.subr.bf16.mxu0 0
      %1896 = vmatpush1.bf16.msra.mxu0 0
      %1897 = vmatprep.subr.bf16.mxu0 0
      %1898 = vmatpush1.bf16.msra.mxu0 0
      %1899 = vmatprep.subr.bf16.mxu0 0
      %1900 = vmatpush1.bf16.msra.mxu0 0
      %1901 = vmatprep.subr.bf16.mxu0 0
      %1902 = vmatpush1.bf16.msra.mxu0 0
      %1903 = vmatprep.subr.bf16.mxu0 0
      %1904 = vmatpush1.bf16.msra.mxu0 0
      %1905 = vmatprep.subr.bf16.mxu0 0
      %1906 = vmatpush1.bf16.msra.mxu0 0
      %1907 = vmatprep.subr.bf16.mxu0 0
      %1908 = vmatpush1.bf16.msra.mxu0 0
      %1909 = vmatprep.subr.bf16.mxu0 0
      %1910 = vmatpush1.bf16.msra.mxu0 0
      %1911 = vmatprep.subr.bf16.mxu0 0
      %1912 = vmatpush1.bf16.msra.mxu0 0
      %1913 = vmatprep.mubr.bf16.mxu0 0
      %1914 = vmatmul.mubr.bf16.gmra.mrb[0].mxu0 %v1864
      %v1915 = vpop.f32.mrb[0].mxu0
      %v1916 = vadd.f32 0.0, %v1915
      %v1917 = vpop.f32.mrb[0].mxu0
      %v1918 = vpop.f32.mrb[0].mxu0
      %v1919 = vadd.f32 0.0, %v1918
      %v1920 = vpop.f32.mrb[0].mxu0
      %1921 = vmatprep.mubr.bf16.mxu0 0
      %1922 = vmatmul.mubr.bf16.gmra.mrb[0].mxu0 %v1867
      %v1923 = vpop.f32.mrb[0].mxu0
      %v1924 = vadd.f32 0.0, %v1923
      %v1925 = vpop.f32.mrb[0].mxu0
      %v1926 = vpop.f32.mrb[0].mxu0
      %v1927 = vadd.f32 0.0, %v1926
      %v1928 = vpop.f32.mrb[0].mxu0
      %1929 = vmatprep.mubr.bf16.mxu0 0
      %1930 = vmatmul.mubr.bf16.gmra.mrb[0].mxu0 %v1870
      %v1931 = vpop.f32.mrb[0].mxu0
      %v1932 = vadd.f32 0.0, %v1931
      %v1933 = vpop.f32.mrb[0].mxu0
      %v1934 = vpop.f32.mrb[0].mxu0
      %v1935 = vadd.f32 0.0, %v1934
      %v1936 = vpop.f32.mrb[0].mxu0
      %1937 = vmatprep.mubr.bf16.mxu0 0
      %1938 = vmatmul.mubr.bf16.gmra.mrb[0].mxu0 %v1873
      %v1939 = vpop.f32.mrb[0].mxu0
      %v1940 = vadd.f32 0.0, %v1939
      %v1941 = vpop.f32.mrb[0].mxu0
      %v1942 = vpop.f32.mrb[0].mxu0
      %v1943 = vadd.f32 0.0, %v1942
      %v1944 = vpop.f32.mrb[0].mxu0
      %1945 = vmatprep.mubr.bf16.mxu0 0
      %1946 = vmatmul.mubr.bf16.gmra.mrb[0].mxu0 %v1876
      %v1947 = vpop.f32.mrb[0].mxu0
      %v1948 = vadd.f32 0.0, %v1947
      %v1949 = vpop.f32.mrb[0].mxu0
      %v1950 = vpop.f32.mrb[0].mxu0
      %v1951 = vpop.f32.mrb[0].mxu0
      %1952 = vdwg.mxu0
      %v1953 = vadd.f32 %v1808, %v1916
      %v1954 = vadd.f32 %v1809, %v1919
      %v1955 = vadd.f32 %v1810, %v1924
      %v1956 = vadd.f32 %v1811, %v1927
      %v1957 = vadd.f32 %v1812, %v1932
      %v1958 = vadd.f32 %v1813, %v1935
      %v1959 = vadd.f32 %v1814, %v1940
      %v1960 = vadd.f32 %v1815, %v1943
      %v1961 = vadd.f32 %v1816, %v1948
      %v1962 = vpack.c.bf16 %v331, %v330
      %v1963 = vpack.c.bf16 %v333, %v332
      %v1964 = vpack.c.bf16 %v335, %v334
      %v1965 = vpack.c.bf16 %v337, %v336
      %v1966 = vpack.c.bf16 %v339, %v338
      %s1967 = scalar_lea.vmem %s1, 26
      %v1968 = vld [vmem:[%s1967] sm:$0x3]
      %v1970 = vshrl.u32 %v1962, 16
      %v1972 = vshll.u32 %v1962, 16
      %v1974 = vrot.slane %v1972, 1
      %v1975 = vor.u32 %v1970, %v1974
      %v1977 = vshll.u32 %v1963, 16
      %v1979 = vrot.slane %v1977, 1
      %v1980 = vsel %vm538, %v1975, %v1979
      %v1981 = vshrl.u32 %v1963, 16
      %v1983 = vor.u32 %v1981, %v1979
      %v1985 = vshll.u32 %v1964, 16
      %v1987 = vrot.slane %v1985, 1
      %v1988 = vsel %vm538, %v1983, %v1987
      %v1989 = vshrl.u32 %v1964, 16
      %v1991 = vor.u32 %v1989, %v1987
      %v1993 = vshll.u32 %v1965, 16
      %v1995 = vrot.slane %v1993, 1
      %v1996 = vsel %vm538, %v1991, %v1995
      %v1997 = vshrl.u32 %v1965, 16
      %v1999 = vor.u32 %v1997, %v1995
      %v2001 = vshll.u32 %v1966, 16
      %v2003 = vrot.slane %v2001, 1
      %v2004 = vsel %vm538, %v1999, %v2003
      %v2005 = vshrl.u32 %v1966, 16
      %v2007 = vor.u32 %v2005, %v2003
      %v2009 = vsel %vm353, %v1980, 0
      %v2012 = vsel %vm353, %v1988, 0
      %v2015 = vsel %vm353, %v1996, 0
      %v2018 = vsel %vm353, %v2004, 0
      %v2021 = vsel %vm353, %v2007, 0
      %v2024 = vsel %vm369, %v1968, 0
      %2026 = vmatprep.subr.bf16.mxu0 0
      %2027 = vmatpush1.bf16.msra.mxu0 %v2024
      %2028 = vmatprep.subr.bf16.mxu0 0
      %2029 = vmatpush1.bf16.msra.mxu0 0
      %2030 = vmatprep.subr.bf16.mxu0 0
      %2031 = vmatpush1.bf16.msra.mxu0 0
      %2032 = vmatprep.subr.bf16.mxu0 0
      %2033 = vmatpush1.bf16.msra.mxu0 0
      %2034 = vmatprep.subr.bf16.mxu0 0
      %2035 = vmatpush1.bf16.msra.mxu0 0
      %2036 = vmatprep.subr.bf16.mxu0 0
      %2037 = vmatpush1.bf16.msra.mxu0 0
      %2038 = vmatprep.subr.bf16.mxu0 0
      %2039 = vmatpush1.bf16.msra.mxu0 0
      %2040 = vmatprep.subr.bf16.mxu0 0
      %2041 = vmatpush1.bf16.msra.mxu0 0
      %2042 = vmatprep.subr.bf16.mxu0 0
      %2043 = vmatpush1.bf16.msra.mxu0 0
      %2044 = vmatprep.subr.bf16.mxu0 0
      %2045 = vmatpush1.bf16.msra.mxu0 0
      %2046 = vmatprep.subr.bf16.mxu0 0
      %2047 = vmatpush1.bf16.msra.mxu0 0
      %2048 = vmatprep.subr.bf16.mxu0 0
      %2049 = vmatpush1.bf16.msra.mxu0 0
      %2050 = vmatprep.subr.bf16.mxu0 0
      %2051 = vmatpush1.bf16.msra.mxu0 0
      %2052 = vmatprep.subr.bf16.mxu0 0
      %2053 = vmatpush1.bf16.msra.mxu0 0
      %2054 = vmatprep.subr.bf16.mxu0 0
      %2055 = vmatpush1.bf16.msra.mxu0 0
      %2056 = vmatprep.subr.bf16.mxu0 0
      %2057 = vmatpush1.bf16.msra.mxu0 0
      %2058 = vmatprep.mubr.bf16.mxu0 0
      %2059 = vmatmul.mubr.bf16.gmra.mrb[0].mxu0 %v2009
      %v2060 = vpop.f32.mrb[0].mxu0
      %v2061 = vadd.f32 0.0, %v2060
      %v2062 = vpop.f32.mrb[0].mxu0
      %v2063 = vpop.f32.mrb[0].mxu0
      %v2064 = vadd.f32 0.0, %v2063
      %v2065 = vpop.f32.mrb[0].mxu0
      %2066 = vmatprep.mubr.bf16.mxu0 0
      %2067 = vmatmul.mubr.bf16.gmra.mrb[0].mxu0 %v2012
      %v2068 = vpop.f32.mrb[0].mxu0
      %v2069 = vadd.f32 0.0, %v2068
      %v2070 = vpop.f32.mrb[0].mxu0
      %v2071 = vpop.f32.mrb[0].mxu0
      %v2072 = vadd.f32 0.0, %v2071
      %v2073 = vpop.f32.mrb[0].mxu0
      %2074 = vmatprep.mubr.bf16.mxu0 0
      %2075 = vmatmul.mubr.bf16.gmra.mrb[0].mxu0 %v2015
      %v2076 = vpop.f32.mrb[0].mxu0
      %v2077 = vadd.f32 0.0, %v2076
      %v2078 = vpop.f32.mrb[0].mxu0
      %v2079 = vpop.f32.mrb[0].mxu0
      %v2080 = vadd.f32 0.0, %v2079
      %v2081 = vpop.f32.mrb[0].mxu0
      %2082 = vmatprep.mubr.bf16.mxu0 0
      %2083 = vmatmul.mubr.bf16.gmra.mrb[0].mxu0 %v2018
      %v2084 = vpop.f32.mrb[0].mxu0
      %v2085 = vadd.f32 0.0, %v2084
      %v2086 = vpop.f32.mrb[0].mxu0
      %v2087 = vpop.f32.mrb[0].mxu0
      %v2088 = vadd.f32 0.0, %v2087
      %v2089 = vpop.f32.mrb[0].mxu0
      %2090 = vmatprep.mubr.bf16.mxu0 0
      %2091 = vmatmul.mubr.bf16.gmra.mrb[0].mxu0 %v2021
      %v2092 = vpop.f32.mrb[0].mxu0
      %v2093 = vadd.f32 0.0, %v2092
      %v2094 = vpop.f32.mrb[0].mxu0
      %v2095 = vpop.f32.mrb[0].mxu0
      %v2096 = vpop.f32.mrb[0].mxu0
      %2097 = vdwg.mxu0
      %v2098 = vadd.f32 %v1953, %v2061
      %v2099 = vadd.f32 %v1954, %v2064
      %v2100 = vadd.f32 %v1955, %v2069
      %v2101 = vadd.f32 %v1956, %v2072
      %v2102 = vadd.f32 %v1957, %v2077
      %v2103 = vadd.f32 %v1958, %v2080
      %v2104 = vadd.f32 %v1959, %v2085
      %v2105 = vadd.f32 %v1960, %v2088
      %v2106 = vadd.f32 %v1961, %v2093
      %s2107 = scalar_lea.vmem %s1, 28
      %v2108 = vld [vmem:[%s2107] sm:$0x3]
      %v2114 = vrot.slane %v1817, 1
      %v2115 = vrot.slane %v1818, 1
      %v2116 = vsel %vm1593, %v2114, %v2115
      %v2117 = vrot.slane %v1819, 1
      %v2118 = vsel %vm1593, %v2115, %v2117
      %v2119 = vrot.slane %v1820, 1
      %v2120 = vsel %vm1593, %v2117, %v2119
      %v2121 = vrot.slane %v1821, 1
      %v2122 = vsel %vm1593, %v2119, %v2121
      %v2124 = vsel %vm353, %v2116, 0
      %v2127 = vsel %vm353, %v2118, 0
      %v2130 = vsel %vm353, %v2120, 0
      %v2133 = vsel %vm353, %v2122, 0
      %v2136 = vsel %vm353, %v2121, 0
      %v2139 = vsel %vm369, %v2108, 0
      %2141 = vmatprep.subr.bf16.mxu0 0
      %2142 = vmatpush1.bf16.msra.mxu0 %v2139
      %2143 = vmatprep.subr.bf16.mxu0 0
      %2144 = vmatpush1.bf16.msra.mxu0 0
      %2145 = vmatprep.subr.bf16.mxu0 0
      %2146 = vmatpush1.bf16.msra.mxu0 0
      %2147 = vmatprep.subr.bf16.mxu0 0
      %2148 = vmatpush1.bf16.msra.mxu0 0
      %2149 = vmatprep.subr.bf16.mxu0 0
      %2150 = vmatpush1.bf16.msra.mxu0 0
      %2151 = vmatprep.subr.bf16.mxu0 0
      %2152 = vmatpush1.bf16.msra.mxu0 0
      %2153 = vmatprep.subr.bf16.mxu0 0
      %2154 = vmatpush1.bf16.msra.mxu0 0
      %2155 = vmatprep.subr.bf16.mxu0 0
      %2156 = vmatpush1.bf16.msra.mxu0 0
      %2157 = vmatprep.subr.bf16.mxu0 0
      %2158 = vmatpush1.bf16.msra.mxu0 0
      %2159 = vmatprep.subr.bf16.mxu0 0
      %2160 = vmatpush1.bf16.msra.mxu0 0
      %2161 = vmatprep.subr.bf16.mxu0 0
      %2162 = vmatpush1.bf16.msra.mxu0 0
      %2163 = vmatprep.subr.bf16.mxu0 0
      %2164 = vmatpush1.bf16.msra.mxu0 0
      %2165 = vmatprep.subr.bf16.mxu0 0
      %2166 = vmatpush1.bf16.msra.mxu0 0
      %2167 = vmatprep.subr.bf16.mxu0 0
      %2168 = vmatpush1.bf16.msra.mxu0 0
      %2169 = vmatprep.subr.bf16.mxu0 0
      %2170 = vmatpush1.bf16.msra.mxu0 0
      %2171 = vmatprep.subr.bf16.mxu0 0
      %2172 = vmatpush1.bf16.msra.mxu0 0
      %2173 = vmatprep.mubr.bf16.mxu0 0
      %2174 = vmatmul.mubr.bf16.gmra.mrb[0].mxu0 %v2124
      %v2175 = vpop.f32.mrb[0].mxu0
      %v2176 = vadd.f32 0.0, %v2175
      %v2177 = vpop.f32.mrb[0].mxu0
      %v2178 = vpop.f32.mrb[0].mxu0
      %v2179 = vadd.f32 0.0, %v2178
      %v2180 = vpop.f32.mrb[0].mxu0
      %2181 = vmatprep.mubr.bf16.mxu0 0
      %2182 = vmatmul.mubr.bf16.gmra.mrb[0].mxu0 %v2127
      %v2183 = vpop.f32.mrb[0].mxu0
      %v2184 = vadd.f32 0.0, %v2183
      %v2185 = vpop.f32.mrb[0].mxu0
      %v2186 = vpop.f32.mrb[0].mxu0
      %v2187 = vadd.f32 0.0, %v2186
      %v2188 = vpop.f32.mrb[0].mxu0
      %2189 = vmatprep.mubr.bf16.mxu0 0
      %2190 = vmatmul.mubr.bf16.gmra.mrb[0].mxu0 %v2130
      %v2191 = vpop.f32.mrb[0].mxu0
      %v2192 = vadd.f32 0.0, %v2191
      %v2193 = vpop.f32.mrb[0].mxu0
      %v2194 = vpop.f32.mrb[0].mxu0
      %v2195 = vadd.f32 0.0, %v2194
      %v2196 = vpop.f32.mrb[0].mxu0
      %2197 = vmatprep.mubr.bf16.mxu0 0
      %2198 = vmatmul.mubr.bf16.gmra.mrb[0].mxu0 %v2133
      %v2199 = vpop.f32.mrb[0].mxu0
      %v2200 = vadd.f32 0.0, %v2199
      %v2201 = vpop.f32.mrb[0].mxu0
      %v2202 = vpop.f32.mrb[0].mxu0
      %v2203 = vadd.f32 0.0, %v2202
      %v2204 = vpop.f32.mrb[0].mxu0
      %2205 = vmatprep.mubr.bf16.mxu0 0
      %2206 = vmatmul.mubr.bf16.gmra.mrb[0].mxu0 %v2136
      %v2207 = vpop.f32.mrb[0].mxu0
      %v2208 = vadd.f32 0.0, %v2207
      %v2209 = vpop.f32.mrb[0].mxu0
      %v2210 = vpop.f32.mrb[0].mxu0
      %v2211 = vpop.f32.mrb[0].mxu0
      %2212 = vdwg.mxu0
      %v2213 = vadd.f32 %v2098, %v2176
      %v2214 = vadd.f32 %v2099, %v2179
      %v2215 = vadd.f32 %v2100, %v2184
      %v2216 = vadd.f32 %v2101, %v2187
      %v2217 = vadd.f32 %v2102, %v2192
      %v2218 = vadd.f32 %v2103, %v2195
      %v2219 = vadd.f32 %v2104, %v2200
      %v2220 = vadd.f32 %v2105, %v2203
      %v2221 = vadd.f32 %v2106, %v2208
      %s2222 = scalar_lea.vmem %s1, 30
      %v2223 = vld [vmem:[%s2222] sm:$0x3]
      %v2229 = vrot.slane %v1962, 1
      %v2230 = vrot.slane %v1963, 1
      %v2231 = vsel %vm1593, %v2229, %v2230
      %v2232 = vrot.slane %v1964, 1
      %v2233 = vsel %vm1593, %v2230, %v2232
      %v2234 = vrot.slane %v1965, 1
      %v2235 = vsel %vm1593, %v2232, %v2234
      %v2236 = vrot.slane %v1966, 1
      %v2237 = vsel %vm1593, %v2234, %v2236
      %v2239 = vsel %vm353, %v2231, 0
      %v2242 = vsel %vm353, %v2233, 0
      %v2245 = vsel %vm353, %v2235, 0
      %v2248 = vsel %vm353, %v2237, 0
      %v2251 = vsel %vm353, %v2236, 0
      %v2254 = vsel %vm369, %v2223, 0
      %2256 = vmatprep.subr.bf16.mxu0 0
      %2257 = vmatpush1.bf16.msra.mxu0 %v2254
      %2258 = vmatprep.subr.bf16.mxu0 0
      %2259 = vmatpush1.bf16.msra.mxu0 0
      %2260 = vmatprep.subr.bf16.mxu0 0
      %2261 = vmatpush1.bf16.msra.mxu0 0
      %2262 = vmatprep.subr.bf16.mxu0 0
      %2263 = vmatpush1.bf16.msra.mxu0 0
      %2264 = vmatprep.subr.bf16.mxu0 0
      %2265 = vmatpush1.bf16.msra.mxu0 0
      %2266 = vmatprep.subr.bf16.mxu0 0
      %2267 = vmatpush1.bf16.msra.mxu0 0
      %2268 = vmatprep.subr.bf16.mxu0 0
      %2269 = vmatpush1.bf16.msra.mxu0 0
      %2270 = vmatprep.subr.bf16.mxu0 0
      %2271 = vmatpush1.bf16.msra.mxu0 0
      %2272 = vmatprep.subr.bf16.mxu0 0
      %2273 = vmatpush1.bf16.msra.mxu0 0
      %2274 = vmatprep.subr.bf16.mxu0 0
      %2275 = vmatpush1.bf16.msra.mxu0 0
      %2276 = vmatprep.subr.bf16.mxu0 0
      %2277 = vmatpush1.bf16.msra.mxu0 0
      %2278 = vmatprep.subr.bf16.mxu0 0
      %2279 = vmatpush1.bf16.msra.mxu0 0
      %2280 = vmatprep.subr.bf16.mxu0 0
      %2281 = vmatpush1.bf16.msra.mxu0 0
      %2282 = vmatprep.subr.bf16.mxu0 0
      %2283 = vmatpush1.bf16.msra.mxu0 0
      %2284 = vmatprep.subr.bf16.mxu0 0
      %2285 = vmatpush1.bf16.msra.mxu0 0
      %2286 = vmatprep.subr.bf16.mxu0 0
      %2287 = vmatpush1.bf16.msra.mxu0 0
      %2288 = vmatprep.mubr.bf16.mxu0 0
      %2289 = vmatmul.mubr.bf16.gmra.mrb[0].mxu0 %v2239
      %v2290 = vpop.f32.mrb[0].mxu0
      %v2291 = vadd.f32 0.0, %v2290
      %v2292 = vpop.f32.mrb[0].mxu0
      %v2293 = vpop.f32.mrb[0].mxu0
      %v2294 = vadd.f32 0.0, %v2293
      %v2295 = vpop.f32.mrb[0].mxu0
      %2296 = vmatprep.mubr.bf16.mxu0 0
      %2297 = vmatmul.mubr.bf16.gmra.mrb[0].mxu0 %v2242
      %v2298 = vpop.f32.mrb[0].mxu0
      %v2299 = vadd.f32 0.0, %v2298
      %v2300 = vpop.f32.mrb[0].mxu0
      %v2301 = vpop.f32.mrb[0].mxu0
      %v2302 = vadd.f32 0.0, %v2301
      %v2303 = vpop.f32.mrb[0].mxu0
      %2304 = vmatprep.mubr.bf16.mxu0 0
      %2305 = vmatmul.mubr.bf16.gmra.mrb[0].mxu0 %v2245
      %v2306 = vpop.f32.mrb[0].mxu0
      %v2307 = vadd.f32 0.0, %v2306
      %v2308 = vpop.f32.mrb[0].mxu0
      %v2309 = vpop.f32.mrb[0].mxu0
      %v2310 = vadd.f32 0.0, %v2309
      %v2311 = vpop.f32.mrb[0].mxu0
      %2312 = vmatprep.mubr.bf16.mxu0 0
      %2313 = vmatmul.mubr.bf16.gmra.mrb[0].mxu0 %v2248
      %v2314 = vpop.f32.mrb[0].mxu0
      %v2315 = vadd.f32 0.0, %v2314
      %v2316 = vpop.f32.mrb[0].mxu0
      %v2317 = vpop.f32.mrb[0].mxu0
      %v2318 = vadd.f32 0.0, %v2317
      %v2319 = vpop.f32.mrb[0].mxu0
      %2320 = vmatprep.mubr.bf16.mxu0 0
      %2321 = vmatmul.mubr.bf16.gmra.mrb[0].mxu0 %v2251
      %v2322 = vpop.f32.mrb[0].mxu0
      %v2323 = vadd.f32 0.0, %v2322
      %v2324 = vpop.f32.mrb[0].mxu0
      %v2325 = vpop.f32.mrb[0].mxu0
      %v2326 = vpop.f32.mrb[0].mxu0
      %2327 = vdwg.mxu0
      %v2328 = vadd.f32 %v2213, %v2291
      %v2329 = vadd.f32 %v2214, %v2294
      %v2330 = vadd.f32 %v2215, %v2299
      %v2331 = vadd.f32 %v2216, %v2302
      %v2332 = vadd.f32 %v2217, %v2307
      %v2333 = vadd.f32 %v2218, %v2310
      %v2334 = vadd.f32 %v2219, %v2315
      %v2335 = vadd.f32 %v2220, %v2318
      %v2336 = vadd.f32 %v2221, %v2323
      // Predicated region
      $region45: #{encoder_forward.2} parent=39 // pred_check
        %p2337 = pneg %p243
      $region46: #{encoder_forward.2} parent=39 // pred_check_branch
        %2339 = sbr.rel (%p2337) target = $region48
      $region47: #{encoder_forward.2} parent=39 // pred_region
        %v2340 = vld [vmem:[%s4] sm:$0xff]
        %v2341 = vld [vmem:[%s4 + $0x8] sm:$0xff]
        %v2342 = vld [vmem:[%s4 + $0x10] sm:$0xff]
        %v2343 = vld [vmem:[%s4 + $0x18] sm:$0xff]
        %v2344 = vld [vmem:[%s4 + $0x20] sm:$0xff]
        %v2345 = vld [vmem:[%s4 + $0x28] sm:$0xff]
        %v2346 = vld [vmem:[%s4 + $0x30] sm:$0xff]
        %v2347 = vld [vmem:[%s4 + $0x38] sm:$0xff]
        %v2348 = vld [vmem:[%s4 + $0x40] sm:$0xff]
        %2350 = vset.pattern.permute.xlu0 0
        %2351 = vperm.xlu0 %2350, %v2340
        %v2352 = vpop.permute.xlu0 %2351
        %2355 = vset.pattern.permute.xlu0 0
        %2356 = vperm.xlu0 %2355, %v2341
        %v2357 = vpop.permute.xlu0 %2356
        %2360 = vset.pattern.permute.xlu0 0
        %2361 = vperm.xlu0 %2360, %v2342
        %v2362 = vpop.permute.xlu0 %2361
        %2365 = vset.pattern.permute.xlu0 0
        %2366 = vperm.xlu0 %2365, %v2343
        %v2367 = vpop.permute.xlu0 %2366
        %2370 = vset.pattern.permute.xlu0 0
        %2371 = vperm.xlu0 %2370, %v2344
        %v2372 = vpop.permute.xlu0 %2371
        %2375 = vset.pattern.permute.xlu0 0
        %2376 = vperm.xlu0 %2375, %v2345
        %v2377 = vpop.permute.xlu0 %2376
        %2380 = vset.pattern.permute.xlu0 0
        %2381 = vperm.xlu0 %2380, %v2346
        %v2382 = vpop.permute.xlu0 %2381
        %2385 = vset.pattern.permute.xlu0 0
        %2386 = vperm.xlu0 %2385, %v2347
        %v2387 = vpop.permute.xlu0 %2386
        %2390 = vset.pattern.permute.xlu0 0
        %2391 = vperm.xlu0 %2390, %v2348
        %v2392 = vpop.permute.xlu0 %2391
        %v2394 = vmul.f32 %v2328, %v2352
        %v2395 = vmul.f32 %v2329, %v2357
        %v2396 = vmul.f32 %v2330, %v2362
        %v2397 = vmul.f32 %v2331, %v2367
        %v2398 = vmul.f32 %v2332, %v2372
        %v2399 = vmul.f32 %v2333, %v2377
        %v2400 = vmul.f32 %v2334, %v2382
        %v2401 = vmul.f32 %v2335, %v2387
        %v2402 = vmul.f32 %v2336, %v2392
        %v2403 = vld [vmem:[#allocation2] sm:$0x1]
        %vm2404 = vcmask 64512
        %v2405 = vsel %vm2404, %v2394, 0.0
        %v2406 = vsel %vm2404, %v2395, 0.0
        %v2407 = vadd.f32 %v2405, %v2406
        %v2408 = vsel %vm2404, %v2396, 0.0
        %v2409 = vadd.f32 %v2407, %v2408
        %v2410 = vsel %vm2404, %v2397, 0.0
        %v2411 = vadd.f32 %v2409, %v2410
        %v2412 = vsel %vm2404, %v2398, 0.0
        %v2413 = vadd.f32 %v2411, %v2412
        %v2414 = vsel %vm2404, %v2399, 0.0
        %v2415 = vadd.f32 %v2413, %v2414
        %v2416 = vsel %vm2404, %v2400, 0.0
        %v2417 = vadd.f32 %v2415, %v2416
        %v2418 = vsel %vm2404, %v2401, 0.0
        %v2419 = vadd.f32 %v2417, %v2418
        %v2420 = vsel %vm2404, %v2402, 0.0
        %v2421 = vadd.f32 %v2419, %v2420
        %v2422 = vrot.slane %v2421, 4
        %v2423 = vadd.f32 %v2421, %v2422
        %v2424 = vrot.slane %v2423, 2
        %v2425 = vadd.f32 %v2423, %v2424
        %v2426 = vrot.slane %v2425, 1
        %v2427 = vadd.f32 %v2425, %v2426
        %v2428 = vadd.f32 %v2403, %v2427
        %vm2429 = vcmask 57344
        %2430 = vst.msk [vmem:[#allocation2] sm:$0x1] %vm2429, %v2428
        %v2431 = vld [vmem:[#allocation3] sm:$0x1]
        %v2432 = vmul.f32 %v2394, %v2394
        %v2433 = vmul.f32 %v2395, %v2395
        %v2434 = vmul.f32 %v2396, %v2396
        %v2435 = vmul.f32 %v2397, %v2397
        %v2436 = vmul.f32 %v2398, %v2398
        %v2437 = vmul.f32 %v2399, %v2399
        %v2438 = vmul.f32 %v2400, %v2400
        %v2439 = vmul.f32 %v2401, %v2401
        %v2440 = vmul.f32 %v2402, %v2402
        %v2441 = vsel %vm2404, %v2432, 0.0
        %v2442 = vsel %vm2404, %v2433, 0.0
        %v2443 = vadd.f32 %v2441, %v2442
        %v2444 = vsel %vm2404, %v2434, 0.0
        %v2445 = vadd.f32 %v2443, %v2444
        %v2446 = vsel %vm2404, %v2435, 0.0
        %v2447 = vadd.f32 %v2445, %v2446
        %v2448 = vsel %vm2404, %v2436, 0.0
        %v2449 = vadd.f32 %v2447, %v2448
        %v2450 = vsel %vm2404, %v2437, 0.0
        %v2451 = vadd.f32 %v2449, %v2450
        %v2452 = vsel %vm2404, %v2438, 0.0
        %v2453 = vadd.f32 %v2451, %v2452
        %v2454 = vsel %vm2404, %v2439, 0.0
        %v2455 = vadd.f32 %v2453, %v2454
        %v2456 = vsel %vm2404, %v2440, 0.0
        %v2457 = vadd.f32 %v2455, %v2456
        %v2458 = vrot.slane %v2457, 4
        %v2459 = vadd.f32 %v2457, %v2458
        %v2460 = vrot.slane %v2459, 2
        %v2461 = vadd.f32 %v2459, %v2460
        %v2462 = vrot.slane %v2461, 1
        %v2463 = vadd.f32 %v2461, %v2462
        %v2464 = vadd.f32 %v2431, %v2463
        %2465 = vst.msk [vmem:[#allocation3] sm:$0x1] %vm2429, %v2464
      $region48: #{encoder_forward.2} parent=39 // pred_fallthru
        _
      %p2466 = scmp.eq.s32.totalorder %s20, 1
      // Predicated region
      $region49: #{encoder_forward.2} parent=39 // pred_check
        %p2467 = pneg %p2466
      $region50: #{encoder_forward.2} parent=39 // pred_check_branch
        %2469 = sbr.rel (%p2467) target = $region52
      $region51: #{encoder_forward.2} parent=39 // pred_region
        %v2470 = vld [vmem:[#allocation2] sm:$0x1]
        %v2471 = vmul.f32 %v2470, 0.0078125
        %v2472 = vld [vmem:[#allocation3] sm:$0x1]
        %v2473 = vmul.f32 %v2472, 0.0078125
        %v2474 = vmul.f32 %v2471, %v2471
        %v2475 = vsub.f32 %v2473, %v2474
        %v2476 = vld [vmem:[%s2] sm:$0x1]
        %v2477 = vadd.f32 %v2475, 1e-05
        %v2478 = vrsqrt.pop %v2477
        %v2479 = vmul.f32 %v2476, %v2478
        %v2480 = vld [vmem:[%s3] sm:$0x1]
        %v2481 = vmul.f32 %v2471, %v2479
        %v2482 = vsub.f32 %v2480, %v2481
        %v2484 = vlaneseq
        %v2485 = vshrl.u32 %v2484, 7
        %v2486 = vsub.s32 0, %v2485
        %v2487 = vrot.slane %v2479, %v2486
        %v2489 = vmul.f32 %v2328, %v2487
        %v2490 = vmul.f32 %v2329, %v2487
        %v2491 = vmul.f32 %v2330, %v2487
        %v2492 = vmul.f32 %v2331, %v2487
        %v2493 = vmul.f32 %v2332, %v2487
        %v2494 = vmul.f32 %v2333, %v2487
        %v2495 = vmul.f32 %v2334, %v2487
        %v2496 = vmul.f32 %v2335, %v2487
        %v2497 = vmul.f32 %v2336, %v2487
        %v2499 = vlaneseq
        %v2500 = vshrl.u32 %v2499, 7
        %v2501 = vsub.s32 0, %v2500
        %v2502 = vrot.slane %v2482, %v2501
        %v2504 = vadd.f32 %v2489, %v2502
        %v2505 = vadd.f32 %v2490, %v2502
        %v2506 = vadd.f32 %v2491, %v2502
        %v2507 = vadd.f32 %v2492, %v2502
        %v2508 = vadd.f32 %v2493, %v2502
        %v2509 = vadd.f32 %v2494, %v2502
        %v2510 = vadd.f32 %v2495, %v2502
        %v2511 = vadd.f32 %v2496, %v2502
        %v2512 = vadd.f32 %v2497, %v2502
        %v2513 = vtanh.pop %v2504
        %v2514 = vtanh.pop %v2505
        %v2515 = vtanh.pop %v2506
        %v2516 = vtanh.pop %v2507
        %v2517 = vtanh.pop %v2508
        %v2518 = vtanh.pop %v2509
        %v2519 = vtanh.pop %v2510
        %v2520 = vtanh.pop %v2511
        %v2521 = vtanh.pop %v2512
        %vm2522 = vcmask 64512
        %2523 = vst.msk [vmem:[%s240] sm:$0xff] %vm2522, %v2513
        %2524 = vst.msk [vmem:[%s240 + $0x8] sm:$0xff] %vm2522, %v2514
        %2525 = vst.msk [vmem:[%s240 + $0x10] sm:$0xff] %vm2522, %v2515
        %2526 = vst.msk [vmem:[%s240 + $0x18] sm:$0xff] %vm2522, %v2516
        %2527 = vst.msk [vmem:[%s240 + $0x20] sm:$0xff] %vm2522, %v2517
        %2528 = vst.msk [vmem:[%s240 + $0x28] sm:$0xff] %vm2522, %v2518
        %2529 = vst.msk [vmem:[%s240 + $0x30] sm:$0xff] %vm2522, %v2519
        %2530 = vst.msk [vmem:[%s240 + $0x38] sm:$0xff] %vm2522, %v2520
        %2531 = vst.msk [vmem:[%s240 + $0x40] sm:$0xff] %vm2522, %v2521
      $region52: #{encoder_forward.2} parent=39 // pred_fallthru
        _
      %s2532 = smul.u32 %s20, %s21
      %p2533 = scmp.lt.s32.totalorder %s2532, 1
      %s2534 = scalar_select %p2533, %s2532, 1
      %s2535 = smul.addr %s2534, 9
      %s2536 = smul.addr %s2535, 8
      %s2537 = scalar_lea.vmem %s5, %s2536
      // Predicated region
      $region53: #{encoder_forward.2} parent=39 // pred_check
        %p2538 = pneg %p158
      $region54: #{encoder_forward.2} parent=39 // pred_check_branch
        %2540 = sbr.rel (%p2538) target = $region56
      $region55: #{encoder_forward.2} parent=39 // pred_region
        %s2541 = smul.u32 %s20, %s21
      $region56: #{encoder_forward.2} parent=39 // pred_fallthru
        _
    $region40: #{encoder_forward.2} parent=5 // pred_fallthru
      _
    %p2542 = scmp.le.s32.totalorder 2, %s11
    // Predicated region
    $region57: #{encoder_forward.2} parent=5 // pred_check
      %p2543 = pneg %p2542
    $region58: #{encoder_forward.2} parent=5 // pred_check_branch
      %2545 = sbr.rel (%p2543) target = $region60
    $region59: #{encoder_forward.2} parent=5 // pred_region
      %s2546 = ssub.s32 %s11, 2
      // Predicated region
      $region61: #{encoder_forward.2} parent=59 // pred_check
        %p2547 = pneg %p164
      $region62: #{encoder_forward.2} parent=59 // pred_check_branch
        %2549 = sbr.rel (%p2547) target = $region64
      $region63: #{encoder_forward.2} parent=59 // pred_region
        %s2550 = smul.u32 %s22, %s23
        %p2551 = scmp.lt.s32.totalorder %s2550, 1
        %s2552 = scalar_select %p2551, %s2550, 1
        %s2553 = smul.addr %s2552, 9
        %s2554 = smul.addr %s2553, 8
        %s2555 = scalar_lea.vmem %s5, %s2554
      $region64: #{encoder_forward.2} parent=59 // pred_fallthru
        _
    $region60: #{encoder_forward.2} parent=5 // pred_fallthru
      _
  $region6: #{encoder_forward.2} parent=0 // loop_footer
    %s15 = sadd.s32 1, %s11
  $region7: #{encoder_forward.2} parent=0 // loop_footer_branch
    %10 = sbr.rel target = $region3
  $region8: #{encoder_forward.2} parent=0 // loop_exit
    _

// kernel: encoder_forward.3
$region0: #{encoder_forward.3}
  #allocation0 [shape = 'u32[]', space=smem, size = 0x4, offset = 0x4, fixed_abs, tag = 'smem constant byte address 0x4 - core index']
  #allocation1 [shape = 'u32[144,128]{1,0:T(1,128)}', space=vmem, size = 0x12000, scoped, tag = 'internal scratch']
  #allocation2 [shape = 'f32[1,16]{1,0:T(1,128)}', space=vmem, size = 0x200, scoped, tag = 'scratch operand']
  #allocation3 [shape = 'f32[1,16]{1,0:T(1,128)}', space=vmem, size = 0x200, scoped, tag = 'scratch operand']
  %s0 = inlined_call_operand.vmem [shape: bf16[2,4,30,8], index: 0, kind: input, shape index: {}]
  %s1 = inlined_call_operand.vmem [shape: bf16[16,8,16], index: 1, kind: input, shape index: {}]
  %s2 = inlined_call_operand.vmem [shape: f32[1,16], index: 2, kind: input, shape index: {}]
  %s3 = inlined_call_operand.vmem [shape: f32[1,16], index: 3, kind: input, shape index: {}]
  %s4 = inlined_call_operand.vmem [shape: f32[20,1], index: 4, kind: input, shape index: {}]
  %s5 = inlined_call_operand.vmem [shape: f32[2,20,16], index: 5, kind: output, shape index: {}]
  %s6 = sld [smem:[#allocation0]]
  $region65: #{encoder_forward.3} parent=0
    _
  %s8 = ssub.s32 1, %s6
  %s9 = scalar_select 0, %s8, %s6
  loop: start=0, step=1, limit=6
  $region2: #{encoder_forward.3} parent=0 // loop_pre_header
    _
  $region3: #{encoder_forward.3} parent=0 // loop_header
    %s11 = sphi 0, %s15
    %p12 = scmp.ge.s32.totalorder %s11, 6
    %s18 = sphi 0, %s30
    %s19 = sphi 0, %s26
    %s20 = sphi 0, %s18
    %s21 = sphi 0, %s19
    %s22 = sphi 0, %s20
    %s23 = sphi 0, %s21
    %s33 = sphi 0, %s35
    %s36 = sphi 0, %s33
    %s37 = sphi 0, %s36
    %s53 = sphi 0, %s37
    %s57 = sphi 0, %s57
    %s59 = sphi 0, %s57
    %s60 = sphi 0, %s59
    %s74 = sphi 0, %s60
    %s78 = sphi 0, %s78
    %s80 = sphi 0, %s78
    %s81 = sphi 0, %s80
    %s95 = sphi 0, %s81
    %s99 = sphi 0, %s99
    %s101 = sphi 0, %s99
    %s102 = sphi 0, %s101
    %s116 = sphi 0, %s102
    %s120 = sphi 0, %s120
    %s122 = sphi 0, %s120
    %s123 = sphi 0, %s122
    %s137 = sphi 0, %s123
    %s145 = sphi 0, %s147
    %s148 = sphi 0, %s145
    %s149 = sphi 0, %s148
    %s165 = sphi 0, %s149
  $region4: #{encoder_forward.3} parent=0 // loop_header_branch
    %14 = sbr.rel (%p12) target = $region8
  $region5: #{encoder_forward.3} parent=0 // loop_body
    %s16 = ssub.s32 %s11, 1
    %s17 = ssub.s32 %s11, 2
    %s24 = sadd.s32 1, %s19
    %p25 = scmp.ge.s32.totalorder %s24, 2
    %s26 = scalar_select %p25, 0, %s24
    %s27 = sadd.s32 1, %s18
    %s28 = scalar_select %p25, %s27, %s18
    %p29 = scmp.ge.s32.totalorder %s28, 2
    %s30 = scalar_select %p29, 0, %s28
    %s31 = ssub.s32 %s19, %s26
    %p32 = scmp.eq.s32.totalorder %s31, 0
    %s34 = sadd.s32 %s33, 1
    %s35 = scalar_select %p32, %s33, %s34
    %p38 = pneg %p32
    %p39 = scmp.eq.s32.totalorder %s11, 3
    %p40 = por %p38, %p39
    %p41 = scmp.ne.s32.totalorder %s33, %s36
    %p42 = scmp.eq.s32.totalorder %s11, 0
    %p43 = por %p41, %p42
    %p44 = scmp.ne.s32.totalorder %s33, %s36
    %p45 = scmp.eq.s32.totalorder %s16, 3
    %p46 = por %p44, %p45
    %p47 = scmp.ne.s32.totalorder %s36, %s37
    %p48 = scmp.eq.s32.totalorder %s16, 0
    %p49 = por %p47, %p48
    %p50 = scmp.ne.s32.totalorder %s36, %s37
    %p51 = scmp.eq.s32.totalorder %s17, 3
    %p52 = por %p50, %p51
    %p54 = scmp.ne.s32.totalorder %s37, %s53
    %p55 = scmp.eq.s32.totalorder %s17, 0
    %p56 = por %p54, %p55
    %s58 = sadd.s32 %s57, 1
    %p61 = scmp.eq.s32.totalorder %s11, 3
    %p62 = scmp.ne.s32.totalorder %s57, %s59
    %p63 = scmp.eq.s32.totalorder %s11, 0
    %p64 = por %p62, %p63
    %p65 = scmp.ne.s32.totalorder %s57, %s59
    %p66 = scmp.eq.s32.totalorder %s16, 3
    %p67 = por %p65, %p66
    %p68 = scmp.ne.s32.totalorder %s59, %s60
    %p69 = scmp.eq.s32.totalorder %s16, 0
    %p70 = por %p68, %p69
    %p71 = scmp.ne.s32.totalorder %s59, %s60
    %p72 = scmp.eq.s32.totalorder %s17, 3
    %p73 = por %p71, %p72
    %p75 = scmp.ne.s32.totalorder %s60, %s74
    %p76 = scmp.eq.s32.totalorder %s17, 0
    %p77 = por %p75, %p76
    %s79 = sadd.s32 %s78, 1
    %p82 = scmp.eq.s32.totalorder %s11, 3
    %p83 = scmp.ne.s32.totalorder %s78, %s80
    %p84 = scmp.eq.s32.totalorder %s11, 0
    %p85 = por %p83, %p84
    %p86 = scmp.ne.s32.totalorder %s78, %s80
    %p87 = scmp.eq.s32.totalorder %s16, 3
    %p88 = por %p86, %p87
    %p89 = scmp.ne.s32.totalorder %s80, %s81
    %p90 = scmp.eq.s32.totalorder %s16, 0
    %p91 = por %p89, %p90
    %p92 = scmp.ne.s32.totalorder %s80, %s81
    %p93 = scmp.eq.s32.totalorder %s17, 3
    %p94 = por %p92, %p93
    %p96 = scmp.ne.s32.totalorder %s81, %s95
    %p97 = scmp.eq.s32.totalorder %s17, 0
    %p98 = por %p96, %p97
    %s100 = sadd.s32 %s99, 1
    %p103 = scmp.eq.s32.totalorder %s11, 3
    %p104 = scmp.ne.s32.totalorder %s99, %s101
    %p105 = scmp.eq.s32.totalorder %s11, 0
    %p106 = por %p104, %p105
    %p107 = scmp.ne.s32.totalorder %s99, %s101
    %p108 = scmp.eq.s32.totalorder %s16, 3
    %p109 = por %p107, %p108
    %p110 = scmp.ne.s32.totalorder %s101, %s102
    %p111 = scmp.eq.s32.totalorder %s16, 0
    %p112 = por %p110, %p111
    %p113 = scmp.ne.s32.totalorder %s101, %s102
    %p114 = scmp.eq.s32.totalorder %s17, 3
    %p115 = por %p113, %p114
    %p117 = scmp.ne.s32.totalorder %s102, %s116
    %p118 = scmp.eq.s32.totalorder %s17, 0
    %p119 = por %p117, %p118
    %s121 = sadd.s32 %s120, 1
    %p124 = scmp.eq.s32.totalorder %s11, 3
    %p125 = scmp.ne.s32.totalorder %s120, %s122
    %p126 = scmp.eq.s32.totalorder %s11, 0
    %p127 = por %p125, %p126
    %p128 = scmp.ne.s32.totalorder %s120, %s122
    %p129 = scmp.eq.s32.totalorder %s16, 3
    %p130 = por %p128, %p129
    %p131 = scmp.ne.s32.totalorder %s122, %s123
    %p132 = scmp.eq.s32.totalorder %s16, 0
    %p133 = por %p131, %p132
    %p134 = scmp.ne.s32.totalorder %s122, %s123
    %p135 = scmp.eq.s32.totalorder %s17, 3
    %p136 = por %p134, %p135
    %p138 = scmp.ne.s32.totalorder %s123, %s137
    %p139 = scmp.eq.s32.totalorder %s17, 0
    %p140 = por %p138, %p139
    %s141 = smul.u32 %s18, %s19
    %s142 = smul.u32 %s30, %s26
    %s143 = ssub.s32 %s141, %s142
    %p144 = scmp.eq.s32.totalorder %s143, 0
    %s146 = sadd.s32 %s145, 1
    %s147 = scalar_select %p144, %s145, %s146
    %p150 = pneg %p144
    %p151 = scmp.eq.s32.totalorder %s11, 3
    %p152 = por %p150, %p151
    %p153 = scmp.ne.s32.totalorder %s145, %s148
    %p154 = scmp.eq.s32.totalorder %s11, 0
    %p155 = por %p153, %p154
    %p156 = scmp.ne.s32.totalorder %s145, %s148
    %p157 = scmp.eq.s32.totalorder %s16, 3
    %p158 = por %p156, %p157
    %p159 = scmp.ne.s32.totalorder %s148, %s149
    %p160 = scmp.eq.s32.totalorder %s16, 0
    %p161 = por %p159, %p160
    %p162 = scmp.ne.s32.totalorder %s148, %s149
    %p163 = scmp.eq.s32.totalorder %s17, 3
    %p164 = por %p162, %p163
    %p166 = scmp.ne.s32.totalorder %s149, %s165
    %p167 = scmp.eq.s32.totalorder %s17, 0
    %p168 = por %p166, %p167
    %p169 = scmp.le.s32.totalorder 1, %s11
    %p170 = scmp.lt.s32.totalorder %s11, 5
    %p171 = pnand %p169, %p170
    %p172 = pneg %p171
    // Predicated region
    $region9: #{encoder_forward.3} parent=5 // pred_check
      _
    $region10: #{encoder_forward.3} parent=5 // pred_check_branch
      %174 = sbr.rel (%p171) target = $region12
    $region11: #{encoder_forward.3} parent=5 // pred_region
      %s175 = ssub.s32 %s11, 1
      // Predicated region
      $region13: #{encoder_forward.3} parent=11 // pred_check
        %p176 = pneg %p70
      $region14: #{encoder_forward.3} parent=11 // pred_check_branch
        %178 = sbr.rel (%p176) target = $region16
      $region15: #{encoder_forward.3} parent=11 // pred_region
        _
      $region16: #{encoder_forward.3} parent=11 // pred_fallthru
        _
      // Predicated region
      $region17: #{encoder_forward.3} parent=11 // pred_check
        %p179 = pneg %p91
      $region18: #{encoder_forward.3} parent=11 // pred_check_branch
        %181 = sbr.rel (%p179) target = $region20
      $region19: #{encoder_forward.3} parent=11 // pred_region
        _
      $region20: #{encoder_forward.3} parent=11 // pred_fallthru
        _
      // Predicated region
      $region21: #{encoder_forward.3} parent=11 // pred_check
        %p182 = pneg %p112
      $region22: #{encoder_forward.3} parent=11 // pred_check_branch
        %184 = sbr.rel (%p182) target = $region24
      $region23: #{encoder_forward.3} parent=11 // pred_region
        _
      $region24: #{encoder_forward.3} parent=11 // pred_fallthru
        _
      // Predicated region
      $region25: #{encoder_forward.3} parent=11 // pred_check
        %p185 = pneg %p133
      $region26: #{encoder_forward.3} parent=11 // pred_check_branch
        %187 = sbr.rel (%p185) target = $region28
      $region27: #{encoder_forward.3} parent=11 // pred_region
        _
      $region28: #{encoder_forward.3} parent=11 // pred_fallthru
        _
    $region12: #{encoder_forward.3} parent=5 // pred_fallthru
      _
    %p188 = scmp.lt.s32.totalorder %s11, 4
    // Predicated region
    $region29: #{encoder_forward.3} parent=5 // pred_check
      %p189 = pneg %p188
    $region30: #{encoder_forward.3} parent=5 // pred_check_branch
      %191 = sbr.rel (%p189) target = $region32
    $region31: #{encoder_forward.3} parent=5 // pred_region
      // Predicated region
      $region33: #{encoder_forward.3} parent=31 // pred_check
        %p192 = pneg %p43
      $region34: #{encoder_forward.3} parent=31 // pred_check_branch
        %194 = sbr.rel (%p192) target = $region36
      $region35: #{encoder_forward.3} parent=31 // pred_region
        %p195 = scmp.lt.s32.totalorder %s19, 1
        %s196 = scalar_select %p195, %s19, 1
        %s197 = smul.addr %s196, 16
        %s198 = smul.addr %s197, 4
        %s199 = scalar_lea.vmem %s0, %s198
      $region36: #{encoder_forward.3} parent=31 // pred_fallthru
        _
    $region32: #{encoder_forward.3} parent=5 // pred_fallthru
      _
    %p200 = scmp.le.s32.totalorder 1, %s11
    %p201 = scmp.lt.s32.totalorder %s11, 5
    %p202 = pnand %p200, %p201
    %p203 = pneg %p202
    // Predicated region
    $region37: #{encoder_forward.3} parent=5 // pred_check
      _
    $region38: #{encoder_forward.3} parent=5 // pred_check_branch
      %205 = sbr.rel (%p202) target = $region40
    $region39: #{encoder_forward.3} parent=5 // pred_region
      %s206 = ssub.s32 %s11, 1
      %p207 = scmp.lt.s32.totalorder %s21, 1
      %s208 = scalar_select %p207, %s21, 1
      %s209 = smul.addr %s208, 16
      %s210 = smul.addr %s209, 4
      %s211 = scalar_lea.vmem %s0, %s210
      %p212 = pneg %p49
      %p213 = pneg %p46
      %p214 = pneg %p70
      %p215 = pneg %p67
      %p216 = pneg %p91
      %p217 = pneg %p88
      %p218 = pneg %p112
      %p219 = pneg %p109
      %p220 = pneg %p133
      %p221 = pneg %p130
      %p222 = pneg %p161
      %p223 = pneg %p158
      %s224 = smul.u32 %s20, %s21
      %p225 = scmp.lt.s32.totalorder %s224, 1
      %s226 = scalar_select %p225, %s224, 1
      %s227 = smul.addr %s226, 3
      %s228 = smul.addr %s227, 8
      %s229 = scalar_lea.vmem %s5, %s228
      %p230 = scmp.lt.s32.totalorder %s21, 1
      %s231 = scalar_select %p230, %s21, 1
      %s232 = smul.addr %s231, 16
      %s233 = smul.addr %s232, 4
      %s234 = scalar_lea.vmem %s0, %s233
      %s235 = smul.u32 %s20, %s21
      %p236 = scmp.lt.s32.totalorder %s235, 1
      %s237 = scalar_select %p236, %s235, 1
      %s238 = smul.addr %s237, 3
      %s239 = smul.addr %s238, 8
      %s240 = scalar_lea.vmem %s5, %s239
      %s241 = smul.u32 %s20, %s21
      %p243 = scmp.eq.s32.totalorder %s20, 0
      %p244 = scmp.eq.s32.totalorder %s21, 0
      %p245 = pnand %p243, %p244
      %p246 = pneg %p245
      // Predicated region
      $region41: #{encoder_forward.3} parent=39 // pred_check
        _
      $region42: #{encoder_forward.3} parent=39 // pred_check_branch
        %248 = sbr.rel (%p245) target = $region44
      $region43: #{encoder_forward.3} parent=39 // pred_region
        %vm249 = vcmask 122880
        %250 = vst.msk [vmem:[#allocation2] sm:$0x1] %vm249, 0.0
        %251 = vst.msk [vmem:[#allocation3] sm:$0x1] %vm249, 0.0
      $region44: #{encoder_forward.3} parent=39 // pred_fallthru
        _
      %v252 = vld [vmem:[%s234] sm:$0xf]
      %v253 = vld [vmem:[%s234 + $0x4] sm:$0xf]
      %v254 = vld [vmem:[%s234 + $0x8] sm:$0xf]
      %v255 = vld [vmem:[%s234 + $0xc] sm:$0x7]
      %v256 = vld [vmem:[%s234 + $0x10] sm:$0xf]
      %v257 = vld [vmem:[%s234 + $0x14] sm:$0xf]
      %v258 = vld [vmem:[%s234 + $0x18] sm:$0xf]
      %v259 = vld [vmem:[%s234 + $0x1c] sm:$0x7]
      %v260 = vld [vmem:[%s234 + $0x20] sm:$0xf]
      %v261 = vld [vmem:[%s234 + $0x24] sm:$0xf]
      %v262 = vld [vmem:[%s234 + $0x28] sm:$0xf]
      %v263 = vld [vmem:[%s234 + $0x2c] sm:$0x7]
      %v264 = vld [vmem:[%s234 + $0x30] sm:$0xf]
      %v265 = vld [vmem:[%s234 + $0x34] sm:$0xf]
      %v266 = vld [vmem:[%s234 + $0x38] sm:$0xf]
      %v267 = vld [vmem:[%s234 + $0x3c] sm:$0x7]
      %v268 = vunpack.c.l.bf16 %v252
      %v269 = vunpack.c.l.bf16 %v253
      %v270 = vunpack.c.l.bf16 %v254
      %v271 = vunpack.c.l.bf16 %v255
      %v272 = vunpack.c.l.bf16 %v256
      %v273 = vunpack.c.l.bf16 %v257
      %v274 = vunpack.c.l.bf16 %v258
      %v275 = vunpack.c.l.bf16 %v259
      %v276 = vunpack.c.l.bf16 %v260
      %v277 = vunpack.c.l.bf16 %v261
      %v278 = vunpack.c.l.bf16 %v262
      %v279 = vunpack.c.l.bf16 %v263
      %v280 = vunpack.c.l.bf16 %v264
      %v281 = vunpack.c.l.bf16 %v265
      %v282 = vunpack.c.l.bf16 %v266
      %v283 = vunpack.c.l.bf16 %v267
      %v284 = vpack.c.bf16 %v269, %v268
      %v285 = vpack.c.bf16 %v270, %v270
      %v286 = vld [vmem:[%s1] sm:$0xf]
      %v287 = vpack.c.bf16 %v273, %v272
      %v288 = vpack.c.bf16 %v274, %v274
      %s289 = scalar_lea.vmem %s1, 4
      %v290 = vld [vmem:[%s289] sm:$0xf]
      %vm291 = vcmask 64512
      %v293 = vsel %vm291, %v287, 0
      %v296 = vsel %vm291, %v288, 0
      %vm298 = vcmask 1043456
      %v300 = vsel %vm298, %v290, 0
      %302 = vmatprep.subr.bf16.mxu0 0
      %303 = vmatpush1.bf16.msra.mxu0 %v300
      %304 = vmatprep.subr.bf16.mxu0 0
      %305 = vmatpush1.bf16.msra.mxu0 0
      %306 = vmatprep.subr.bf16.mxu0 0
      %307 = vmatpush1.bf16.msra.mxu0 0
      %308 = vmatprep.subr.bf16.mxu0 0
      %309 = vmatpush1.bf16.msra.mxu0 0
      %310 = vmatprep.subr.bf16.mxu0 0
      %311 = vmatpush1.bf16.msra.mxu0 0
      %312 = vmatprep.subr.bf16.mxu0 0
      %313 = vmatpush1.bf16.msra.mxu0 0
      %314 = vmatprep.subr.bf16.mxu0 0
      %315 = vmatpush1.bf16.msra.mxu0 0
      %316 = vmatprep.subr.bf16.mxu0 0
      %317 = vmatpush1.bf16.msra.mxu0 0
      %318 = vmatprep.subr.bf16.mxu0 0
      %319 = vmatpush1.bf16.msra.mxu0 0
      %320 = vmatprep.subr.bf16.mxu0 0
      %321 = vmatpush1.bf16.msra.mxu0 0
      %322 = vmatprep.subr.bf16.mxu0 0
      %323 = vmatpush1.bf16.msra.mxu0 0
      %324 = vmatprep.subr.bf16.mxu0 0
      %325 = vmatpush1.bf16.msra.mxu0 0
      %326 = vmatprep.subr.bf16.mxu0 0
      %327 = vmatpush1.bf16.msra.mxu0 0
      %328 = vmatprep.subr.bf16.mxu0 0
      %329 = vmatpush1.bf16.msra.mxu0 0
      %330 = vmatprep.subr.bf16.mxu0 0
      %331 = vmatpush1.bf16.msra.mxu0 0
      %332 = vmatprep.subr.bf16.mxu0 0
      %333 = vmatpush1.bf16.msra.mxu0 0
      %334 = vmatprep.mubr.bf16.mxu0 0
      %335 = vmatmul.mubr.bf16.gmra.mrb[0].mxu0 %v293
      %v336 = vpop.f32.mrb[0].mxu0
      %v337 = vadd.f32 0.0, %v336
      %v338 = vpop.f32.mrb[0].mxu0
      %v339 = vpop.f32.mrb[0].mxu0
      %v340 = vadd.f32 0.0, %v339
      %v341 = vpop.f32.mrb[0].mxu0
      %342 = vmatprep.mubr.bf16.mxu0 0
      %343 = vmatmul.mubr.bf16.gmra.mrb[0].mxu0 %v296
      %v344 = vpop.f32.mrb[0].mxu0
      %v345 = vadd.f32 0.0, %v344
      %v346 = vpop.f32.mrb[0].mxu0
      %v347 = vpop.f32.mrb[0].mxu0
      %v348 = vpop.f32.mrb[0].mxu0
      %349 = vdwg.mxu0
      %v351 = vsel %vm291, %v284, 0
      %v354 = vsel %vm291, %v285, 0
      %v357 = vsel %vm298, %v286, 0
      %359 = vmatprep.subr.bf16.mxu0 0
      %360 = vmatpush1.bf16.msra.mxu0 %v357
      %361 = vmatprep.subr.bf16.mxu0 0
      %362 = vmatpush1.bf16.msra.mxu0 0
      %363 = vmatprep.subr.bf16.mxu0 0
      %364 = vmatpush1.bf16.msra.mxu0 0
      %365 = vmatprep.subr.bf16.mxu0 0
      %366 = vmatpush1.bf16.msra.mxu0 0
      %367 = vmatprep.subr.bf16.mxu0 0
      %368 = vmatpush1.bf16.msra.mxu0 0
      %369 = vmatprep.subr.bf16.mxu0 0
      %370 = vmatpush1.bf16.msra.mxu0 0
      %371 = vmatprep.subr.bf16.mxu0 0
      %372 = vmatpush1.bf16.msra.mxu0 0
      %373 = vmatprep.subr.bf16.mxu0 0
      %374 = vmatpush1.bf16.msra.mxu0 0
      %375 = vmatprep.subr.bf16.mxu0 0
      %376 = vmatpush1.bf16.msra.mxu0 0
      %377 = vmatprep.subr.bf16.mxu0 0
      %378 = vmatpush1.bf16.msra.mxu0 0
      %379 = vmatprep.subr.bf16.mxu0 0
      %380 = vmatpush1.bf16.msra.mxu0 0
      %381 = vmatprep.subr.bf16.mxu0 0
      %382 = vmatpush1.bf16.msra.mxu0 0
      %383 = vmatprep.subr.bf16.mxu0 0
      %384 = vmatpush1.bf16.msra.mxu0 0
      %385 = vmatprep.subr.bf16.mxu0 0
      %386 = vmatpush1.bf16.msra.mxu0 0
      %387 = vmatprep.subr.bf16.mxu0 0
      %388 = vmatpush1.bf16.msra.mxu0 0
      %389 = vmatprep.subr.bf16.mxu0 0
      %390 = vmatpush1.bf16.msra.mxu0 0
      %391 = vmatprep.mubr.bf16.mxu0 0
      %392 = vmatmul.mubr.bf16.gmra.mrb[0].mxu0 %v351
      %v393 = vpop.f32.mrb[0].mxu0
      %v394 = vadd.f32 %v337, %v393
      %v395 = vpop.f32.mrb[0].mxu0
      %v396 = vpop.f32.mrb[0].mxu0
      %v397 = vadd.f32 %v340, %v396
      %v398 = vpop.f32.mrb[0].mxu0
      %399 = vmatprep.mubr.bf16.mxu0 0
      %400 = vmatmul.mubr.bf16.gmra.mrb[0].mxu0 %v354
      %v401 = vpop.f32.mrb[0].mxu0
      %v402 = vadd.f32 %v345, %v401
      %v403 = vpop.f32.mrb[0].mxu0
      %v404 = vpop.f32.mrb[0].mxu0
      %v405 = vpop.f32.mrb[0].mxu0
      %406 = vdwg.mxu0
      %s407 = scalar_lea.vmem %s1, 8
      %v408 = vld [vmem:[%s407] sm:$0xf]
      %vm409 = vsmask.f32 7424
      %v410 = vshrl.u32 %v284, 16
      %v412 = vshll.u32 %v284, 16
      %v414 = vrot.slane %v412, 1
      %v415 = vor.u32 %v410, %v414
      %v416 = vshll.u32 %v285, 16
      %v418 = vrot.slane %v416, 1
      %v419 = vsel %vm409, %v415, %v418
      %v420 = vshrl.u32 %v285, 16
      %v422 = vor.u32 %v420, %v418
      %v424 = vsel %vm291, %v419, 0
      %v427 = vsel %vm291, %v422, 0
      %v430 = vsel %vm298, %v408, 0
      %432 = vmatprep.subr.bf16.mxu0 0
      %433 = vmatpush1.bf16.msra.mxu0 %v430
      %434 = vmatprep.subr.bf16.mxu0 0
      %435 = vmatpush1.bf16.msra.mxu0 0
      %436 = vmatprep.subr.bf16.mxu0 0
      %437 = vmatpush1.bf16.msra.mxu0 0
      %438 = vmatprep.subr.bf16.mxu0 0
      %439 = vmatpush1.bf16.msra.mxu0 0
      %440 = vmatprep.subr.bf16.mxu0 0
      %441 = vmatpush1.bf16.msra.mxu0 0
      %442 = vmatprep.subr.bf16.mxu0 0
      %443 = vmatpush1.bf16.msra.mxu0 0
      %444 = vmatprep.subr.bf16.mxu0 0
      %445 = vmatpush1.bf16.msra.mxu0 0
      %446 = vmatprep.subr.bf16.mxu0 0
      %447 = vmatpush1.bf16.msra.mxu0 0
      %448 = vmatprep.subr.bf16.mxu0 0
      %449 = vmatpush1.bf16.msra.mxu0 0
      %450 = vmatprep.subr.bf16.mxu0 0
      %451 = vmatpush1.bf16.msra.mxu0 0
      %452 = vmatprep.subr.bf16.mxu0 0
      %453 = vmatpush1.bf16.msra.mxu0 0
      %454 = vmatprep.subr.bf16.mxu0 0
      %455 = vmatpush1.bf16.msra.mxu0 0
      %456 = vmatprep.subr.bf16.mxu0 0
      %457 = vmatpush1.bf16.msra.mxu0 0
      %458 = vmatprep.subr.bf16.mxu0 0
      %459 = vmatpush1.bf16.msra.mxu0 0
      %460 = vmatprep.subr.bf16.mxu0 0
      %461 = vmatpush1.bf16.msra.mxu0 0
      %462 = vmatprep.subr.bf16.mxu0 0
      %463 = vmatpush1.bf16.msra.mxu0 0
      %464 = vmatprep.mubr.bf16.mxu0 0
      %465 = vmatmul.mubr.bf16.gmra.mrb[0].mxu0 %v424
      %v466 = vpop.f32.mrb[0].mxu0
      %v467 = vadd.f32 0.0, %v466
      %v468 = vpop.f32.mrb[0].mxu0
      %v469 = vpop.f32.mrb[0].mxu0
      %v470 = vadd.f32 0.0, %v469
      %v471 = vpop.f32.mrb[0].mxu0
      %472 = vmatprep.mubr.bf16.mxu0 0
      %473 = vmatmul.mubr.bf16.gmra.mrb[0].mxu0 %v427
      %v474 = vpop.f32.mrb[0].mxu0
      %v475 = vadd.f32 0.0, %v474
      %v476 = vpop.f32.mrb[0].mxu0
      %v477 = vpop.f32.mrb[0].mxu0
      %v478 = vpop.f32.mrb[0].mxu0
      %479 = vdwg.mxu0
      %v480 = vadd.f32 %v394, %v467
      %v481 = vadd.f32 %v397, %v470
      %v482 = vadd.f32 %v402, %v475
      %s483 = scalar_lea.vmem %s1, 12
      %v484 = vld [vmem:[%s483] sm:$0xf]
      %v485 = vshrl.u32 %v287, 16
      %v487 = vshll.u32 %v287, 16
      %v489 = vrot.slane %v487, 1
      %v490 = vor.u32 %v485, %v489
      %v491 = vshll.u32 %v288, 16
      %v493 = vrot.slane %v491, 1
      %v494 = vsel %vm409, %v490, %v493
      %v495 = vshrl.u32 %v288, 16
      %v497 = vor.u32 %v495, %v493
      %v499 = vsel %vm291, %v494, 0
      %v502 = vsel %vm291, %v497, 0
      %v505 = vsel %vm298, %v484, 0
      %507 = vmatprep.subr.bf16.mxu0 0
      %508 = vmatpush1.bf16.msra.mxu0 %v505
      %509 = vmatprep.subr.bf16.mxu0 0
      %510 = vmatpush1.bf16.msra.mxu0 0
      %511 = vmatprep.subr.bf16.mxu0 0
      %512 = vmatpush1.bf16.msra.mxu0 0
      %513 = vmatprep.subr.bf16.mxu0 0
      %514 = vmatpush1.bf16.msra.mxu0 0
      %515 = vmatprep.subr.bf16.mxu0 0
      %516 = vmatpush1.bf16.msra.mxu0 0
      %517 = vmatprep.subr.bf16.mxu0 0
      %518 = vmatpush1.bf16.msra.mxu0 0
      %519 = vmatprep.subr.bf16.mxu0 0
      %520 = vmatpush1.bf16.msra.mxu0 0
      %521 = vmatprep.subr.bf16.mxu0 0
      %522 = vmatpush1.bf16.msra.mxu0 0
      %523 = vmatprep.subr.bf16.mxu0 0
      %524 = vmatpush1.bf16.msra.mxu0 0
      %525 = vmatprep.subr.bf16.mxu0 0
      %526 = vmatpush1.bf16.msra.mxu0 0
      %527 = vmatprep.subr.bf16.mxu0 0
      %528 = vmatpush1.bf16.msra.mxu0 0
      %529 = vmatprep.subr.bf16.mxu0 0
      %530 = vmatpush1.bf16.msra.mxu0 0
      %531 = vmatprep.subr.bf16.mxu0 0
      %532 = vmatpush1.bf16.msra.mxu0 0
      %533 = vmatprep.subr.bf16.mxu0 0
      %534 = vmatpush1.bf16.msra.mxu0 0
      %535 = vmatprep.subr.bf16.mxu0 0
      %536 = vmatpush1.bf16.msra.mxu0 0
      %537 = vmatprep.subr.bf16.mxu0 0
      %538 = vmatpush1.bf16.msra.mxu0 0
      %539 = vmatprep.mubr.bf16.mxu0 0
      %540 = vmatmul.mubr.bf16.gmra.mrb[0].mxu0 %v499
      %v541 = vpop.f32.mrb[0].mxu0
      %v542 = vadd.f32 0.0, %v541
      %v543 = vpop.f32.mrb[0].mxu0
      %v544 = vpop.f32.mrb[0].mxu0
      %v545 = vadd.f32 0.0, %v544
      %v546 = vpop.f32.mrb[0].mxu0
      %547 = vmatprep.mubr.bf16.mxu0 0
      %548 = vmatmul.mubr.bf16.gmra.mrb[0].mxu0 %v502
      %v549 = vpop.f32.mrb[0].mxu0
      %v550 = vadd.f32 0.0, %v549
      %v551 = vpop.f32.mrb[0].mxu0
      %v552 = vpop.f32.mrb[0].mxu0
      %v553 = vpop.f32.mrb[0].mxu0
      %554 = vdwg.mxu0
      %v555 = vadd.f32 %v480, %v542
      %v556 = vadd.f32 %v481, %v545
      %v557 = vadd.f32 %v482, %v550
      %v558 = vpack.c.bf16 %v277, %v276
      %v559 = vpack.c.bf16 %v278, %v278
      %s560 = scalar_lea.vmem %s1, 16
      %v561 = vld [vmem:[%s560] sm:$0xf]
      %v563 = vsel %vm291, %v558, 0
      %v566 = vsel %vm291, %v559, 0
      %v569 = vsel %vm298, %v561, 0
      %571 = vmatprep.subr.bf16.mxu0 0
      %572 = vmatpush1.bf16.msra.mxu0 %v569
      %573 = vmatprep.subr.bf16.mxu0 0
      %574 = vmatpush1.bf16.msra.mxu0 0
      %575 = vmatprep.subr.bf16.mxu0 0
      %576 = vmatpush1.bf16.msra.mxu0 0
      %577 = vmatprep.subr.bf16.mxu0 0
      %578 = vmatpush1.bf16.msra.mxu0 0
      %579 = vmatprep.subr.bf16.mxu0 0
      %580 = vmatpush1.bf16.msra.mxu0 0
      %581 = vmatprep.subr.bf16.mxu0 0
      %582 = vmatpush1.bf16.msra.mxu0 0
      %583 = vmatprep.subr.bf16.mxu0 0
      %584 = vmatpush1.bf16.msra.mxu0 0
      %585 = vmatprep.subr.bf16.mxu0 0
      %586 = vmatpush1.bf16.msra.mxu0 0
      %587 = vmatprep.subr.bf16.mxu0 0
      %588 = vmatpush1.bf16.msra.mxu0 0
      %589 = vmatprep.subr.bf16.mxu0 0
      %590 = vmatpush1.bf16.msra.mxu0 0
      %591 = vmatprep.subr.bf16.mxu0 0
      %592 = vmatpush1.bf16.msra.mxu0 0
      %593 = vmatprep.subr.bf16.mxu0 0
      %594 = vmatpush1.bf16.msra.mxu0 0
      %595 = vmatprep.subr.bf16.mxu0 0
      %596 = vmatpush1.bf16.msra.mxu0 0
      %597 = vmatprep.subr.bf16.mxu0 0
      %598 = vmatpush1.bf16.msra.mxu0 0
      %599 = vmatprep.subr.bf16.mxu0 0
      %600 = vmatpush1.bf16.msra.mxu0 0
      %601 = vmatprep.subr.bf16.mxu0 0
      %602 = vmatpush1.bf16.msra.mxu0 0
      %603 = vmatprep.mubr.bf16.mxu0 0
      %604 = vmatmul.mubr.bf16.gmra.mrb[0].mxu0 %v563
      %v605 = vpop.f32.mrb[0].mxu0
      %v606 = vadd.f32 0.0, %v605
      %v607 = vpop.f32.mrb[0].mxu0
      %v608 = vpop.f32.mrb[0].mxu0
      %v609 = vadd.f32 0.0, %v608
      %v610 = vpop.f32.mrb[0].mxu0
      %611 = vmatprep.mubr.bf16.mxu0 0
      %612 = vmatmul.mubr.bf16.gmra.mrb[0].mxu0 %v566
      %v613 = vpop.f32.mrb[0].mxu0
      %v614 = vadd.f32 0.0, %v613
      %v615 = vpop.f32.mrb[0].mxu0
      %v616 = vpop.f32.mrb[0].mxu0
      %v617 = vpop.f32.mrb[0].mxu0
      %618 = vdwg.mxu0
      %v619 = vadd.f32 %v555, %v606
      %v620 = vadd.f32 %v556, %v609
      %v621 = vadd.f32 %v557, %v614
      %v622 = vpack.c.bf16 %v281, %v280
      %v623 = vpack.c.bf16 %v282, %v282
      %s624 = scalar_lea.vmem %s1, 20
      %v625 = vld [vmem:[%s624] sm:$0xf]
      %v627 = vsel %vm291, %v622, 0
      %v630 = vsel %vm291, %v623, 0
      %v633 = vsel %vm298, %v625, 0
      %635 = vmatprep.subr.bf16.mxu0 0
      %636 = vmatpush1.bf16.msra.mxu0 %v633
      %637 = vmatprep.subr.bf16.mxu0 0
      %638 = vmatpush1.bf16.msra.mxu0 0
      %639 = vmatprep.subr.bf16.mxu0 0
      %640 = vmatpush1.bf16.msra.mxu0 0
      %641 = vmatprep.subr.bf16.mxu0 0
      %642 = vmatpush1.bf16.msra.mxu0 0
      %643 = vmatprep.subr.bf16.mxu0 0
      %644 = vmatpush1.bf16.msra.mxu0 0
      %645 = vmatprep.subr.bf16.mxu0 0
      %646 = vmatpush1.bf16.msra.mxu0 0
      %647 = vmatprep.subr.bf16.mxu0 0
      %648 = vmatpush1.bf16.msra.mxu0 0
      %649 = vmatprep.subr.bf16.mxu0 0
      %650 = vmatpush1.bf16.msra.mxu0 0
      %651 = vmatprep.subr.bf16.mxu0 0
      %652 = vmatpush1.bf16.msra.mxu0 0
      %653 = vmatprep.subr.bf16.mxu0 0
      %654 = vmatpush1.bf16.msra.mxu0 0
      %655 = vmatprep.subr.bf16.mxu0 0
      %656 = vmatpush1.bf16.msra.mxu0 0
      %657 = vmatprep.subr.bf16.mxu0 0
      %658 = vmatpush1.bf16.msra.mxu0 0
      %659 = vmatprep.subr.bf16.mxu0 0
      %660 = vmatpush1.bf16.msra.mxu0 0
      %661 = vmatprep.subr.bf16.mxu0 0
      %662 = vmatpush1.bf16.msra.mxu0 0
      %663 = vmatprep.subr.bf16.mxu0 0
      %664 = vmatpush1.bf16.msra.mxu0 0
      %665 = vmatprep.subr.bf16.mxu0 0
      %666 = vmatpush1.bf16.msra.mxu0 0
      %667 = vmatprep.mubr.bf16.mxu0 0
      %668 = vmatmul.mubr.bf16.gmra.mrb[0].mxu0 %v627
      %v669 = vpop.f32.mrb[0].mxu0
      %v670 = vadd.f32 0.0, %v669
      %v671 = vpop.f32.mrb[0].mxu0
      %v672 = vpop.f32.mrb[0].mxu0
      %v673 = vadd.f32 0.0, %v672
      %v674 = vpop.f32.mrb[0].mxu0
      %675 = vmatprep.mubr.bf16.mxu0 0
      %676 = vmatmul.mubr.bf16.gmra.mrb[0].mxu0 %v630
      %v677 = vpop.f32.mrb[0].mxu0
      %v678 = vadd.f32 0.0, %v677
      %v679 = vpop.f32.mrb[0].mxu0
      %v680 = vpop.f32.mrb[0].mxu0
      %v681 = vpop.f32.mrb[0].mxu0
      %682 = vdwg.mxu0
      %v683 = vadd.f32 %v619, %v670
      %v684 = vadd.f32 %v620, %v673
      %v685 = vadd.f32 %v621, %v678
      %s686 = scalar_lea.vmem %s1, 24
      %v687 = vld [vmem:[%s686] sm:$0xf]
      %v688 = vshrl.u32 %v558, 16
      %v690 = vshll.u32 %v558, 16
      %v692 = vrot.slane %v690, 1
      %v693 = vor.u32 %v688, %v692
      %v694 = vshll.u32 %v559, 16
      %v696 = vrot.slane %v694, 1
      %v697 = vsel %vm409, %v693, %v696
      %v698 = vshrl.u32 %v559, 16
      %v700 = vor.u32 %v698, %v696
      %v702 = vsel %vm291, %v697, 0
      %v705 = vsel %vm291, %v700, 0
      %v708 = vsel %vm298, %v687, 0
      %710 = vmatprep.subr.bf16.mxu0 0
      %711 = vmatpush1.bf16.msra.mxu0 %v708
      %712 = vmatprep.subr.bf16.mxu0 0
      %713 = vmatpush1.bf16.msra.mxu0 0
      %714 = vmatprep.subr.bf16.mxu0 0
      %715 = vmatpush1.bf16.msra.mxu0 0
      %716 = vmatprep.subr.bf16.mxu0 0
      %717 = vmatpush1.bf16.msra.mxu0 0
      %718 = vmatprep.subr.bf16.mxu0 0
      %719 = vmatpush1.bf16.msra.mxu0 0
      %720 = vmatprep.subr.bf16.mxu0 0
      %721 = vmatpush1.bf16.msra.mxu0 0
      %722 = vmatprep.subr.bf16.mxu0 0
      %723 = vmatpush1.bf16.msra.mxu0 0
      %724 = vmatprep.subr.bf16.mxu0 0
      %725 = vmatpush1.bf16.msra.mxu0 0
      %726 = vmatprep.subr.bf16.mxu0 0
      %727 = vmatpush1.bf16.msra.mxu0 0
      %728 = vmatprep.subr.bf16.mxu0 0
      %729 = vmatpush1.bf16.msra.mxu0 0
      %730 = vmatprep.subr.bf16.mxu0 0
      %731 = vmatpush1.bf16.msra.mxu0 0
      %732 = vmatprep.subr.bf16.mxu0 0
      %733 = vmatpush1.bf16.msra.mxu0 0
      %734 = vmatprep.subr.bf16.mxu0 0
      %735 = vmatpush1.bf16.msra.mxu0 0
      %736 = vmatprep.subr.bf16.mxu0 0
      %737 = vmatpush1.bf16.msra.mxu0 0
      %738 = vmatprep.subr.bf16.mxu0 0
      %739 = vmatpush1.bf16.msra.mxu0 0
      %740 = vmatprep.subr.bf16.mxu0 0
      %741 = vmatpush1.bf16.msra.mxu0 0
      %742 = vmatprep.mubr.bf16.mxu0 0
      %743 = vmatmul.mubr.bf16.gmra.mrb[0].mxu0 %v702
      %v744 = vpop.f32.mrb[0].mxu0
      %v745 = vadd.f32 0.0, %v744
      %v746 = vpop.f32.mrb[0].mxu0
      %v747 = vpop.f32.mrb[0].mxu0
      %v748 = vadd.f32 0.0, %v747
      %v749 = vpop.f32.mrb[0].mxu0
      %750 = vmatprep.mubr.bf16.mxu0 0
      %751 = vmatmul.mubr.bf16.gmra.mrb[0].mxu0 %v705
      %v752 = vpop.f32.mrb[0].mxu0
      %v753 = vadd.f32 0.0, %v752
      %v754 = vpop.f32.mrb[0].mxu0
      %v755 = vpop.f32.mrb[0].mxu0
      %v756 = vpop.f32.mrb[0].mxu0
      %757 = vdwg.mxu0
      %v758 = vadd.f32 %v683, %v745
      %v759 = vadd.f32 %v684, %v748
      %v760 = vadd.f32 %v685, %v753
      %s761 = scalar_lea.vmem %s1, 28
      %v762 = vld [vmem:[%s761] sm:$0xf]
      %v763 = vshrl.u32 %v622, 16
      %v765 = vshll.u32 %v622, 16
      %v767 = vrot.slane %v765, 1
      %v768 = vor.u32 %v763, %v767
      %v769 = vshll.u32 %v623, 16
      %v771 = vrot.slane %v769, 1
      %v772 = vsel %vm409, %v768, %v771
      %v773 = vshrl.u32 %v623, 16
      %v775 = vor.u32 %v773, %v771
      %v777 = vsel %vm291, %v772, 0
      %v780 = vsel %vm291, %v775, 0
      %v783 = vsel %vm298, %v762, 0
      %785 = vmatprep.subr.bf16.mxu0 0
      %786 = vmatpush1.bf16.msra.mxu0 %v783
      %787 = vmatprep.subr.bf16.mxu0 0
      %788 = vmatpush1.bf16.msra.mxu0 0
      %789 = vmatprep.subr.bf16.mxu0 0
      %790 = vmatpush1.bf16.msra.mxu0 0
      %791 = vmatprep.subr.bf16.mxu0 0
      %792 = vmatpush1.bf16.msra.mxu0 0
      %793 = vmatprep.subr.bf16.mxu0 0
      %794 = vmatpush1.bf16.msra.mxu0 0
      %795 = vmatprep.subr.bf16.mxu0 0
      %796 = vmatpush1.bf16.msra.mxu0 0
      %797 = vmatprep.subr.bf16.mxu0 0
      %798 = vmatpush1.bf16.msra.mxu0 0
      %799 = vmatprep.subr.bf16.mxu0 0
      %800 = vmatpush1.bf16.msra.mxu0 0
      %801 = vmatprep.subr.bf16.mxu0 0
      %802 = vmatpush1.bf16.msra.mxu0 0
      %803 = vmatprep.subr.bf16.mxu0 0
      %804 = vmatpush1.bf16.msra.mxu0 0
      %805 = vmatprep.subr.bf16.mxu0 0
      %806 = vmatpush1.bf16.msra.mxu0 0
      %807 = vmatprep.subr.bf16.mxu0 0
      %808 = vmatpush1.bf16.msra.mxu0 0
      %809 = vmatprep.subr.bf16.mxu0 0
      %810 = vmatpush1.bf16.msra.mxu0 0
      %811 = vmatprep.subr.bf16.mxu0 0
      %812 = vmatpush1.bf16.msra.mxu0 0
      %813 = vmatprep.subr.bf16.mxu0 0
      %814 = vmatpush1.bf16.msra.mxu0 0
      %815 = vmatprep.subr.bf16.mxu0 0
      %816 = vmatpush1.bf16.msra.mxu0 0
      %817 = vmatprep.mubr.bf16.mxu0 0
      %818 = vmatmul.mubr.bf16.gmra.mrb[0].mxu0 %v777
      %v819 = vpop.f32.mrb[0].mxu0
      %v820 = vadd.f32 0.0, %v819
      %v821 = vpop.f32.mrb[0].mxu0
      %v822 = vpop.f32.mrb[0].mxu0
      %v823 = vadd.f32 0.0, %v822
      %v824 = vpop.f32.mrb[0].mxu0
      %825 = vmatprep.mubr.bf16.mxu0 0
      %826 = vmatmul.mubr.bf16.gmra.mrb[0].mxu0 %v780
      %v827 = vpop.f32.mrb[0].mxu0
      %v828 = vadd.f32 0.0, %v827
      %v829 = vpop.f32.mrb[0].mxu0
      %v830 = vpop.f32.mrb[0].mxu0
      %v831 = vpop.f32.mrb[0].mxu0
      %832 = vdwg.mxu0
      %v833 = vadd.f32 %v758, %v820
      %v834 = vadd.f32 %v759, %v823
      %v835 = vadd.f32 %v760, %v828
      %v836 = vpack.c.bf16 %v271, %v270
      %s837 = scalar_lea.vmem %s1, 32
      %v838 = vld [vmem:[%s837] sm:$0xf]
      %vm839 = vsmask.f32 5376
      %v840 = vrot.slane %v410, 2
      %v841 = vrot.slane %v412, 3
      %v842 = vor.u32 %v840, %v841
      %v844 = vshrl.u32 %v836, 16
      %v846 = vrot.slane %v844, 2
      %v847 = vshll.u32 %v836, 16
      %v849 = vrot.slane %v847, 3
      %v850 = vor.u32 %v846, %v849
      %v851 = vsel %vm839, %v842, %v850
      %v853 = vsel %vm291, %v851, 0
      %v856 = vsel %vm291, %v850, 0
      %v859 = vsel %vm298, %v838, 0
      %861 = vmatprep.subr.bf16.mxu0 0
      %862 = vmatpush1.bf16.msra.mxu0 %v859
      %863 = vmatprep.subr.bf16.mxu0 0
      %864 = vmatpush1.bf16.msra.mxu0 0
      %865 = vmatprep.subr.bf16.mxu0 0
      %866 = vmatpush1.bf16.msra.mxu0 0
      %867 = vmatprep.subr.bf16.mxu0 0
      %868 = vmatpush1.bf16.msra.mxu0 0
      %869 = vmatprep.subr.bf16.mxu0 0
      %870 = vmatpush1.bf16.msra.mxu0 0
      %871 = vmatprep.subr.bf16.mxu0 0
      %872 = vmatpush1.bf16.msra.mxu0 0
      %873 = vmatprep.subr.bf16.mxu0 0
      %874 = vmatpush1.bf16.msra.mxu0 0
      %875 = vmatprep.subr.bf16.mxu0 0
      %876 = vmatpush1.bf16.msra.mxu0 0
      %877 = vmatprep.subr.bf16.mxu0 0
      %878 = vmatpush1.bf16.msra.mxu0 0
      %879 = vmatprep.subr.bf16.mxu0 0
      %880 = vmatpush1.bf16.msra.mxu0 0
      %881 = vmatprep.subr.bf16.mxu0 0
      %882 = vmatpush1.bf16.msra.mxu0 0
      %883 = vmatprep.subr.bf16.mxu0 0
      %884 = vmatpush1.bf16.msra.mxu0 0
      %885 = vmatprep.subr.bf16.mxu0 0
      %886 = vmatpush1.bf16.msra.mxu0 0
      %887 = vmatprep.subr.bf16.mxu0 0
      %888 = vmatpush1.bf16.msra.mxu0 0
      %889 = vmatprep.subr.bf16.mxu0 0
      %890 = vmatpush1.bf16.msra.mxu0 0
      %891 = vmatprep.subr.bf16.mxu0 0
      %892 = vmatpush1.bf16.msra.mxu0 0
      %893 = vmatprep.mubr.bf16.mxu0 0
      %894 = vmatmul.mubr.bf16.gmra.mrb[0].mxu0 %v853
      %v895 = vpop.f32.mrb[0].mxu0
      %v896 = vadd.f32 0.0, %v895
      %v897 = vpop.f32.mrb[0].mxu0
      %v898 = vpop.f32.mrb[0].mxu0
      %v899 = vadd.f32 0.0, %v898
      %v900 = vpop.f32.mrb[0].mxu0
      %901 = vmatprep.mubr.bf16.mxu0 0
      %902 = vmatmul.mubr.bf16.gmra.mrb[0].mxu0 %v856
      %v903 = vpop.f32.mrb[0].mxu0
      %v904 = vadd.f32 0.0, %v903
      %v905 = vpop.f32.mrb[0].mxu0
      %v906 = vpop.f32.mrb[0].mxu0
      %v907 = vpop.f32.mrb[0].mxu0
      %908 = vdwg.mxu0
      %v909 = vadd.f32 %v833, %v896
      %v910 = vadd.f32 %v834, %v899
      %v911 = vadd.f32 %v835, %v904
      %v912 = vpack.c.bf16 %v275, %v274
      %s913 = scalar_lea.vmem %s1, 36
      %v914 = vld [vmem:[%s913] sm:$0xf]
      %v915 = vrot.slane %v485, 2
      %v916 = vrot.slane %v487, 3
      %v917 = vor.u32 %v915, %v916
      %v919 = vshrl.u32 %v912, 16
      %v921 = vrot.slane %v919, 2
      %v922 = vshll.u32 %v912, 16
      %v924 = vrot.slane %v922, 3
      %v925 = vor.u32 %v921, %v924
      %v926 = vsel %vm839, %v917, %v925
      %v928 = vsel %vm291, %v926, 0
      %v931 = vsel %vm291, %v925, 0
      %v934 = vsel %vm298, %v914, 0
      %936 = vmatprep.subr.bf16.mxu0 0
      %937 = vmatpush1.bf16.msra.mxu0 %v934
      %938 = vmatprep.subr.bf16.mxu0 0
      %939 = vmatpush1.bf16.msra.mxu0 0
      %940 = vmatprep.subr.bf16.mxu0 0
      %941 = vmatpush1.bf16.msra.mxu0 0
      %942 = vmatprep.subr.bf16.mxu0 0
      %943 = vmatpush1.bf16.msra.mxu0 0
      %944 = vmatprep.subr.bf16.mxu0 0
      %945 = vmatpush1.bf16.msra.mxu0 0
      %946 = vmatprep.subr.bf16.mxu0 0
      %947 = vmatpush1.bf16.msra.mxu0 0
      %948 = vmatprep.subr.bf16.mxu0 0
      %949 = vmatpush1.bf16.msra.mxu0 0
      %950 = vmatprep.subr.bf16.mxu0 0
      %951 = vmatpush1.bf16.msra.mxu0 0
      %952 = vmatprep.subr.bf16.mxu0 0
      %953 = vmatpush1.bf16.msra.mxu0 0
      %954 = vmatprep.subr.bf16.mxu0 0
      %955 = vmatpush1.bf16.msra.mxu0 0
      %956 = vmatprep.subr.bf16.mxu0 0
      %957 = vmatpush1.bf16.msra.mxu0 0
      %958 = vmatprep.subr.bf16.mxu0 0
      %959 = vmatpush1.bf16.msra.mxu0 0
      %960 = vmatprep.subr.bf16.mxu0 0
      %961 = vmatpush1.bf16.msra.mxu0 0
      %962 = vmatprep.subr.bf16.mxu0 0
      %963 = vmatpush1.bf16.msra.mxu0 0
      %964 = vmatprep.subr.bf16.mxu0 0
      %965 = vmatpush1.bf16.msra.mxu0 0
      %966 = vmatprep.subr.bf16.mxu0 0
      %967 = vmatpush1.bf16.msra.mxu0 0
      %968 = vmatprep.mubr.bf16.mxu0 0
      %969 = vmatmul.mubr.bf16.gmra.mrb[0].mxu0 %v928
      %v970 = vpop.f32.mrb[0].mxu0
      %v971 = vadd.f32 0.0, %v970
      %v972 = vpop.f32.mrb[0].mxu0
      %v973 = vpop.f32.mrb[0].mxu0
      %v974 = vadd.f32 0.0, %v973
      %v975 = vpop.f32.mrb[0].mxu0
      %976 = vmatprep.mubr.bf16.mxu0 0
      %977 = vmatmul.mubr.bf16.gmra.mrb[0].mxu0 %v931
      %v978 = vpop.f32.mrb[0].mxu0
      %v979 = vadd.f32 0.0, %v978
      %v980 = vpop.f32.mrb[0].mxu0
      %v981 = vpop.f32.mrb[0].mxu0
      %v982 = vpop.f32.mrb[0].mxu0
      %983 = vdwg.mxu0
      %v984 = vadd.f32 %v909, %v971
      %v985 = vadd.f32 %v910, %v974
      %v986 = vadd.f32 %v911, %v979
      %s987 = scalar_lea.vmem %s1, 40
      %v988 = vld [vmem:[%s987] sm:$0xf]
      %vm991 = vcmask 1044480
      %v992 = vrot.slane %v284, 3
      %v993 = vrot.slane %v836, 3
      %v994 = vsel %vm991, %v992, %v993
      %v996 = vsel %vm291, %v994, 0
      %v999 = vsel %vm291, %v993, 0
      %v1002 = vsel %vm298, %v988, 0
      %1004 = vmatprep.subr.bf16.mxu0 0
      %1005 = vmatpush1.bf16.msra.mxu0 %v1002
      %1006 = vmatprep.subr.bf16.mxu0 0
      %1007 = vmatpush1.bf16.msra.mxu0 0
      %1008 = vmatprep.subr.bf16.mxu0 0
      %1009 = vmatpush1.bf16.msra.mxu0 0
      %1010 = vmatprep.subr.bf16.mxu0 0
      %1011 = vmatpush1.bf16.msra.mxu0 0
      %1012 = vmatprep.subr.bf16.mxu0 0
      %1013 = vmatpush1.bf16.msra.mxu0 0
      %1014 = vmatprep.subr.bf16.mxu0 0
      %1015 = vmatpush1.bf16.msra.mxu0 0
      %1016 = vmatprep.subr.bf16.mxu0 0
      %1017 = vmatpush1.bf16.msra.mxu0 0
      %1018 = vmatprep.subr.bf16.mxu0 0
      %1019 = vmatpush1.bf16.msra.mxu0 0
      %1020 = vmatprep.subr.bf16.mxu0 0
      %1021 = vmatpush1.bf16.msra.mxu0 0
      %1022 = vmatprep.subr.bf16.mxu0 0
      %1023 = vmatpush1.bf16.msra.mxu0 0
      %1024 = vmatprep.subr.bf16.mxu0 0
      %1025 = vmatpush1.bf16.msra.mxu0 0
      %1026 = vmatprep.subr.bf16.mxu0 0
      %1027 = vmatpush1.bf16.msra.mxu0 0
      %1028 = vmatprep.subr.bf16.mxu0 0
      %1029 = vmatpush1.bf16.msra.mxu0 0
      %1030 = vmatprep.subr.bf16.mxu0 0
      %1031 = vmatpush1.bf16.msra.mxu0 0
      %1032 = vmatprep.subr.bf16.mxu0 0
      %1033 = vmatpush1.bf16.msra.mxu0 0
      %1034 = vmatprep.subr.bf16.mxu0 0
      %1035 = vmatpush1.bf16.msra.mxu0 0
      %1036 = vmatprep.mubr.bf16.mxu0 0
      %1037 = vmatmul.mubr.bf16.gmra.mrb[0].mxu0 %v996
      %v1038 = vpop.f32.mrb[0].mxu0
      %v1039 = vadd.f32 0.0, %v1038
      %v1040 = vpop.f32.mrb[0].mxu0
      %v1041 = vpop.f32.mrb[0].mxu0
      %v1042 = vadd.f32 0.0, %v1041
      %v1043 = vpop.f32.mrb[0].mxu0
      %1044 = vmatprep.mubr.bf16.mxu0 0
      %1045 = vmatmul.mubr.bf16.gmra.mrb[0].mxu0 %v999
      %v1046 = vpop.f32.mrb[0].mxu0
      %v1047 = vadd.f32 0.0, %v1046
      %v1048 = vpop.f32.mrb[0].mxu0
      %v1049 = vpop.f32.mrb[0].mxu0
      %v1050 = vpop.f32.mrb[0].mxu0
      %1051 = vdwg.mxu0
      %v1052 = vadd.f32 %v984, %v1039
      %v1053 = vadd.f32 %v985, %v1042
      %v1054 = vadd.f32 %v986, %v1047
      %s1055 = scalar_lea.vmem %s1, 44
      %v1056 = vld [vmem:[%s1055] sm:$0xf]
      %v1059 = vrot.slane %v287, 3
      %v1060 = vrot.slane %v912, 3
      %v1061 = vsel %vm991, %v1059, %v1060
      %v1063 = vsel %vm291, %v1061, 0
      %v1066 = vsel %vm291, %v1060, 0
      %v1069 = vsel %vm298, %v1056, 0
      %1071 = vmatprep.subr.bf16.mxu0 0
      %1072 = vmatpush1.bf16.msra.mxu0 %v1069
      %1073 = vmatprep.subr.bf16.mxu0 0
      %1074 = vmatpush1.bf16.msra.mxu0 0
      %1075 = vmatprep.subr.bf16.mxu0 0
      %1076 = vmatpush1.bf16.msra.mxu0 0
      %1077 = vmatprep.subr.bf16.mxu0 0
      %1078 = vmatpush1.bf16.msra.mxu0 0
      %1079 = vmatprep.subr.bf16.mxu0 0
      %1080 = vmatpush1.bf16.msra.mxu0 0
      %1081 = vmatprep.subr.bf16.mxu0 0
      %1082 = vmatpush1.bf16.msra.mxu0 0
      %1083 = vmatprep.subr.bf16.mxu0 0
      %1084 = vmatpush1.bf16.msra.mxu0 0
      %1085 = vmatprep.subr.bf16.mxu0 0
      %1086 = vmatpush1.bf16.msra.mxu0 0
      %1087 = vmatprep.subr.bf16.mxu0 0
      %1088 = vmatpush1.bf16.msra.mxu0 0
      %1089 = vmatprep.subr.bf16.mxu0 0
      %1090 = vmatpush1.bf16.msra.mxu0 0
      %1091 = vmatprep.subr.bf16.mxu0 0
      %1092 = vmatpush1.bf16.msra.mxu0 0
      %1093 = vmatprep.subr.bf16.mxu0 0
      %1094 = vmatpush1.bf16.msra.mxu0 0
      %1095 = vmatprep.subr.bf16.mxu0 0
      %1096 = vmatpush1.bf16.msra.mxu0 0
      %1097 = vmatprep.subr.bf16.mxu0 0
      %1098 = vmatpush1.bf16.msra.mxu0 0
      %1099 = vmatprep.subr.bf16.mxu0 0
      %1100 = vmatpush1.bf16.msra.mxu0 0
      %1101 = vmatprep.subr.bf16.mxu0 0
      %1102 = vmatpush1.bf16.msra.mxu0 0
      %1103 = vmatprep.mubr.bf16.mxu0 0
      %1104 = vmatmul.mubr.bf16.gmra.mrb[0].mxu0 %v1063
      %v1105 = vpop.f32.mrb[0].mxu0
      %v1106 = vadd.f32 0.0, %v1105
      %v1107 = vpop.f32.mrb[0].mxu0
      %v1108 = vpop.f32.mrb[0].mxu0
      %v1109 = vadd.f32 0.0, %v1108
      %v1110 = vpop.f32.mrb[0].mxu0
      %1111 = vmatprep.mubr.bf16.mxu0 0
      %1112 = vmatmul.mubr.bf16.gmra.mrb[0].mxu0 %v1066
      %v1113 = vpop.f32.mrb[0].mxu0
      %v1114 = vadd.f32 0.0, %v1113
      %v1115 = vpop.f32.mrb[0].mxu0
      %v1116 = vpop.f32.mrb[0].mxu0
      %v1117 = vpop.f32.mrb[0].mxu0
      %1118 = vdwg.mxu0
      %v1119 = vadd.f32 %v1052, %v1106
      %v1120 = vadd.f32 %v1053, %v1109
      %v1121 = vadd.f32 %v1054, %v1114
      %v1122 = vpack.c.bf16 %v279, %v278
      %s1123 = scalar_lea.vmem %s1, 48
      %v1124 = vld [vmem:[%s1123] sm:$0xf]
      %v1125 = vrot.slane %v688, 2
      %v1126 = vrot.slane %v690, 3
      %v1127 = vor.u32 %v1125, %v1126
      %v1129 = vshrl.u32 %v1122, 16
      %v1131 = vrot.slane %v1129, 2
      %v1132 = vshll.u32 %v1122, 16
      %v1134 = vrot.slane %v1132, 3
      %v1135 = vor.u32 %v1131, %v1134
      %v1136 = vsel %vm839, %v1127, %v1135
      %v1138 = vsel %vm291, %v1136, 0
      %v1141 = vsel %vm291, %v1135, 0
      %v1144 = vsel %vm298, %v1124, 0
      %1146 = vmatprep.subr.bf16.mxu0 0
      %1147 = vmatpush1.bf16.msra.mxu0 %v1144
      %1148 = vmatprep.subr.bf16.mxu0 0
      %1149 = vmatpush1.bf16.msra.mxu0 0
      %1150 = vmatprep.subr.bf16.mxu0 0
      %1151 = vmatpush1.bf16.msra.mxu0 0
      %1152 = vmatprep.subr.bf16.mxu0 0
      %1153 = vmatpush1.bf16.msra.mxu0 0
      %1154 = vmatprep.subr.bf16.mxu0 0
      %1155 = vmatpush1.bf16.msra.mxu0 0
      %1156 = vmatprep.subr.bf16.mxu0 0
      %1157 = vmatpush1.bf16.msra.mxu0 0
      %1158 = vmatprep.subr.bf16.mxu0 0
      %1159 = vmatpush1.bf16.msra.mxu0 0
      %1160 = vmatprep.subr.bf16.mxu0 0
      %1161 = vmatpush1.bf16.msra.mxu0 0
      %1162 = vmatprep.subr.bf16.mxu0 0
      %1163 = vmatpush1.bf16.msra.mxu0 0
      %1164 = vmatprep.subr.bf16.mxu0 0
      %1165 = vmatpush1.bf16.msra.mxu0 0
      %1166 = vmatprep.subr.bf16.mxu0 0
      %1167 = vmatpush1.bf16.msra.mxu0 0
      %1168 = vmatprep.subr.bf16.mxu0 0
      %1169 = vmatpush1.bf16.msra.mxu0 0
      %1170 = vmatprep.subr.bf16.mxu0 0
      %1171 = vmatpush1.bf16.msra.mxu0 0
      %1172 = vmatprep.subr.bf16.mxu0 0
      %1173 = vmatpush1.bf16.msra.mxu0 0
      %1174 = vmatprep.subr.bf16.mxu0 0
      %1175 = vmatpush1.bf16.msra.mxu0 0
      %1176 = vmatprep.subr.bf16.mxu0 0
      %1177 = vmatpush1.bf16.msra.mxu0 0
      %1178 = vmatprep.mubr.bf16.mxu0 0
      %1179 = vmatmul.mubr.bf16.gmra.mrb[0].mxu0 %v1138
      %v1180 = vpop.f32.mrb[0].mxu0
      %v1181 = vadd.f32 0.0, %v1180
      %v1182 = vpop.f32.mrb[0].mxu0
      %v1183 = vpop.f32.mrb[0].mxu0
      %v1184 = vadd.f32 0.0, %v1183
      %v1185 = vpop.f32.mrb[0].mxu0
      %1186 = vmatprep.mubr.bf16.mxu0 0
      %1187 = vmatmul.mubr.bf16.gmra.mrb[0].mxu0 %v1141
      %v1188 = vpop.f32.mrb[0].mxu0
      %v1189 = vadd.f32 0.0, %v1188
      %v1190 = vpop.f32.mrb[0].mxu0
      %v1191 = vpop.f32.mrb[0].mxu0
      %v1192 = vpop.f32.mrb[0].mxu0
      %1193 = vdwg.mxu0
      %v1194 = vadd.f32 %v1119, %v1181
      %v1195 = vadd.f32 %v1120, %v1184
      %v1196 = vadd.f32 %v1121, %v1189
      %v1197 = vpack.c.bf16 %v283, %v282
      %s1198 = scalar_lea.vmem %s1, 52
      %v1199 = vld [vmem:[%s1198] sm:$0xf]
      %v1200 = vrot.slane %v763, 2
      %v1201 = vrot.slane %v765, 3
      %v1202 = vor.u32 %v1200, %v1201
      %v1204 = vshrl.u32 %v1197, 16
      %v1206 = vrot.slane %v1204, 2
      %v1207 = vshll.u32 %v1197, 16
      %v1209 = vrot.slane %v1207, 3
      %v1210 = vor.u32 %v1206, %v1209
      %v1211 = vsel %vm839, %v1202, %v1210
      %v1213 = vsel %vm291, %v1211, 0
      %v1216 = vsel %vm291, %v1210, 0
      %v1219 = vsel %vm298, %v1199, 0
      %1221 = vmatprep.subr.bf16.mxu0 0
      %1222 = vmatpush1.bf16.msra.mxu0 %v1219
      %1223 = vmatprep.subr.bf16.mxu0 0
      %1224 = vmatpush1.bf16.msra.mxu0 0
      %1225 = vmatprep.subr.bf16.mxu0 0
      %1226 = vmatpush1.bf16.msra.mxu0 0
      %1227 = vmatprep.subr.bf16.mxu0 0
      %1228 = vmatpush1.bf16.msra.mxu0 0
      %1229 = vmatprep.subr.bf16.mxu0 0
      %1230 = vmatpush1.bf16.msra.mxu0 0
      %1231 = vmatprep.subr.bf16.mxu0 0
      %1232 = vmatpush1.bf16.msra.mxu0 0
      %1233 = vmatprep.subr.bf16.mxu0 0
      %1234 = vmatpush1.bf16.msra.mxu0 0
      %1235 = vmatprep.subr.bf16.mxu0 0
      %1236 = vmatpush1.bf16.msra.mxu0 0
      %1237 = vmatprep.subr.bf16.mxu0 0
      %1238 = vmatpush1.bf16.msra.mxu0 0
      %1239 = vmatprep.subr.bf16.mxu0 0
      %1240 = vmatpush1.bf16.msra.mxu0 0
      %1241 = vmatprep.subr.bf16.mxu0 0
      %1242 = vmatpush1.bf16.msra.mxu0 0
      %1243 = vmatprep.subr.bf16.mxu0 0
      %1244 = vmatpush1.bf16.msra.mxu0 0
      %1245 = vmatprep.subr.bf16.mxu0 0
      %1246 = vmatpush1.bf16.msra.mxu0 0
      %1247 = vmatprep.subr.bf16.mxu0 0
      %1248 = vmatpush1.bf16.msra.mxu0 0
      %1249 = vmatprep.subr.bf16.mxu0 0
      %1250 = vmatpush1.bf16.msra.mxu0 0
      %1251 = vmatprep.subr.bf16.mxu0 0
      %1252 = vmatpush1.bf16.msra.mxu0 0
      %1253 = vmatprep.mubr.bf16.mxu0 0
      %1254 = vmatmul.mubr.bf16.gmra.mrb[0].mxu0 %v1213
      %v1255 = vpop.f32.mrb[0].mxu0
      %v1256 = vadd.f32 0.0, %v1255
      %v1257 = vpop.f32.mrb[0].mxu0
      %v1258 = vpop.f32.mrb[0].mxu0
      %v1259 = vadd.f32 0.0, %v1258
      %v1260 = vpop.f32.mrb[0].mxu0
      %1261 = vmatprep.mubr.bf16.mxu0 0
      %1262 = vmatmul.mubr.bf16.gmra.mrb[0].mxu0 %v1216
      %v1263 = vpop.f32.mrb[0].mxu0
      %v1264 = vadd.f32 0.0, %v1263
      %v1265 = vpop.f32.mrb[0].mxu0
      %v1266 = vpop.f32.mrb[0].mxu0
      %v1267 = vpop.f32.mrb[0].mxu0
      %1268 = vdwg.mxu0
      %v1269 = vadd.f32 %v1194, %v1256
      %v1270 = vadd.f32 %v1195, %v1259
      %v1271 = vadd.f32 %v1196, %v1264
      %s1272 = scalar_lea.vmem %s1, 56
      %v1273 = vld [vmem:[%s1272] sm:$0xf]
      %v1276 = vrot.slane %v558, 3
      %v1277 = vrot.slane %v1122, 3
      %v1278 = vsel %vm991, %v1276, %v1277
      %v1280 = vsel %vm291, %v1278, 0
      %v1283 = vsel %vm291, %v1277, 0
      %v1286 = vsel %vm298, %v1273, 0
      %1288 = vmatprep.subr.bf16.mxu0 0
      %1289 = vmatpush1.bf16.msra.mxu0 %v1286
      %1290 = vmatprep.subr.bf16.mxu0 0
      %1291 = vmatpush1.bf16.msra.mxu0 0
      %1292 = vmatprep.subr.bf16.mxu0 0
      %1293 = vmatpush1.bf16.msra.mxu0 0
      %1294 = vmatprep.subr.bf16.mxu0 0
      %1295 = vmatpush1.bf16.msra.mxu0 0
      %1296 = vmatprep.subr.bf16.mxu0 0
      %1297 = vmatpush1.bf16.msra.mxu0 0
      %1298 = vmatprep.subr.bf16.mxu0 0
      %1299 = vmatpush1.bf16.msra.mxu0 0
      %1300 = vmatprep.subr.bf16.mxu0 0
      %1301 = vmatpush1.bf16.msra.mxu0 0
      %1302 = vmatprep.subr.bf16.mxu0 0
      %1303 = vmatpush1.bf16.msra.mxu0 0
      %1304 = vmatprep.subr.bf16.mxu0 0
      %1305 = vmatpush1.bf16.msra.mxu0 0
      %1306 = vmatprep.subr.bf16.mxu0 0
      %1307 = vmatpush1.bf16.msra.mxu0 0
      %1308 = vmatprep.subr.bf16.mxu0 0
      %1309 = vmatpush1.bf16.msra.mxu0 0
      %1310 = vmatprep.subr.bf16.mxu0 0
      %1311 = vmatpush1.bf16.msra.mxu0 0
      %1312 = vmatprep.subr.bf16.mxu0 0
      %1313 = vmatpush1.bf16.msra.mxu0 0
      %1314 = vmatprep.subr.bf16.mxu0 0
      %1315 = vmatpush1.bf16.msra.mxu0 0
      %1316 = vmatprep.subr.bf16.mxu0 0
      %1317 = vmatpush1.bf16.msra.mxu0 0
      %1318 = vmatprep.subr.bf16.mxu0 0
      %1319 = vmatpush1.bf16.msra.mxu0 0
      %1320 = vmatprep.mubr.bf16.mxu0 0
      %1321 = vmatmul.mubr.bf16.gmra.mrb[0].mxu0 %v1280
      %v1322 = vpop.f32.mrb[0].mxu0
      %v1323 = vadd.f32 0.0, %v1322
      %v1324 = vpop.f32.mrb[0].mxu0
      %v1325 = vpop.f32.mrb[0].mxu0
      %v1326 = vadd.f32 0.0, %v1325
      %v1327 = vpop.f32.mrb[0].mxu0
      %1328 = vmatprep.mubr.bf16.mxu0 0
      %1329 = vmatmul.mubr.bf16.gmra.mrb[0].mxu0 %v1283
      %v1330 = vpop.f32.mrb[0].mxu0
      %v1331 = vadd.f32 0.0, %v1330
      %v1332 = vpop.f32.mrb[0].mxu0
      %v1333 = vpop.f32.mrb[0].mxu0
      %v1334 = vpop.f32.mrb[0].mxu0
      %1335 = vdwg.mxu0
      %v1336 = vadd.f32 %v1269, %v1323
      %v1337 = vadd.f32 %v1270, %v1326
      %v1338 = vadd.f32 %v1271, %v1331
      %s1339 = scalar_lea.vmem %s1, 60
      %v1340 = vld [vmem:[%s1339] sm:$0xf]
      %v1343 = vrot.slane %v622, 3
      %v1344 = vrot.slane %v1197, 3
      %v1345 = vsel %vm991, %v1343, %v1344
      %v1347 = vsel %vm291, %v1345, 0
      %v1350 = vsel %vm291, %v1344, 0
      %v1353 = vsel %vm298, %v1340, 0
      %1355 = vmatprep.subr.bf16.mxu0 0
      %1356 = vmatpush1.bf16.msra.mxu0 %v1353
      %1357 = vmatprep.subr.bf16.mxu0 0
      %1358 = vmatpush1.bf16.msra.mxu0 0
      %1359 = vmatprep.subr.bf16.mxu0 0
      %1360 = vmatpush1.bf16.msra.mxu0 0
      %1361 = vmatprep.subr.bf16.mxu0 0
      %1362 = vmatpush1.bf16.msra.mxu0 0
      %1363 = vmatprep.subr.bf16.mxu0 0
      %1364 = vmatpush1.bf16.msra.mxu0 0
      %1365 = vmatprep.subr.bf16.mxu0 0
      %1366 = vmatpush1.bf16.msra.mxu0 0
      %1367 = vmatprep.subr.bf16.mxu0 0
      %1368 = vmatpush1.bf16.msra.mxu0 0
      %1369 = vmatprep.subr.bf16.mxu0 0
      %1370 = vmatpush1.bf16.msra.mxu0 0
      %1371 = vmatprep.subr.bf16.mxu0 0
      %1372 = vmatpush1.bf16.msra.mxu0 0
      %1373 = vmatprep.subr.bf16.mxu0 0
      %1374 = vmatpush1.bf16.msra.mxu0 0
      %1375 = vmatprep.subr.bf16.mxu0 0
      %1376 = vmatpush1.bf16.msra.mxu0 0
      %1377 = vmatprep.subr.bf16.mxu0 0
      %1378 = vmatpush1.bf16.msra.mxu0 0
      %1379 = vmatprep.subr.bf16.mxu0 0
      %1380 = vmatpush1.bf16.msra.mxu0 0
      %1381 = vmatprep.subr.bf16.mxu0 0
      %1382 = vmatpush1.bf16.msra.mxu0 0
      %1383 = vmatprep.subr.bf16.mxu0 0
      %1384 = vmatpush1.bf16.msra.mxu0 0
      %1385 = vmatprep.subr.bf16.mxu0 0
      %1386 = vmatpush1.bf16.msra.mxu0 0
      %1387 = vmatprep.mubr.bf16.mxu0 0
      %1388 = vmatmul.mubr.bf16.gmra.mrb[0].mxu0 %v1347
      %v1389 = vpop.f32.mrb[0].mxu0
      %v1390 = vadd.f32 0.0, %v1389
      %v1391 = vpop.f32.mrb[0].mxu0
      %v1392 = vpop.f32.mrb[0].mxu0
      %v1393 = vadd.f32 0.0, %v1392
      %v1394 = vpop.f32.mrb[0].mxu0
      %1395 = vmatprep.mubr.bf16.mxu0 0
      %1396 = vmatmul.mubr.bf16.gmra.mrb[0].mxu0 %v1350
      %v1397 = vpop.f32.mrb[0].mxu0
      %v1398 = vadd.f32 0.0, %v1397
      %v1399 = vpop.f32.mrb[0].mxu0
      %v1400 = vpop.f32.mrb[0].mxu0
      %v1401 = vpop.f32.mrb[0].mxu0
      %1402 = vdwg.mxu0
      %v1403 = vadd.f32 %v1336, %v1390
      %v1404 = vadd.f32 %v1337, %v1393
      %v1405 = vadd.f32 %v1338, %v1398
      // Predicated region
      $region45: #{encoder_forward.3} parent=39 // pred_check
        %p1406 = pneg %p243
      $region46: #{encoder_forward.3} parent=39 // pred_check_branch
        %1408 = sbr.rel (%p1406) target = $region48
      $region47: #{encoder_forward.3} parent=39 // pred_region
        %v1409 = vld [vmem:[%s4] sm:$0xff]
        %v1410 = vld [vmem:[%s4 + $0x8] sm:$0xff]
        %v1411 = vld [vmem:[%s4 + $0x10] sm:$0xf]
        %1413 = vset.pattern.permute.xlu0 0
        %1414 = vperm.xlu0 %1413, %v1409
        %v1415 = vpop.permute.xlu0 %1414
        %1418 = vset.pattern.permute.xlu0 0
        %1419 = vperm.xlu0 %1418, %v1410
        %v1420 = vpop.permute.xlu0 %1419
        %1423 = vset.pattern.permute.xlu0 0
        %1424 = vperm.xlu0 %1423, %v1411
        %v1425 = vpop.permute.xlu0 %1424
        %v1427 = vmul.f32 %v1403, %v1415
        %v1428 = vmul.f32 %v1404, %v1420
        %v1429 = vmul.f32 %v1405, %v1425
        %v1430 = vld [vmem:[#allocation2] sm:$0x1]
        %vm1431 = vcmask 130048
        %v1432 = vsel %vm1431, %v1427, 0.0
        %v1433 = vsel %vm1431, %v1428, 0.0
        %v1434 = vadd.f32 %v1432, %v1433
        %vm1435 = vcmask 125952
        %v1436 = vsel %vm1435, %v1429, 0.0
        %v1437 = vadd.f32 %v1434, %v1436
        %v1438 = vrot.slane %v1437, 4
        %v1439 = vadd.f32 %v1437, %v1438
        %v1440 = vrot.slane %v1439, 2
        %v1441 = vadd.f32 %v1439, %v1440
        %v1442 = vrot.slane %v1441, 1
        %v1443 = vadd.f32 %v1441, %v1442
        %v1444 = vadd.f32 %v1430, %v1443
        %vm1445 = vcmask 122880
        %1446 = vst.msk [vmem:[#allocation2] sm:$0x1] %vm1445, %v1444
        %v1447 = vld [vmem:[#allocation3] sm:$0x1]
        %v1448 = vmul.f32 %v1427, %v1427
        %v1449 = vmul.f32 %v1428, %v1428
        %v1450 = vmul.f32 %v1429, %v1429
        %v1451 = vsel %vm1431, %v1448, 0.0
        %v1452 = vsel %vm1431, %v1449, 0.0
        %v1453 = vadd.f32 %v1451, %v1452
        %v1454 = vsel %vm1435, %v1450, 0.0
        %v1455 = vadd.f32 %v1453, %v1454
        %v1456 = vrot.slane %v1455, 4
        %v1457 = vadd.f32 %v1455, %v1456
        %v1458 = vrot.slane %v1457, 2
        %v1459 = vadd.f32 %v1457, %v1458
        %v1460 = vrot.slane %v1459, 1
        %v1461 = vadd.f32 %v1459, %v1460
        %v1462 = vadd.f32 %v1447, %v1461
        %1463 = vst.msk [vmem:[#allocation3] sm:$0x1] %vm1445, %v1462
      $region48: #{encoder_forward.3} parent=39 // pred_fallthru
        _
      %p1464 = scmp.eq.s32.totalorder %s20, 1
      // Predicated region
      $region49: #{encoder_forward.3} parent=39 // pred_check
        %p1465 = pneg %p1464
      $region50: #{encoder_forward.3} parent=39 // pred_check_branch
        %1467 = sbr.rel (%p1465) target = $region52
      $region51: #{encoder_forward.3} parent=39 // pred_region
        %v1468 = vld [vmem:[#allocation2] sm:$0x1]
        %v1469 = vmul.f32 %v1468, 0.03125
        %v1470 = vld [vmem:[#allocation3] sm:$0x1]
        %v1471 = vmul.f32 %v1470, 0.03125
        %v1472 = vmul.f32 %v1469, %v1469
        %v1473 = vsub.f32 %v1471, %v1472
        %v1474 = vld [vmem:[%s2] sm:$0x1]
        %v1475 = vadd.f32 %v1473, 1e-05
        %v1476 = vrsqrt.pop %v1475
        %v1477 = vmul.f32 %v1474, %v1476
        %v1478 = vld [vmem:[%s3] sm:$0x1]
        %v1479 = vmul.f32 %v1469, %v1477
        %v1480 = vsub.f32 %v1478, %v1479
        %v1482 = vlaneseq
        %v1483 = vshrl.u32 %v1482, 7
        %v1484 = vsub.s32 0, %v1483
        %v1485 = vrot.slane %v1477, %v1484
        %v1487 = vmul.f32 %v1403, %v1485
        %v1488 = vmul.f32 %v1404, %v1485
        %v1489 = vmul.f32 %v1405, %v1485
        %v1491 = vlaneseq
        %v1492 = vshrl.u32 %v1491, 7
        %v1493 = vsub.s32 0, %v1492
        %v1494 = vrot.slane %v1480, %v1493
        %v1496 = vadd.f32 %v1487, %v1494
        %v1497 = vadd.f32 %v1488, %v1494
        %v1498 = vadd.f32 %v1489, %v1494
        %v1499 = vtanh.pop %v1496
        %v1500 = vtanh.pop %v1497
        %v1501 = vtanh.pop %v1498
        %vm1502 = vcmask 130048
        %1503 = vst.msk [vmem:[%s240] sm:$0xff] %vm1502, %v1499
        %1504 = vst.msk [vmem:[%s240 + $0x8] sm:$0xff] %vm1502, %v1500
        %vm1505 = vcmask 125952
        %1506 = vst.msk [vmem:[%s240 + $0x10] sm:$0xf] %vm1505, %v1501
      $region52: #{encoder_forward.3} parent=39 // pred_fallthru
        _
      %s1507 = smul.u32 %s20, %s21
      %p1508 = scmp.lt.s32.totalorder %s1507, 1
      %s1509 = scalar_select %p1508, %s1507, 1
      %s1510 = smul.addr %s1509, 3
      %s1511 = smul.addr %s1510, 8
      %s1512 = scalar_lea.vmem %s5, %s1511
      // Predicated region
      $region53: #{encoder_forward.3} parent=39 // pred_check
        %p1513 = pneg %p158
      $region54: #{encoder_forward.3} parent=39 // pred_check_branch
        %1515 = sbr.rel (%p1513) target = $region56
      $region55: #{encoder_forward.3} parent=39 // pred_region
        %s1516 = smul.u32 %s20, %s21
      $region56: #{encoder_forward.3} parent=39 // pred_fallthru
        _
    $region40: #{encoder_forward.3} parent=5 // pred_fallthru
      _
    %p1517 = scmp.le.s32.totalorder 2, %s11
    // Predicated region
    $region57: #{encoder_forward.3} parent=5 // pred_check
      %p1518 = pneg %p1517
    $region58: #{encoder_forward.3} parent=5 // pred_check_branch
      %1520 = sbr.rel (%p1518) target = $region60
    $region59: #{encoder_forward.3} parent=5 // pred_region
      %s1521 = ssub.s32 %s11, 2
      // Predicated region
      $region61: #{encoder_forward.3} parent=59 // pred_check
        %p1522 = pneg %p164
      $region62: #{encoder_forward.3} parent=59 // pred_check_branch
        %1524 = sbr.rel (%p1522) target = $region64
      $region63: #{encoder_forward.3} parent=59 // pred_region
        %s1525 = smul.u32 %s22, %s23
        %p1526 = scmp.lt.s32.totalorder %s1525, 1
        %s1527 = scalar_select %p1526, %s1525, 1
        %s1528 = smul.addr %s1527, 3
        %s1529 = smul.addr %s1528, 8
        %s1530 = scalar_lea.vmem %s5, %s1529
      $region64: #{encoder_forward.3} parent=59 // pred_fallthru
        _
    $region60: #{encoder_forward.3} parent=5 // pred_fallthru
      _
  $region6: #{encoder_forward.3} parent=0 // loop_footer
    %s15 = sadd.s32 1, %s11
  $region7: #{encoder_forward.3} parent=0 // loop_footer_branch
    %10 = sbr.rel target = $region3
  $region8: #{encoder_forward.3} parent=0 // loop_exit
    _

</llo_original>
